<compile_context>
chip_gen: v6e
topology: v6e:2x2x1
jax: 0.10.0
libtpu: 0.0.40
codegen_flags: <defaults>
</compile_context>

<pallas_src>
import jax
import jax.numpy as jnp
from jax.experimental import pallas as pl
from jax.experimental.pallas import tpu as pltpu

K = 7        # conv kernel size
C_HID = 64   # hidden channels
C_OUT = 3    # classes


def sleep_stage_kernel(x_ref, w1_ref, b1_ref, w2_ref, b2_ref, wf_ref, bf_ref, o_ref):
    # x_ref : (TB, L)   f32   one block of samples, time on the lane axis
    # w1_ref: (7, 64)   f32   conv1 weights [k, c_out]     b1_ref: (1, 64)
    # w2_ref: (448, 64) bf16  conv2 im2col weights [k*64 + c_in, c_out]
    # b2_ref: (1, 64)   f32
    # wf_ref: (64, 3)   f32   fc weights                   bf_ref: (1, 3)
    # o_ref : (TB, 3)   f32
    TB, L = x_ref.shape
    L1 = L - (K - 1)       # length after conv1 (VALID)
    L2 = L1 - (K - 1)      # length after conv2 (VALID)

    # One transpose so time lives on sublanes / batch on lanes inside the kernel.
    xt = x_ref[...].T                       # (L, TB)

    w1 = w1_ref[...]                        # (7, 64)
    b1 = b1_ref[...]                        # (1, 64)
    w2 = w2_ref[...]                        # (448, 64) bf16
    b2 = b2_ref[...]                        # (1, 64)

    gaps = []
    for b in range(TB):                     # static unroll over the block
        xc = xt[:, b:b + 1]                 # (L, 1)  time on sublanes

        # conv1 (in_channels = 1): h1[t, c] = sum_k x[t + k] * w1[k, c]
        acc1 = xc[0:L1, :] * w1[0:1, :]     # (L1,1)*(1,64) -> (L1,64)
        for k in range(1, K):
            acc1 = acc1 + xc[k:k + L1, :] * w1[k:k + 1, :]
        h1 = jnp.maximum(acc1 + b1, 0.0)    # (L1, 64) f32

        # conv2 as a single im2col matmul, contraction depth 7*64 = 448.
        H = jnp.concatenate([h1[k:k + L2, :] for k in range(K)], axis=-1)  # (L2, 448)
        h2 = jnp.dot(H.astype(jnp.bfloat16), w2,
                     preferred_element_type=jnp.float32)                   # (L2, 64)
        h2 = jnp.maximum(h2 + b2, 0.0)

        # AdaptiveAvgPool1d(1): global mean over time
        gaps.append(jnp.mean(h2, axis=0, keepdims=True))                   # (1, 64)

    gap = jnp.concatenate(gaps, axis=0)                                    # (TB, 64)

    # fc1 for the whole block, single (TB, 3) store.
    o_ref[...] = jnp.dot(gap, wf_ref[...],
                         preferred_element_type=jnp.float32) + bf_ref[...]


def sleep_stage_classifier(x_ncl, params, tb=8):
    """x_ncl: (B, 1, L) float32 in PyTorch NCW layout -> logits (B, 3)."""
    B, C, L = x_ncl.shape
    assert C == 1, "model is defined for in_channels == 1"
    assert L >= 2 * (K - 1) + 1, "need L >= 13 so both VALID convs are non-empty"
    w1, b1, w2p, b2, wf, bf = params

    x = x_ncl.reshape(B, L)                         # drop channel dim (free)
    Bp = ((B + tb - 1) // tb) * tb                  # pad batch to multiple of tb
    if Bp != B:
        x = jnp.pad(x, ((0, Bp - B), (0, 0)))       # zero rows -> finite garbage, sliced off

    out = pl.pallas_call(
        sleep_stage_kernel,
        out_shape=jax.ShapeDtypeStruct((Bp, C_OUT), jnp.float32),
        grid=(Bp // tb,),
        in_specs=[
            pl.BlockSpec((tb, L), lambda i: (i, 0)),            # lane-dense input block
            pl.BlockSpec((K, C_HID), lambda i: (0, 0)),          # weights: constant index
            pl.BlockSpec((1, C_HID), lambda i: (0, 0)),          # maps -> fetched once
            pl.BlockSpec((K * C_HID, C_HID), lambda i: (0, 0)),
            pl.BlockSpec((1, C_HID), lambda i: (0, 0)),
            pl.BlockSpec((C_HID, C_OUT), lambda i: (0, 0)),
            pl.BlockSpec((1, C_OUT), lambda i: (0, 0)),
        ],
        out_specs=pl.BlockSpec((tb, C_OUT), lambda i: (i, 0)),
        compiler_params=pltpu.CompilerParams(dimension_semantics=("parallel",)),
    )(x, w1, b1, w2p, b2, wf, bf)
    return out[:B]


def init_params(key):
    """Deterministic PyTorch-style (uniform +-1/sqrt(fan_in)) parameter init."""
    ks = jax.random.split(key, 6)

    def u(k, shape, fan_in):
        bound = 1.0 / jnp.sqrt(jnp.float32(fan_in))
        return jax.random.uniform(k, shape, jnp.float32, -bound, bound)

    c1w = u(ks[0], (C_HID, 1, K), 1 * K)            # Conv1d(1, 64, 7).weight
    c1b = u(ks[1], (C_HID,), 1 * K)                 # Conv1d(1, 64, 7).bias
    c2w = u(ks[2], (C_HID, C_HID, K), C_HID * K)    # Conv1d(64, 64, 7).weight
    c2b = u(ks[3], (C_HID,), C_HID * K)
    fcw = u(ks[4], (C_OUT, C_HID), C_HID)           # Linear(64, 3).weight
    fcb = u(ks[5], (C_OUT,), C_HID)

    # Repack for the kernel's channels-last / im2col layout.
    w1 = jnp.transpose(c1w[:, 0, :], (1, 0))        # (7, 64)       [k, c_out]
    b1 = c1b.reshape(1, C_HID)
    w2p = (jnp.transpose(c2w, (2, 1, 0))            # (7, 64, 64)   [k, c_in, c_out]
           .reshape(K * C_HID, C_HID)               # (448, 64)     row = k*64 + c_in
           .astype(jnp.bfloat16))                   # bf16 MXU operand (f32 accumulation)
    b2 = c2b.reshape(1, C_HID)
    wf = jnp.transpose(fcw, (1, 0))                 # (64, 3)
    bf = fcb.reshape(1, C_OUT)
    return (w1, b1, w2p, b2, wf, bf), (c1w, c1b, c2w, c2b, fcw, fcb)


def reference_forward(x_ncl, torch_params):
    """Pure-JAX f32 reference matching the PyTorch forward exactly."""
    c1w, c1b, c2w, c2b, fcw, fcb = torch_params
    h = jax.lax.conv_general_dilated(x_ncl, c1w, (1,), "VALID",
                                     dimension_numbers=("NCH", "OIH", "NCH"))
    h = jax.nn.relu(h + c1b[None, :, None])
    h = jax.lax.conv_general_dilated(h, c2w, (1,), "VALID",
                                     dimension_numbers=("NCH", "OIH", "NCH"))
    h = jax.nn.relu(h + c2b[None, :, None])
    g = jnp.mean(h, axis=-1)                        # (B, 64)
    return g @ fcw.T + fcb[None, :]                 # (B, 3)


if __name__ == "__main__":
    key = jax.random.PRNGKey(0)
    pkey, xkey = jax.random.split(key)
    params, torch_params = init_params(pkey)

    B, L = 10, 64                                   # small shapes; L must be >= 13
    x = jax.random.normal(xkey, (B, 1, L), jnp.float32)

    out = sleep_stage_classifier(x, params, tb=8)   # B padded to 16 -> grid of 2
    out = jax.block_until_ready(out)

    ref = reference_forward(x, torch_params)
    assert out.shape == (B, C_OUT)
    assert bool(jnp.all(jnp.isfinite(out)))
    # bf16 conv2 operands (f32 accumulation) -> slightly looser tolerance vs f32 reference.
    assert jnp.allclose(out, ref, atol=2e-2, rtol=2e-2), (out, ref)
    print("KERNEL_OK")
</pallas_src>

<mosaic_0001>
module attributes {stable_mosaic.version = 11 : i64} {
  func.func @sleep_stage_kernel(%arg0: i32, %arg1: memref<8x64xf32, #tpu.memory_space<vmem>>, %arg2: memref<7x64xf32, #tpu.memory_space<vmem>>, %arg3: memref<1x64xf32, #tpu.memory_space<vmem>>, %arg4: memref<448x64xbf16, #tpu.memory_space<vmem>>, %arg5: memref<1x64xf32, #tpu.memory_space<vmem>>, %arg6: memref<64x3xf32, #tpu.memory_space<vmem>>, %arg7: memref<1x3xf32, #tpu.memory_space<vmem>>, %arg8: memref<8x3xf32, #tpu.memory_space<vmem>>) attributes {dimension_semantics = [#tpu.dimension_semantics<parallel>], iteration_bounds = array<i64: 2>, scalar_prefetch = 0 : i64, scratch_operands = 0 : i64, tpu.core_type = #tpu.core_type<tc>, window_params = [{transform_indices = @transform_0, window_bounds = array<i64: 8, 64>}, {pipeline_mode = #tpu.pipeline_mode<synchronous>, transform_indices = @transform_1, window_bounds = array<i64: 7, 64>}, {pipeline_mode = #tpu.pipeline_mode<synchronous>, transform_indices = @transform_2, window_bounds = array<i64: 1, 64>}, {pipeline_mode = #tpu.pipeline_mode<synchronous>, transform_indices = @transform_3, window_bounds = array<i64: 448, 64>}, {pipeline_mode = #tpu.pipeline_mode<synchronous>, transform_indices = @transform_4, window_bounds = array<i64: 1, 64>}, {pipeline_mode = #tpu.pipeline_mode<synchronous>, transform_indices = @transform_5, window_bounds = array<i64: 64, 3>}, {pipeline_mode = #tpu.pipeline_mode<synchronous>, transform_indices = @transform_6, window_bounds = array<i64: 1, 3>}, {transform_indices = @transform_7, window_bounds = array<i64: 8, 3>}]} {
    %c0 = arith.constant 0 : index
    %c0_0 = arith.constant 0 : index
    %0 = vector.load %arg1[%c0, %c0_0] : memref<8x64xf32, #tpu.memory_space<vmem>>, vector<8x64xf32>
    %1 = tpu.transpose %0, [1, 0] : vector<8x64xf32> -> vector<64x8xf32>
    %c0_1 = arith.constant 0 : index
    %c0_2 = arith.constant 0 : index
    %2 = vector.load %arg2[%c0_1, %c0_2] : memref<7x64xf32, #tpu.memory_space<vmem>>, vector<7x64xf32>
    %c0_3 = arith.constant 0 : index
    %c0_4 = arith.constant 0 : index
    %3 = vector.load %arg3[%c0_3, %c0_4] : memref<1x64xf32, #tpu.memory_space<vmem>>, vector<1x64xf32>
    %c0_5 = arith.constant 0 : index
    %c0_6 = arith.constant 0 : index
    %4 = vector.load %arg4[%c0_5, %c0_6] : memref<448x64xbf16, #tpu.memory_space<vmem>>, vector<448x64xbf16>
    %c0_7 = arith.constant 0 : index
    %c0_8 = arith.constant 0 : index
    %5 = vector.load %arg5[%c0_7, %c0_8] : memref<1x64xf32, #tpu.memory_space<vmem>>, vector<1x64xf32>
    %6 = vector.extract_strided_slice %1 {offsets = [0, 0], sizes = [64, 1], strides = [1, 1]} : vector<64x8xf32> to vector<64x1xf32>
    %7 = vector.extract_strided_slice %6 {offsets = [0, 0], sizes = [58, 1], strides = [1, 1]} : vector<64x1xf32> to vector<58x1xf32>
    %8 = vector.extract_strided_slice %2 {offsets = [0, 0], sizes = [1, 64], strides = [1, 1]} : vector<7x64xf32> to vector<1x64xf32>
    %9 = vector.broadcast %7 : vector<58x1xf32> to vector<58x64xf32>
    %10 = vector.broadcast %8 : vector<1x64xf32> to vector<58x64xf32>
    %11 = arith.mulf %9, %10 : vector<58x64xf32>
    %12 = vector.extract_strided_slice %6 {offsets = [1, 0], sizes = [58, 1], strides = [1, 1]} : vector<64x1xf32> to vector<58x1xf32>
    %13 = vector.extract_strided_slice %2 {offsets = [1, 0], sizes = [1, 64], strides = [1, 1]} : vector<7x64xf32> to vector<1x64xf32>
    %14 = vector.broadcast %12 : vector<58x1xf32> to vector<58x64xf32>
    %15 = vector.broadcast %13 : vector<1x64xf32> to vector<58x64xf32>
    %16 = arith.mulf %14, %15 : vector<58x64xf32>
    %17 = arith.addf %11, %16 : vector<58x64xf32>
    %18 = vector.extract_strided_slice %6 {offsets = [2, 0], sizes = [58, 1], strides = [1, 1]} : vector<64x1xf32> to vector<58x1xf32>
    %19 = vector.extract_strided_slice %2 {offsets = [2, 0], sizes = [1, 64], strides = [1, 1]} : vector<7x64xf32> to vector<1x64xf32>
    %20 = vector.broadcast %18 : vector<58x1xf32> to vector<58x64xf32>
    %21 = vector.broadcast %19 : vector<1x64xf32> to vector<58x64xf32>
    %22 = arith.mulf %20, %21 : vector<58x64xf32>
    %23 = arith.addf %17, %22 : vector<58x64xf32>
    %24 = vector.extract_strided_slice %6 {offsets = [3, 0], sizes = [58, 1], strides = [1, 1]} : vector<64x1xf32> to vector<58x1xf32>
    %25 = vector.extract_strided_slice %2 {offsets = [3, 0], sizes = [1, 64], strides = [1, 1]} : vector<7x64xf32> to vector<1x64xf32>
    %26 = vector.broadcast %24 : vector<58x1xf32> to vector<58x64xf32>
    %27 = vector.broadcast %25 : vector<1x64xf32> to vector<58x64xf32>
    %28 = arith.mulf %26, %27 : vector<58x64xf32>
    %29 = arith.addf %23, %28 : vector<58x64xf32>
    %30 = vector.extract_strided_slice %6 {offsets = [4, 0], sizes = [58, 1], strides = [1, 1]} : vector<64x1xf32> to vector<58x1xf32>
    %31 = vector.extract_strided_slice %2 {offsets = [4, 0], sizes = [1, 64], strides = [1, 1]} : vector<7x64xf32> to vector<1x64xf32>
    %32 = vector.broadcast %30 : vector<58x1xf32> to vector<58x64xf32>
    %33 = vector.broadcast %31 : vector<1x64xf32> to vector<58x64xf32>
    %34 = arith.mulf %32, %33 : vector<58x64xf32>
    %35 = arith.addf %29, %34 : vector<58x64xf32>
    %36 = vector.extract_strided_slice %6 {offsets = [5, 0], sizes = [58, 1], strides = [1, 1]} : vector<64x1xf32> to vector<58x1xf32>
    %37 = vector.extract_strided_slice %2 {offsets = [5, 0], sizes = [1, 64], strides = [1, 1]} : vector<7x64xf32> to vector<1x64xf32>
    %38 = vector.broadcast %36 : vector<58x1xf32> to vector<58x64xf32>
    %39 = vector.broadcast %37 : vector<1x64xf32> to vector<58x64xf32>
    %40 = arith.mulf %38, %39 : vector<58x64xf32>
    %41 = arith.addf %35, %40 : vector<58x64xf32>
    %42 = vector.extract_strided_slice %6 {offsets = [6, 0], sizes = [58, 1], strides = [1, 1]} : vector<64x1xf32> to vector<58x1xf32>
    %43 = vector.extract_strided_slice %2 {offsets = [6, 0], sizes = [1, 64], strides = [1, 1]} : vector<7x64xf32> to vector<1x64xf32>
    %44 = vector.broadcast %42 : vector<58x1xf32> to vector<58x64xf32>
    %45 = vector.broadcast %43 : vector<1x64xf32> to vector<58x64xf32>
    %46 = arith.mulf %44, %45 : vector<58x64xf32>
    %47 = arith.addf %41, %46 : vector<58x64xf32>
    %48 = vector.broadcast %3 : vector<1x64xf32> to vector<58x64xf32>
    %49 = arith.addf %47, %48 : vector<58x64xf32>
    %cst = arith.constant 0.000000e+00 : f32
    %50 = vector.broadcast %cst : f32 to vector<58x64xf32>
    %51 = arith.maximumf %49, %50 : vector<58x64xf32>
    %52 = vector.extract_strided_slice %51 {offsets = [0, 0], sizes = [52, 64], strides = [1, 1]} : vector<58x64xf32> to vector<52x64xf32>
    %53 = vector.extract_strided_slice %51 {offsets = [1, 0], sizes = [52, 64], strides = [1, 1]} : vector<58x64xf32> to vector<52x64xf32>
    %54 = vector.extract_strided_slice %51 {offsets = [2, 0], sizes = [52, 64], strides = [1, 1]} : vector<58x64xf32> to vector<52x64xf32>
    %55 = vector.extract_strided_slice %51 {offsets = [3, 0], sizes = [52, 64], strides = [1, 1]} : vector<58x64xf32> to vector<52x64xf32>
    %56 = vector.extract_strided_slice %51 {offsets = [4, 0], sizes = [52, 64], strides = [1, 1]} : vector<58x64xf32> to vector<52x64xf32>
    %57 = vector.extract_strided_slice %51 {offsets = [5, 0], sizes = [52, 64], strides = [1, 1]} : vector<58x64xf32> to vector<52x64xf32>
    %58 = vector.extract_strided_slice %51 {offsets = [6, 0], sizes = [52, 64], strides = [1, 1]} : vector<58x64xf32> to vector<52x64xf32>
    %59 = tpu.concatenate %52, %53, %54, %55, %56, %57, %58 in 1 : vector<52x64xf32>, vector<52x64xf32>, vector<52x64xf32>, vector<52x64xf32>, vector<52x64xf32>, vector<52x64xf32>, vector<52x64xf32> -> vector<52x448xf32>
    %60 = arith.truncf %59 : vector<52x448xf32> to vector<52x448xbf16>
    %cst_9 = arith.constant dense<0.000000e+00> : vector<52x64xf32>
    %61 = tpu.matmul %60, %4, %cst_9 {dimension_numbers = #tpu.dot_dimension_numbers<[1], [0], [0], [1], [0, 0, 1, 1], [], []>} : vector<52x448xbf16>, vector<448x64xbf16>, vector<52x64xf32> -> vector<52x64xf32>
    %62 = vector.broadcast %5 : vector<1x64xf32> to vector<52x64xf32>
    %63 = arith.addf %61, %62 : vector<52x64xf32>
    %cst_10 = arith.constant 0.000000e+00 : f32
    %64 = vector.broadcast %cst_10 : f32 to vector<52x64xf32>
    %65 = arith.maximumf %63, %64 : vector<52x64xf32>
    %cst_11 = arith.constant dense<0.000000e+00> : vector<64xf32>
    %66 = vector.multi_reduction <add>, %65, %cst_11 [0] : vector<52x64xf32> to vector<64xf32>
    %67 = vector.shape_cast %66 : vector<64xf32> to vector<1x64xf32>
    %cst_12 = arith.constant 5.200000e+01 : f32
    %68 = vector.broadcast %cst_12 : f32 to vector<1x64xf32>
    %69 = arith.divf %67, %68 : vector<1x64xf32>
    %70 = vector.extract_strided_slice %1 {offsets = [0, 1], sizes = [64, 1], strides = [1, 1]} : vector<64x8xf32> to vector<64x1xf32>
    %71 = vector.extract_strided_slice %70 {offsets = [0, 0], sizes = [58, 1], strides = [1, 1]} : vector<64x1xf32> to vector<58x1xf32>
    %72 = vector.extract_strided_slice %2 {offsets = [0, 0], sizes = [1, 64], strides = [1, 1]} : vector<7x64xf32> to vector<1x64xf32>
    %73 = vector.broadcast %71 : vector<58x1xf32> to vector<58x64xf32>
    %74 = vector.broadcast %72 : vector<1x64xf32> to vector<58x64xf32>
    %75 = arith.mulf %73, %74 : vector<58x64xf32>
    %76 = vector.extract_strided_slice %70 {offsets = [1, 0], sizes = [58, 1], strides = [1, 1]} : vector<64x1xf32> to vector<58x1xf32>
    %77 = vector.extract_strided_slice %2 {offsets = [1, 0], sizes = [1, 64], strides = [1, 1]} : vector<7x64xf32> to vector<1x64xf32>
    %78 = vector.broadcast %76 : vector<58x1xf32> to vector<58x64xf32>
    %79 = vector.broadcast %77 : vector<1x64xf32> to vector<58x64xf32>
    %80 = arith.mulf %78, %79 : vector<58x64xf32>
    %81 = arith.addf %75, %80 : vector<58x64xf32>
    %82 = vector.extract_strided_slice %70 {offsets = [2, 0], sizes = [58, 1], strides = [1, 1]} : vector<64x1xf32> to vector<58x1xf32>
    %83 = vector.extract_strided_slice %2 {offsets = [2, 0], sizes = [1, 64], strides = [1, 1]} : vector<7x64xf32> to vector<1x64xf32>
    %84 = vector.broadcast %82 : vector<58x1xf32> to vector<58x64xf32>
    %85 = vector.broadcast %83 : vector<1x64xf32> to vector<58x64xf32>
    %86 = arith.mulf %84, %85 : vector<58x64xf32>
    %87 = arith.addf %81, %86 : vector<58x64xf32>
    %88 = vector.extract_strided_slice %70 {offsets = [3, 0], sizes = [58, 1], strides = [1, 1]} : vector<64x1xf32> to vector<58x1xf32>
    %89 = vector.extract_strided_slice %2 {offsets = [3, 0], sizes = [1, 64], strides = [1, 1]} : vector<7x64xf32> to vector<1x64xf32>
    %90 = vector.broadcast %88 : vector<58x1xf32> to vector<58x64xf32>
    %91 = vector.broadcast %89 : vector<1x64xf32> to vector<58x64xf32>
    %92 = arith.mulf %90, %91 : vector<58x64xf32>
    %93 = arith.addf %87, %92 : vector<58x64xf32>
    %94 = vector.extract_strided_slice %70 {offsets = [4, 0], sizes = [58, 1], strides = [1, 1]} : vector<64x1xf32> to vector<58x1xf32>
    %95 = vector.extract_strided_slice %2 {offsets = [4, 0], sizes = [1, 64], strides = [1, 1]} : vector<7x64xf32> to vector<1x64xf32>
    %96 = vector.broadcast %94 : vector<58x1xf32> to vector<58x64xf32>
    %97 = vector.broadcast %95 : vector<1x64xf32> to vector<58x64xf32>
    %98 = arith.mulf %96, %97 : vector<58x64xf32>
    %99 = arith.addf %93, %98 : vector<58x64xf32>
    %100 = vector.extract_strided_slice %70 {offsets = [5, 0], sizes = [58, 1], strides = [1, 1]} : vector<64x1xf32> to vector<58x1xf32>
    %101 = vector.extract_strided_slice %2 {offsets = [5, 0], sizes = [1, 64], strides = [1, 1]} : vector<7x64xf32> to vector<1x64xf32>
    %102 = vector.broadcast %100 : vector<58x1xf32> to vector<58x64xf32>
    %103 = vector.broadcast %101 : vector<1x64xf32> to vector<58x64xf32>
    %104 = arith.mulf %102, %103 : vector<58x64xf32>
    %105 = arith.addf %99, %104 : vector<58x64xf32>
    %106 = vector.extract_strided_slice %70 {offsets = [6, 0], sizes = [58, 1], strides = [1, 1]} : vector<64x1xf32> to vector<58x1xf32>
    %107 = vector.extract_strided_slice %2 {offsets = [6, 0], sizes = [1, 64], strides = [1, 1]} : vector<7x64xf32> to vector<1x64xf32>
    %108 = vector.broadcast %106 : vector<58x1xf32> to vector<58x64xf32>
    %109 = vector.broadcast %107 : vector<1x64xf32> to vector<58x64xf32>
    %110 = arith.mulf %108, %109 : vector<58x64xf32>
    %111 = arith.addf %105, %110 : vector<58x64xf32>
    %112 = vector.broadcast %3 : vector<1x64xf32> to vector<58x64xf32>
    %113 = arith.addf %111, %112 : vector<58x64xf32>
    %cst_13 = arith.constant 0.000000e+00 : f32
    %114 = vector.broadcast %cst_13 : f32 to vector<58x64xf32>
    %115 = arith.maximumf %113, %114 : vector<58x64xf32>
    %116 = vector.extract_strided_slice %115 {offsets = [0, 0], sizes = [52, 64], strides = [1, 1]} : vector<58x64xf32> to vector<52x64xf32>
    %117 = vector.extract_strided_slice %115 {offsets = [1, 0], sizes = [52, 64], strides = [1, 1]} : vector<58x64xf32> to vector<52x64xf32>
    %118 = vector.extract_strided_slice %115 {offsets = [2, 0], sizes = [52, 64], strides = [1, 1]} : vector<58x64xf32> to vector<52x64xf32>
    %119 = vector.extract_strided_slice %115 {offsets = [3, 0], sizes = [52, 64], strides = [1, 1]} : vector<58x64xf32> to vector<52x64xf32>
    %120 = vector.extract_strided_slice %115 {offsets = [4, 0], sizes = [52, 64], strides = [1, 1]} : vector<58x64xf32> to vector<52x64xf32>
    %121 = vector.extract_strided_slice %115 {offsets = [5, 0], sizes = [52, 64], strides = [1, 1]} : vector<58x64xf32> to vector<52x64xf32>
    %122 = vector.extract_strided_slice %115 {offsets = [6, 0], sizes = [52, 64], strides = [1, 1]} : vector<58x64xf32> to vector<52x64xf32>
    %123 = tpu.concatenate %116, %117, %118, %119, %120, %121, %122 in 1 : vector<52x64xf32>, vector<52x64xf32>, vector<52x64xf32>, vector<52x64xf32>, vector<52x64xf32>, vector<52x64xf32>, vector<52x64xf32> -> vector<52x448xf32>
    %124 = arith.truncf %123 : vector<52x448xf32> to vector<52x448xbf16>
    %cst_14 = arith.constant dense<0.000000e+00> : vector<52x64xf32>
    %125 = tpu.matmul %124, %4, %cst_14 {dimension_numbers = #tpu.dot_dimension_numbers<[1], [0], [0], [1], [0, 0, 1, 1], [], []>} : vector<52x448xbf16>, vector<448x64xbf16>, vector<52x64xf32> -> vector<52x64xf32>
    %126 = vector.broadcast %5 : vector<1x64xf32> to vector<52x64xf32>
    %127 = arith.addf %125, %126 : vector<52x64xf32>
    %cst_15 = arith.constant 0.000000e+00 : f32
    %128 = vector.broadcast %cst_15 : f32 to vector<52x64xf32>
    %129 = arith.maximumf %127, %128 : vector<52x64xf32>
    %cst_16 = arith.constant dense<0.000000e+00> : vector<64xf32>
    %130 = vector.multi_reduction <add>, %129, %cst_16 [0] : vector<52x64xf32> to vector<64xf32>
    %131 = vector.shape_cast %130 : vector<64xf32> to vector<1x64xf32>
    %cst_17 = arith.constant 5.200000e+01 : f32
    %132 = vector.broadcast %cst_17 : f32 to vector<1x64xf32>
    %133 = arith.divf %131, %132 : vector<1x64xf32>
    %134 = vector.extract_strided_slice %1 {offsets = [0, 2], sizes = [64, 1], strides = [1, 1]} : vector<64x8xf32> to vector<64x1xf32>
    %135 = vector.extract_strided_slice %134 {offsets = [0, 0], sizes = [58, 1], strides = [1, 1]} : vector<64x1xf32> to vector<58x1xf32>
    %136 = vector.extract_strided_slice %2 {offsets = [0, 0], sizes = [1, 64], strides = [1, 1]} : vector<7x64xf32> to vector<1x64xf32>
    %137 = vector.broadcast %135 : vector<58x1xf32> to vector<58x64xf32>
    %138 = vector.broadcast %136 : vector<1x64xf32> to vector<58x64xf32>
    %139 = arith.mulf %137, %138 : vector<58x64xf32>
    %140 = vector.extract_strided_slice %134 {offsets = [1, 0], sizes = [58, 1], strides = [1, 1]} : vector<64x1xf32> to vector<58x1xf32>
    %141 = vector.extract_strided_slice %2 {offsets = [1, 0], sizes = [1, 64], strides = [1, 1]} : vector<7x64xf32> to vector<1x64xf32>
    %142 = vector.broadcast %140 : vector<58x1xf32> to vector<58x64xf32>
    %143 = vector.broadcast %141 : vector<1x64xf32> to vector<58x64xf32>
    %144 = arith.mulf %142, %143 : vector<58x64xf32>
    %145 = arith.addf %139, %144 : vector<58x64xf32>
    %146 = vector.extract_strided_slice %134 {offsets = [2, 0], sizes = [58, 1], strides = [1, 1]} : vector<64x1xf32> to vector<58x1xf32>
    %147 = vector.extract_strided_slice %2 {offsets = [2, 0], sizes = [1, 64], strides = [1, 1]} : vector<7x64xf32> to vector<1x64xf32>
    %148 = vector.broadcast %146 : vector<58x1xf32> to vector<58x64xf32>
    %149 = vector.broadcast %147 : vector<1x64xf32> to vector<58x64xf32>
    %150 = arith.mulf %148, %149 : vector<58x64xf32>
    %151 = arith.addf %145, %150 : vector<58x64xf32>
    %152 = vector.extract_strided_slice %134 {offsets = [3, 0], sizes = [58, 1], strides = [1, 1]} : vector<64x1xf32> to vector<58x1xf32>
    %153 = vector.extract_strided_slice %2 {offsets = [3, 0], sizes = [1, 64], strides = [1, 1]} : vector<7x64xf32> to vector<1x64xf32>
    %154 = vector.broadcast %152 : vector<58x1xf32> to vector<58x64xf32>
    %155 = vector.broadcast %153 : vector<1x64xf32> to vector<58x64xf32>
    %156 = arith.mulf %154, %155 : vector<58x64xf32>
    %157 = arith.addf %151, %156 : vector<58x64xf32>
    %158 = vector.extract_strided_slice %134 {offsets = [4, 0], sizes = [58, 1], strides = [1, 1]} : vector<64x1xf32> to vector<58x1xf32>
    %159 = vector.extract_strided_slice %2 {offsets = [4, 0], sizes = [1, 64], strides = [1, 1]} : vector<7x64xf32> to vector<1x64xf32>
    %160 = vector.broadcast %158 : vector<58x1xf32> to vector<58x64xf32>
    %161 = vector.broadcast %159 : vector<1x64xf32> to vector<58x64xf32>
    %162 = arith.mulf %160, %161 : vector<58x64xf32>
    %163 = arith.addf %157, %162 : vector<58x64xf32>
    %164 = vector.extract_strided_slice %134 {offsets = [5, 0], sizes = [58, 1], strides = [1, 1]} : vector<64x1xf32> to vector<58x1xf32>
    %165 = vector.extract_strided_slice %2 {offsets = [5, 0], sizes = [1, 64], strides = [1, 1]} : vector<7x64xf32> to vector<1x64xf32>
    %166 = vector.broadcast %164 : vector<58x1xf32> to vector<58x64xf32>
    %167 = vector.broadcast %165 : vector<1x64xf32> to vector<58x64xf32>
    %168 = arith.mulf %166, %167 : vector<58x64xf32>
    %169 = arith.addf %163, %168 : vector<58x64xf32>
    %170 = vector.extract_strided_slice %134 {offsets = [6, 0], sizes = [58, 1], strides = [1, 1]} : vector<64x1xf32> to vector<58x1xf32>
    %171 = vector.extract_strided_slice %2 {offsets = [6, 0], sizes = [1, 64], strides = [1, 1]} : vector<7x64xf32> to vector<1x64xf32>
    %172 = vector.broadcast %170 : vector<58x1xf32> to vector<58x64xf32>
    %173 = vector.broadcast %171 : vector<1x64xf32> to vector<58x64xf32>
    %174 = arith.mulf %172, %173 : vector<58x64xf32>
    %175 = arith.addf %169, %174 : vector<58x64xf32>
    %176 = vector.broadcast %3 : vector<1x64xf32> to vector<58x64xf32>
    %177 = arith.addf %175, %176 : vector<58x64xf32>
    %cst_18 = arith.constant 0.000000e+00 : f32
    %178 = vector.broadcast %cst_18 : f32 to vector<58x64xf32>
    %179 = arith.maximumf %177, %178 : vector<58x64xf32>
    %180 = vector.extract_strided_slice %179 {offsets = [0, 0], sizes = [52, 64], strides = [1, 1]} : vector<58x64xf32> to vector<52x64xf32>
    %181 = vector.extract_strided_slice %179 {offsets = [1, 0], sizes = [52, 64], strides = [1, 1]} : vector<58x64xf32> to vector<52x64xf32>
    %182 = vector.extract_strided_slice %179 {offsets = [2, 0], sizes = [52, 64], strides = [1, 1]} : vector<58x64xf32> to vector<52x64xf32>
    %183 = vector.extract_strided_slice %179 {offsets = [3, 0], sizes = [52, 64], strides = [1, 1]} : vector<58x64xf32> to vector<52x64xf32>
    %184 = vector.extract_strided_slice %179 {offsets = [4, 0], sizes = [52, 64], strides = [1, 1]} : vector<58x64xf32> to vector<52x64xf32>
    %185 = vector.extract_strided_slice %179 {offsets = [5, 0], sizes = [52, 64], strides = [1, 1]} : vector<58x64xf32> to vector<52x64xf32>
    %186 = vector.extract_strided_slice %179 {offsets = [6, 0], sizes = [52, 64], strides = [1, 1]} : vector<58x64xf32> to vector<52x64xf32>
    %187 = tpu.concatenate %180, %181, %182, %183, %184, %185, %186 in 1 : vector<52x64xf32>, vector<52x64xf32>, vector<52x64xf32>, vector<52x64xf32>, vector<52x64xf32>, vector<52x64xf32>, vector<52x64xf32> -> vector<52x448xf32>
    %188 = arith.truncf %187 : vector<52x448xf32> to vector<52x448xbf16>
    %cst_19 = arith.constant dense<0.000000e+00> : vector<52x64xf32>
    %189 = tpu.matmul %188, %4, %cst_19 {dimension_numbers = #tpu.dot_dimension_numbers<[1], [0], [0], [1], [0, 0, 1, 1], [], []>} : vector<52x448xbf16>, vector<448x64xbf16>, vector<52x64xf32> -> vector<52x64xf32>
    %190 = vector.broadcast %5 : vector<1x64xf32> to vector<52x64xf32>
    %191 = arith.addf %189, %190 : vector<52x64xf32>
    %cst_20 = arith.constant 0.000000e+00 : f32
    %192 = vector.broadcast %cst_20 : f32 to vector<52x64xf32>
    %193 = arith.maximumf %191, %192 : vector<52x64xf32>
    %cst_21 = arith.constant dense<0.000000e+00> : vector<64xf32>
    %194 = vector.multi_reduction <add>, %193, %cst_21 [0] : vector<52x64xf32> to vector<64xf32>
    %195 = vector.shape_cast %194 : vector<64xf32> to vector<1x64xf32>
    %cst_22 = arith.constant 5.200000e+01 : f32
    %196 = vector.broadcast %cst_22 : f32 to vector<1x64xf32>
    %197 = arith.divf %195, %196 : vector<1x64xf32>
    %198 = vector.extract_strided_slice %1 {offsets = [0, 3], sizes = [64, 1], strides = [1, 1]} : vector<64x8xf32> to vector<64x1xf32>
    %199 = vector.extract_strided_slice %198 {offsets = [0, 0], sizes = [58, 1], strides = [1, 1]} : vector<64x1xf32> to vector<58x1xf32>
    %200 = vector.extract_strided_slice %2 {offsets = [0, 0], sizes = [1, 64], strides = [1, 1]} : vector<7x64xf32> to vector<1x64xf32>
    %201 = vector.broadcast %199 : vector<58x1xf32> to vector<58x64xf32>
    %202 = vector.broadcast %200 : vector<1x64xf32> to vector<58x64xf32>
    %203 = arith.mulf %201, %202 : vector<58x64xf32>
    %204 = vector.extract_strided_slice %198 {offsets = [1, 0], sizes = [58, 1], strides = [1, 1]} : vector<64x1xf32> to vector<58x1xf32>
    %205 = vector.extract_strided_slice %2 {offsets = [1, 0], sizes = [1, 64], strides = [1, 1]} : vector<7x64xf32> to vector<1x64xf32>
    %206 = vector.broadcast %204 : vector<58x1xf32> to vector<58x64xf32>
    %207 = vector.broadcast %205 : vector<1x64xf32> to vector<58x64xf32>
    %208 = arith.mulf %206, %207 : vector<58x64xf32>
    %209 = arith.addf %203, %208 : vector<58x64xf32>
    %210 = vector.extract_strided_slice %198 {offsets = [2, 0], sizes = [58, 1], strides = [1, 1]} : vector<64x1xf32> to vector<58x1xf32>
    %211 = vector.extract_strided_slice %2 {offsets = [2, 0], sizes = [1, 64], strides = [1, 1]} : vector<7x64xf32> to vector<1x64xf32>
    %212 = vector.broadcast %210 : vector<58x1xf32> to vector<58x64xf32>
    %213 = vector.broadcast %211 : vector<1x64xf32> to vector<58x64xf32>
    %214 = arith.mulf %212, %213 : vector<58x64xf32>
    %215 = arith.addf %209, %214 : vector<58x64xf32>
    %216 = vector.extract_strided_slice %198 {offsets = [3, 0], sizes = [58, 1], strides = [1, 1]} : vector<64x1xf32> to vector<58x1xf32>
    %217 = vector.extract_strided_slice %2 {offsets = [3, 0], sizes = [1, 64], strides = [1, 1]} : vector<7x64xf32> to vector<1x64xf32>
    %218 = vector.broadcast %216 : vector<58x1xf32> to vector<58x64xf32>
    %219 = vector.broadcast %217 : vector<1x64xf32> to vector<58x64xf32>
    %220 = arith.mulf %218, %219 : vector<58x64xf32>
    %221 = arith.addf %215, %220 : vector<58x64xf32>
    %222 = vector.extract_strided_slice %198 {offsets = [4, 0], sizes = [58, 1], strides = [1, 1]} : vector<64x1xf32> to vector<58x1xf32>
    %223 = vector.extract_strided_slice %2 {offsets = [4, 0], sizes = [1, 64], strides = [1, 1]} : vector<7x64xf32> to vector<1x64xf32>
    %224 = vector.broadcast %222 : vector<58x1xf32> to vector<58x64xf32>
    %225 = vector.broadcast %223 : vector<1x64xf32> to vector<58x64xf32>
    %226 = arith.mulf %224, %225 : vector<58x64xf32>
    %227 = arith.addf %221, %226 : vector<58x64xf32>
    %228 = vector.extract_strided_slice %198 {offsets = [5, 0], sizes = [58, 1], strides = [1, 1]} : vector<64x1xf32> to vector<58x1xf32>
    %229 = vector.extract_strided_slice %2 {offsets = [5, 0], sizes = [1, 64], strides = [1, 1]} : vector<7x64xf32> to vector<1x64xf32>
    %230 = vector.broadcast %228 : vector<58x1xf32> to vector<58x64xf32>
    %231 = vector.broadcast %229 : vector<1x64xf32> to vector<58x64xf32>
    %232 = arith.mulf %230, %231 : vector<58x64xf32>
    %233 = arith.addf %227, %232 : vector<58x64xf32>
    %234 = vector.extract_strided_slice %198 {offsets = [6, 0], sizes = [58, 1], strides = [1, 1]} : vector<64x1xf32> to vector<58x1xf32>
    %235 = vector.extract_strided_slice %2 {offsets = [6, 0], sizes = [1, 64], strides = [1, 1]} : vector<7x64xf32> to vector<1x64xf32>
    %236 = vector.broadcast %234 : vector<58x1xf32> to vector<58x64xf32>
    %237 = vector.broadcast %235 : vector<1x64xf32> to vector<58x64xf32>
    %238 = arith.mulf %236, %237 : vector<58x64xf32>
    %239 = arith.addf %233, %238 : vector<58x64xf32>
    %240 = vector.broadcast %3 : vector<1x64xf32> to vector<58x64xf32>
    %241 = arith.addf %239, %240 : vector<58x64xf32>
    %cst_23 = arith.constant 0.000000e+00 : f32
    %242 = vector.broadcast %cst_23 : f32 to vector<58x64xf32>
    %243 = arith.maximumf %241, %242 : vector<58x64xf32>
    %244 = vector.extract_strided_slice %243 {offsets = [0, 0], sizes = [52, 64], strides = [1, 1]} : vector<58x64xf32> to vector<52x64xf32>
    %245 = vector.extract_strided_slice %243 {offsets = [1, 0], sizes = [52, 64], strides = [1, 1]} : vector<58x64xf32> to vector<52x64xf32>
    %246 = vector.extract_strided_slice %243 {offsets = [2, 0], sizes = [52, 64], strides = [1, 1]} : vector<58x64xf32> to vector<52x64xf32>
    %247 = vector.extract_strided_slice %243 {offsets = [3, 0], sizes = [52, 64], strides = [1, 1]} : vector<58x64xf32> to vector<52x64xf32>
    %248 = vector.extract_strided_slice %243 {offsets = [4, 0], sizes = [52, 64], strides = [1, 1]} : vector<58x64xf32> to vector<52x64xf32>
    %249 = vector.extract_strided_slice %243 {offsets = [5, 0], sizes = [52, 64], strides = [1, 1]} : vector<58x64xf32> to vector<52x64xf32>
    %250 = vector.extract_strided_slice %243 {offsets = [6, 0], sizes = [52, 64], strides = [1, 1]} : vector<58x64xf32> to vector<52x64xf32>
    %251 = tpu.concatenate %244, %245, %246, %247, %248, %249, %250 in 1 : vector<52x64xf32>, vector<52x64xf32>, vector<52x64xf32>, vector<52x64xf32>, vector<52x64xf32>, vector<52x64xf32>, vector<52x64xf32> -> vector<52x448xf32>
    %252 = arith.truncf %251 : vector<52x448xf32> to vector<52x448xbf16>
    %cst_24 = arith.constant dense<0.000000e+00> : vector<52x64xf32>
    %253 = tpu.matmul %252, %4, %cst_24 {dimension_numbers = #tpu.dot_dimension_numbers<[1], [0], [0], [1], [0, 0, 1, 1], [], []>} : vector<52x448xbf16>, vector<448x64xbf16>, vector<52x64xf32> -> vector<52x64xf32>
    %254 = vector.broadcast %5 : vector<1x64xf32> to vector<52x64xf32>
    %255 = arith.addf %253, %254 : vector<52x64xf32>
    %cst_25 = arith.constant 0.000000e+00 : f32
    %256 = vector.broadcast %cst_25 : f32 to vector<52x64xf32>
    %257 = arith.maximumf %255, %256 : vector<52x64xf32>
    %cst_26 = arith.constant dense<0.000000e+00> : vector<64xf32>
    %258 = vector.multi_reduction <add>, %257, %cst_26 [0] : vector<52x64xf32> to vector<64xf32>
    %259 = vector.shape_cast %258 : vector<64xf32> to vector<1x64xf32>
    %cst_27 = arith.constant 5.200000e+01 : f32
    %260 = vector.broadcast %cst_27 : f32 to vector<1x64xf32>
    %261 = arith.divf %259, %260 : vector<1x64xf32>
    %262 = vector.extract_strided_slice %1 {offsets = [0, 4], sizes = [64, 1], strides = [1, 1]} : vector<64x8xf32> to vector<64x1xf32>
    %263 = vector.extract_strided_slice %262 {offsets = [0, 0], sizes = [58, 1], strides = [1, 1]} : vector<64x1xf32> to vector<58x1xf32>
    %264 = vector.extract_strided_slice %2 {offsets = [0, 0], sizes = [1, 64], strides = [1, 1]} : vector<7x64xf32> to vector<1x64xf32>
    %265 = vector.broadcast %263 : vector<58x1xf32> to vector<58x64xf32>
    %266 = vector.broadcast %264 : vector<1x64xf32> to vector<58x64xf32>
    %267 = arith.mulf %265, %266 : vector<58x64xf32>
    %268 = vector.extract_strided_slice %262 {offsets = [1, 0], sizes = [58, 1], strides = [1, 1]} : vector<64x1xf32> to vector<58x1xf32>
    %269 = vector.extract_strided_slice %2 {offsets = [1, 0], sizes = [1, 64], strides = [1, 1]} : vector<7x64xf32> to vector<1x64xf32>
    %270 = vector.broadcast %268 : vector<58x1xf32> to vector<58x64xf32>
    %271 = vector.broadcast %269 : vector<1x64xf32> to vector<58x64xf32>
    %272 = arith.mulf %270, %271 : vector<58x64xf32>
    %273 = arith.addf %267, %272 : vector<58x64xf32>
    %274 = vector.extract_strided_slice %262 {offsets = [2, 0], sizes = [58, 1], strides = [1, 1]} : vector<64x1xf32> to vector<58x1xf32>
    %275 = vector.extract_strided_slice %2 {offsets = [2, 0], sizes = [1, 64], strides = [1, 1]} : vector<7x64xf32> to vector<1x64xf32>
    %276 = vector.broadcast %274 : vector<58x1xf32> to vector<58x64xf32>
    %277 = vector.broadcast %275 : vector<1x64xf32> to vector<58x64xf32>
    %278 = arith.mulf %276, %277 : vector<58x64xf32>
    %279 = arith.addf %273, %278 : vector<58x64xf32>
    %280 = vector.extract_strided_slice %262 {offsets = [3, 0], sizes = [58, 1], strides = [1, 1]} : vector<64x1xf32> to vector<58x1xf32>
    %281 = vector.extract_strided_slice %2 {offsets = [3, 0], sizes = [1, 64], strides = [1, 1]} : vector<7x64xf32> to vector<1x64xf32>
    %282 = vector.broadcast %280 : vector<58x1xf32> to vector<58x64xf32>
    %283 = vector.broadcast %281 : vector<1x64xf32> to vector<58x64xf32>
    %284 = arith.mulf %282, %283 : vector<58x64xf32>
    %285 = arith.addf %279, %284 : vector<58x64xf32>
    %286 = vector.extract_strided_slice %262 {offsets = [4, 0], sizes = [58, 1], strides = [1, 1]} : vector<64x1xf32> to vector<58x1xf32>
    %287 = vector.extract_strided_slice %2 {offsets = [4, 0], sizes = [1, 64], strides = [1, 1]} : vector<7x64xf32> to vector<1x64xf32>
    %288 = vector.broadcast %286 : vector<58x1xf32> to vector<58x64xf32>
    %289 = vector.broadcast %287 : vector<1x64xf32> to vector<58x64xf32>
    %290 = arith.mulf %288, %289 : vector<58x64xf32>
    %291 = arith.addf %285, %290 : vector<58x64xf32>
    %292 = vector.extract_strided_slice %262 {offsets = [5, 0], sizes = [58, 1], strides = [1, 1]} : vector<64x1xf32> to vector<58x1xf32>
    %293 = vector.extract_strided_slice %2 {offsets = [5, 0], sizes = [1, 64], strides = [1, 1]} : vector<7x64xf32> to vector<1x64xf32>
    %294 = vector.broadcast %292 : vector<58x1xf32> to vector<58x64xf32>
    %295 = vector.broadcast %293 : vector<1x64xf32> to vector<58x64xf32>
    %296 = arith.mulf %294, %295 : vector<58x64xf32>
    %297 = arith.addf %291, %296 : vector<58x64xf32>
    %298 = vector.extract_strided_slice %262 {offsets = [6, 0], sizes = [58, 1], strides = [1, 1]} : vector<64x1xf32> to vector<58x1xf32>
    %299 = vector.extract_strided_slice %2 {offsets = [6, 0], sizes = [1, 64], strides = [1, 1]} : vector<7x64xf32> to vector<1x64xf32>
    %300 = vector.broadcast %298 : vector<58x1xf32> to vector<58x64xf32>
    %301 = vector.broadcast %299 : vector<1x64xf32> to vector<58x64xf32>
    %302 = arith.mulf %300, %301 : vector<58x64xf32>
    %303 = arith.addf %297, %302 : vector<58x64xf32>
    %304 = vector.broadcast %3 : vector<1x64xf32> to vector<58x64xf32>
    %305 = arith.addf %303, %304 : vector<58x64xf32>
    %cst_28 = arith.constant 0.000000e+00 : f32
    %306 = vector.broadcast %cst_28 : f32 to vector<58x64xf32>
    %307 = arith.maximumf %305, %306 : vector<58x64xf32>
    %308 = vector.extract_strided_slice %307 {offsets = [0, 0], sizes = [52, 64], strides = [1, 1]} : vector<58x64xf32> to vector<52x64xf32>
    %309 = vector.extract_strided_slice %307 {offsets = [1, 0], sizes = [52, 64], strides = [1, 1]} : vector<58x64xf32> to vector<52x64xf32>
    %310 = vector.extract_strided_slice %307 {offsets = [2, 0], sizes = [52, 64], strides = [1, 1]} : vector<58x64xf32> to vector<52x64xf32>
    %311 = vector.extract_strided_slice %307 {offsets = [3, 0], sizes = [52, 64], strides = [1, 1]} : vector<58x64xf32> to vector<52x64xf32>
    %312 = vector.extract_strided_slice %307 {offsets = [4, 0], sizes = [52, 64], strides = [1, 1]} : vector<58x64xf32> to vector<52x64xf32>
    %313 = vector.extract_strided_slice %307 {offsets = [5, 0], sizes = [52, 64], strides = [1, 1]} : vector<58x64xf32> to vector<52x64xf32>
    %314 = vector.extract_strided_slice %307 {offsets = [6, 0], sizes = [52, 64], strides = [1, 1]} : vector<58x64xf32> to vector<52x64xf32>
    %315 = tpu.concatenate %308, %309, %310, %311, %312, %313, %314 in 1 : vector<52x64xf32>, vector<52x64xf32>, vector<52x64xf32>, vector<52x64xf32>, vector<52x64xf32>, vector<52x64xf32>, vector<52x64xf32> -> vector<52x448xf32>
    %316 = arith.truncf %315 : vector<52x448xf32> to vector<52x448xbf16>
    %cst_29 = arith.constant dense<0.000000e+00> : vector<52x64xf32>
    %317 = tpu.matmul %316, %4, %cst_29 {dimension_numbers = #tpu.dot_dimension_numbers<[1], [0], [0], [1], [0, 0, 1, 1], [], []>} : vector<52x448xbf16>, vector<448x64xbf16>, vector<52x64xf32> -> vector<52x64xf32>
    %318 = vector.broadcast %5 : vector<1x64xf32> to vector<52x64xf32>
    %319 = arith.addf %317, %318 : vector<52x64xf32>
    %cst_30 = arith.constant 0.000000e+00 : f32
    %320 = vector.broadcast %cst_30 : f32 to vector<52x64xf32>
    %321 = arith.maximumf %319, %320 : vector<52x64xf32>
    %cst_31 = arith.constant dense<0.000000e+00> : vector<64xf32>
    %322 = vector.multi_reduction <add>, %321, %cst_31 [0] : vector<52x64xf32> to vector<64xf32>
    %323 = vector.shape_cast %322 : vector<64xf32> to vector<1x64xf32>
    %cst_32 = arith.constant 5.200000e+01 : f32
    %324 = vector.broadcast %cst_32 : f32 to vector<1x64xf32>
    %325 = arith.divf %323, %324 : vector<1x64xf32>
    %326 = vector.extract_strided_slice %1 {offsets = [0, 5], sizes = [64, 1], strides = [1, 1]} : vector<64x8xf32> to vector<64x1xf32>
    %327 = vector.extract_strided_slice %326 {offsets = [0, 0], sizes = [58, 1], strides = [1, 1]} : vector<64x1xf32> to vector<58x1xf32>
    %328 = vector.extract_strided_slice %2 {offsets = [0, 0], sizes = [1, 64], strides = [1, 1]} : vector<7x64xf32> to vector<1x64xf32>
    %329 = vector.broadcast %327 : vector<58x1xf32> to vector<58x64xf32>
    %330 = vector.broadcast %328 : vector<1x64xf32> to vector<58x64xf32>
    %331 = arith.mulf %329, %330 : vector<58x64xf32>
    %332 = vector.extract_strided_slice %326 {offsets = [1, 0], sizes = [58, 1], strides = [1, 1]} : vector<64x1xf32> to vector<58x1xf32>
    %333 = vector.extract_strided_slice %2 {offsets = [1, 0], sizes = [1, 64], strides = [1, 1]} : vector<7x64xf32> to vector<1x64xf32>
    %334 = vector.broadcast %332 : vector<58x1xf32> to vector<58x64xf32>
    %335 = vector.broadcast %333 : vector<1x64xf32> to vector<58x64xf32>
    %336 = arith.mulf %334, %335 : vector<58x64xf32>
    %337 = arith.addf %331, %336 : vector<58x64xf32>
    %338 = vector.extract_strided_slice %326 {offsets = [2, 0], sizes = [58, 1], strides = [1, 1]} : vector<64x1xf32> to vector<58x1xf32>
    %339 = vector.extract_strided_slice %2 {offsets = [2, 0], sizes = [1, 64], strides = [1, 1]} : vector<7x64xf32> to vector<1x64xf32>
    %340 = vector.broadcast %338 : vector<58x1xf32> to vector<58x64xf32>
    %341 = vector.broadcast %339 : vector<1x64xf32> to vector<58x64xf32>
    %342 = arith.mulf %340, %341 : vector<58x64xf32>
    %343 = arith.addf %337, %342 : vector<58x64xf32>
    %344 = vector.extract_strided_slice %326 {offsets = [3, 0], sizes = [58, 1], strides = [1, 1]} : vector<64x1xf32> to vector<58x1xf32>
    %345 = vector.extract_strided_slice %2 {offsets = [3, 0], sizes = [1, 64], strides = [1, 1]} : vector<7x64xf32> to vector<1x64xf32>
    %346 = vector.broadcast %344 : vector<58x1xf32> to vector<58x64xf32>
    %347 = vector.broadcast %345 : vector<1x64xf32> to vector<58x64xf32>
    %348 = arith.mulf %346, %347 : vector<58x64xf32>
    %349 = arith.addf %343, %348 : vector<58x64xf32>
    %350 = vector.extract_strided_slice %326 {offsets = [4, 0], sizes = [58, 1], strides = [1, 1]} : vector<64x1xf32> to vector<58x1xf32>
    %351 = vector.extract_strided_slice %2 {offsets = [4, 0], sizes = [1, 64], strides = [1, 1]} : vector<7x64xf32> to vector<1x64xf32>
    %352 = vector.broadcast %350 : vector<58x1xf32> to vector<58x64xf32>
    %353 = vector.broadcast %351 : vector<1x64xf32> to vector<58x64xf32>
    %354 = arith.mulf %352, %353 : vector<58x64xf32>
    %355 = arith.addf %349, %354 : vector<58x64xf32>
    %356 = vector.extract_strided_slice %326 {offsets = [5, 0], sizes = [58, 1], strides = [1, 1]} : vector<64x1xf32> to vector<58x1xf32>
    %357 = vector.extract_strided_slice %2 {offsets = [5, 0], sizes = [1, 64], strides = [1, 1]} : vector<7x64xf32> to vector<1x64xf32>
    %358 = vector.broadcast %356 : vector<58x1xf32> to vector<58x64xf32>
    %359 = vector.broadcast %357 : vector<1x64xf32> to vector<58x64xf32>
    %360 = arith.mulf %358, %359 : vector<58x64xf32>
    %361 = arith.addf %355, %360 : vector<58x64xf32>
    %362 = vector.extract_strided_slice %326 {offsets = [6, 0], sizes = [58, 1], strides = [1, 1]} : vector<64x1xf32> to vector<58x1xf32>
    %363 = vector.extract_strided_slice %2 {offsets = [6, 0], sizes = [1, 64], strides = [1, 1]} : vector<7x64xf32> to vector<1x64xf32>
    %364 = vector.broadcast %362 : vector<58x1xf32> to vector<58x64xf32>
    %365 = vector.broadcast %363 : vector<1x64xf32> to vector<58x64xf32>
    %366 = arith.mulf %364, %365 : vector<58x64xf32>
    %367 = arith.addf %361, %366 : vector<58x64xf32>
    %368 = vector.broadcast %3 : vector<1x64xf32> to vector<58x64xf32>
    %369 = arith.addf %367, %368 : vector<58x64xf32>
    %cst_33 = arith.constant 0.000000e+00 : f32
    %370 = vector.broadcast %cst_33 : f32 to vector<58x64xf32>
    %371 = arith.maximumf %369, %370 : vector<58x64xf32>
    %372 = vector.extract_strided_slice %371 {offsets = [0, 0], sizes = [52, 64], strides = [1, 1]} : vector<58x64xf32> to vector<52x64xf32>
    %373 = vector.extract_strided_slice %371 {offsets = [1, 0], sizes = [52, 64], strides = [1, 1]} : vector<58x64xf32> to vector<52x64xf32>
    %374 = vector.extract_strided_slice %371 {offsets = [2, 0], sizes = [52, 64], strides = [1, 1]} : vector<58x64xf32> to vector<52x64xf32>
    %375 = vector.extract_strided_slice %371 {offsets = [3, 0], sizes = [52, 64], strides = [1, 1]} : vector<58x64xf32> to vector<52x64xf32>
    %376 = vector.extract_strided_slice %371 {offsets = [4, 0], sizes = [52, 64], strides = [1, 1]} : vector<58x64xf32> to vector<52x64xf32>
    %377 = vector.extract_strided_slice %371 {offsets = [5, 0], sizes = [52, 64], strides = [1, 1]} : vector<58x64xf32> to vector<52x64xf32>
    %378 = vector.extract_strided_slice %371 {offsets = [6, 0], sizes = [52, 64], strides = [1, 1]} : vector<58x64xf32> to vector<52x64xf32>
    %379 = tpu.concatenate %372, %373, %374, %375, %376, %377, %378 in 1 : vector<52x64xf32>, vector<52x64xf32>, vector<52x64xf32>, vector<52x64xf32>, vector<52x64xf32>, vector<52x64xf32>, vector<52x64xf32> -> vector<52x448xf32>
    %380 = arith.truncf %379 : vector<52x448xf32> to vector<52x448xbf16>
    %cst_34 = arith.constant dense<0.000000e+00> : vector<52x64xf32>
    %381 = tpu.matmul %380, %4, %cst_34 {dimension_numbers = #tpu.dot_dimension_numbers<[1], [0], [0], [1], [0, 0, 1, 1], [], []>} : vector<52x448xbf16>, vector<448x64xbf16>, vector<52x64xf32> -> vector<52x64xf32>
    %382 = vector.broadcast %5 : vector<1x64xf32> to vector<52x64xf32>
    %383 = arith.addf %381, %382 : vector<52x64xf32>
    %cst_35 = arith.constant 0.000000e+00 : f32
    %384 = vector.broadcast %cst_35 : f32 to vector<52x64xf32>
    %385 = arith.maximumf %383, %384 : vector<52x64xf32>
    %cst_36 = arith.constant dense<0.000000e+00> : vector<64xf32>
    %386 = vector.multi_reduction <add>, %385, %cst_36 [0] : vector<52x64xf32> to vector<64xf32>
    %387 = vector.shape_cast %386 : vector<64xf32> to vector<1x64xf32>
    %cst_37 = arith.constant 5.200000e+01 : f32
    %388 = vector.broadcast %cst_37 : f32 to vector<1x64xf32>
    %389 = arith.divf %387, %388 : vector<1x64xf32>
    %390 = vector.extract_strided_slice %1 {offsets = [0, 6], sizes = [64, 1], strides = [1, 1]} : vector<64x8xf32> to vector<64x1xf32>
    %391 = vector.extract_strided_slice %390 {offsets = [0, 0], sizes = [58, 1], strides = [1, 1]} : vector<64x1xf32> to vector<58x1xf32>
    %392 = vector.extract_strided_slice %2 {offsets = [0, 0], sizes = [1, 64], strides = [1, 1]} : vector<7x64xf32> to vector<1x64xf32>
    %393 = vector.broadcast %391 : vector<58x1xf32> to vector<58x64xf32>
    %394 = vector.broadcast %392 : vector<1x64xf32> to vector<58x64xf32>
    %395 = arith.mulf %393, %394 : vector<58x64xf32>
    %396 = vector.extract_strided_slice %390 {offsets = [1, 0], sizes = [58, 1], strides = [1, 1]} : vector<64x1xf32> to vector<58x1xf32>
    %397 = vector.extract_strided_slice %2 {offsets = [1, 0], sizes = [1, 64], strides = [1, 1]} : vector<7x64xf32> to vector<1x64xf32>
    %398 = vector.broadcast %396 : vector<58x1xf32> to vector<58x64xf32>
    %399 = vector.broadcast %397 : vector<1x64xf32> to vector<58x64xf32>
    %400 = arith.mulf %398, %399 : vector<58x64xf32>
    %401 = arith.addf %395, %400 : vector<58x64xf32>
    %402 = vector.extract_strided_slice %390 {offsets = [2, 0], sizes = [58, 1], strides = [1, 1]} : vector<64x1xf32> to vector<58x1xf32>
    %403 = vector.extract_strided_slice %2 {offsets = [2, 0], sizes = [1, 64], strides = [1, 1]} : vector<7x64xf32> to vector<1x64xf32>
    %404 = vector.broadcast %402 : vector<58x1xf32> to vector<58x64xf32>
    %405 = vector.broadcast %403 : vector<1x64xf32> to vector<58x64xf32>
    %406 = arith.mulf %404, %405 : vector<58x64xf32>
    %407 = arith.addf %401, %406 : vector<58x64xf32>
    %408 = vector.extract_strided_slice %390 {offsets = [3, 0], sizes = [58, 1], strides = [1, 1]} : vector<64x1xf32> to vector<58x1xf32>
    %409 = vector.extract_strided_slice %2 {offsets = [3, 0], sizes = [1, 64], strides = [1, 1]} : vector<7x64xf32> to vector<1x64xf32>
    %410 = vector.broadcast %408 : vector<58x1xf32> to vector<58x64xf32>
    %411 = vector.broadcast %409 : vector<1x64xf32> to vector<58x64xf32>
    %412 = arith.mulf %410, %411 : vector<58x64xf32>
    %413 = arith.addf %407, %412 : vector<58x64xf32>
    %414 = vector.extract_strided_slice %390 {offsets = [4, 0], sizes = [58, 1], strides = [1, 1]} : vector<64x1xf32> to vector<58x1xf32>
    %415 = vector.extract_strided_slice %2 {offsets = [4, 0], sizes = [1, 64], strides = [1, 1]} : vector<7x64xf32> to vector<1x64xf32>
    %416 = vector.broadcast %414 : vector<58x1xf32> to vector<58x64xf32>
    %417 = vector.broadcast %415 : vector<1x64xf32> to vector<58x64xf32>
    %418 = arith.mulf %416, %417 : vector<58x64xf32>
    %419 = arith.addf %413, %418 : vector<58x64xf32>
    %420 = vector.extract_strided_slice %390 {offsets = [5, 0], sizes = [58, 1], strides = [1, 1]} : vector<64x1xf32> to vector<58x1xf32>
    %421 = vector.extract_strided_slice %2 {offsets = [5, 0], sizes = [1, 64], strides = [1, 1]} : vector<7x64xf32> to vector<1x64xf32>
    %422 = vector.broadcast %420 : vector<58x1xf32> to vector<58x64xf32>
    %423 = vector.broadcast %421 : vector<1x64xf32> to vector<58x64xf32>
    %424 = arith.mulf %422, %423 : vector<58x64xf32>
    %425 = arith.addf %419, %424 : vector<58x64xf32>
    %426 = vector.extract_strided_slice %390 {offsets = [6, 0], sizes = [58, 1], strides = [1, 1]} : vector<64x1xf32> to vector<58x1xf32>
    %427 = vector.extract_strided_slice %2 {offsets = [6, 0], sizes = [1, 64], strides = [1, 1]} : vector<7x64xf32> to vector<1x64xf32>
    %428 = vector.broadcast %426 : vector<58x1xf32> to vector<58x64xf32>
    %429 = vector.broadcast %427 : vector<1x64xf32> to vector<58x64xf32>
    %430 = arith.mulf %428, %429 : vector<58x64xf32>
    %431 = arith.addf %425, %430 : vector<58x64xf32>
    %432 = vector.broadcast %3 : vector<1x64xf32> to vector<58x64xf32>
    %433 = arith.addf %431, %432 : vector<58x64xf32>
    %cst_38 = arith.constant 0.000000e+00 : f32
    %434 = vector.broadcast %cst_38 : f32 to vector<58x64xf32>
    %435 = arith.maximumf %433, %434 : vector<58x64xf32>
    %436 = vector.extract_strided_slice %435 {offsets = [0, 0], sizes = [52, 64], strides = [1, 1]} : vector<58x64xf32> to vector<52x64xf32>
    %437 = vector.extract_strided_slice %435 {offsets = [1, 0], sizes = [52, 64], strides = [1, 1]} : vector<58x64xf32> to vector<52x64xf32>
    %438 = vector.extract_strided_slice %435 {offsets = [2, 0], sizes = [52, 64], strides = [1, 1]} : vector<58x64xf32> to vector<52x64xf32>
    %439 = vector.extract_strided_slice %435 {offsets = [3, 0], sizes = [52, 64], strides = [1, 1]} : vector<58x64xf32> to vector<52x64xf32>
    %440 = vector.extract_strided_slice %435 {offsets = [4, 0], sizes = [52, 64], strides = [1, 1]} : vector<58x64xf32> to vector<52x64xf32>
    %441 = vector.extract_strided_slice %435 {offsets = [5, 0], sizes = [52, 64], strides = [1, 1]} : vector<58x64xf32> to vector<52x64xf32>
    %442 = vector.extract_strided_slice %435 {offsets = [6, 0], sizes = [52, 64], strides = [1, 1]} : vector<58x64xf32> to vector<52x64xf32>
    %443 = tpu.concatenate %436, %437, %438, %439, %440, %441, %442 in 1 : vector<52x64xf32>, vector<52x64xf32>, vector<52x64xf32>, vector<52x64xf32>, vector<52x64xf32>, vector<52x64xf32>, vector<52x64xf32> -> vector<52x448xf32>
    %444 = arith.truncf %443 : vector<52x448xf32> to vector<52x448xbf16>
    %cst_39 = arith.constant dense<0.000000e+00> : vector<52x64xf32>
    %445 = tpu.matmul %444, %4, %cst_39 {dimension_numbers = #tpu.dot_dimension_numbers<[1], [0], [0], [1], [0, 0, 1, 1], [], []>} : vector<52x448xbf16>, vector<448x64xbf16>, vector<52x64xf32> -> vector<52x64xf32>
    %446 = vector.broadcast %5 : vector<1x64xf32> to vector<52x64xf32>
    %447 = arith.addf %445, %446 : vector<52x64xf32>
    %cst_40 = arith.constant 0.000000e+00 : f32
    %448 = vector.broadcast %cst_40 : f32 to vector<52x64xf32>
    %449 = arith.maximumf %447, %448 : vector<52x64xf32>
    %cst_41 = arith.constant dense<0.000000e+00> : vector<64xf32>
    %450 = vector.multi_reduction <add>, %449, %cst_41 [0] : vector<52x64xf32> to vector<64xf32>
    %451 = vector.shape_cast %450 : vector<64xf32> to vector<1x64xf32>
    %cst_42 = arith.constant 5.200000e+01 : f32
    %452 = vector.broadcast %cst_42 : f32 to vector<1x64xf32>
    %453 = arith.divf %451, %452 : vector<1x64xf32>
    %454 = vector.extract_strided_slice %1 {offsets = [0, 7], sizes = [64, 1], strides = [1, 1]} : vector<64x8xf32> to vector<64x1xf32>
    %455 = vector.extract_strided_slice %454 {offsets = [0, 0], sizes = [58, 1], strides = [1, 1]} : vector<64x1xf32> to vector<58x1xf32>
    %456 = vector.extract_strided_slice %2 {offsets = [0, 0], sizes = [1, 64], strides = [1, 1]} : vector<7x64xf32> to vector<1x64xf32>
    %457 = vector.broadcast %455 : vector<58x1xf32> to vector<58x64xf32>
    %458 = vector.broadcast %456 : vector<1x64xf32> to vector<58x64xf32>
    %459 = arith.mulf %457, %458 : vector<58x64xf32>
    %460 = vector.extract_strided_slice %454 {offsets = [1, 0], sizes = [58, 1], strides = [1, 1]} : vector<64x1xf32> to vector<58x1xf32>
    %461 = vector.extract_strided_slice %2 {offsets = [1, 0], sizes = [1, 64], strides = [1, 1]} : vector<7x64xf32> to vector<1x64xf32>
    %462 = vector.broadcast %460 : vector<58x1xf32> to vector<58x64xf32>
    %463 = vector.broadcast %461 : vector<1x64xf32> to vector<58x64xf32>
    %464 = arith.mulf %462, %463 : vector<58x64xf32>
    %465 = arith.addf %459, %464 : vector<58x64xf32>
    %466 = vector.extract_strided_slice %454 {offsets = [2, 0], sizes = [58, 1], strides = [1, 1]} : vector<64x1xf32> to vector<58x1xf32>
    %467 = vector.extract_strided_slice %2 {offsets = [2, 0], sizes = [1, 64], strides = [1, 1]} : vector<7x64xf32> to vector<1x64xf32>
    %468 = vector.broadcast %466 : vector<58x1xf32> to vector<58x64xf32>
    %469 = vector.broadcast %467 : vector<1x64xf32> to vector<58x64xf32>
    %470 = arith.mulf %468, %469 : vector<58x64xf32>
    %471 = arith.addf %465, %470 : vector<58x64xf32>
    %472 = vector.extract_strided_slice %454 {offsets = [3, 0], sizes = [58, 1], strides = [1, 1]} : vector<64x1xf32> to vector<58x1xf32>
    %473 = vector.extract_strided_slice %2 {offsets = [3, 0], sizes = [1, 64], strides = [1, 1]} : vector<7x64xf32> to vector<1x64xf32>
    %474 = vector.broadcast %472 : vector<58x1xf32> to vector<58x64xf32>
    %475 = vector.broadcast %473 : vector<1x64xf32> to vector<58x64xf32>
    %476 = arith.mulf %474, %475 : vector<58x64xf32>
    %477 = arith.addf %471, %476 : vector<58x64xf32>
    %478 = vector.extract_strided_slice %454 {offsets = [4, 0], sizes = [58, 1], strides = [1, 1]} : vector<64x1xf32> to vector<58x1xf32>
    %479 = vector.extract_strided_slice %2 {offsets = [4, 0], sizes = [1, 64], strides = [1, 1]} : vector<7x64xf32> to vector<1x64xf32>
    %480 = vector.broadcast %478 : vector<58x1xf32> to vector<58x64xf32>
    %481 = vector.broadcast %479 : vector<1x64xf32> to vector<58x64xf32>
    %482 = arith.mulf %480, %481 : vector<58x64xf32>
    %483 = arith.addf %477, %482 : vector<58x64xf32>
    %484 = vector.extract_strided_slice %454 {offsets = [5, 0], sizes = [58, 1], strides = [1, 1]} : vector<64x1xf32> to vector<58x1xf32>
    %485 = vector.extract_strided_slice %2 {offsets = [5, 0], sizes = [1, 64], strides = [1, 1]} : vector<7x64xf32> to vector<1x64xf32>
    %486 = vector.broadcast %484 : vector<58x1xf32> to vector<58x64xf32>
    %487 = vector.broadcast %485 : vector<1x64xf32> to vector<58x64xf32>
    %488 = arith.mulf %486, %487 : vector<58x64xf32>
    %489 = arith.addf %483, %488 : vector<58x64xf32>
    %490 = vector.extract_strided_slice %454 {offsets = [6, 0], sizes = [58, 1], strides = [1, 1]} : vector<64x1xf32> to vector<58x1xf32>
    %491 = vector.extract_strided_slice %2 {offsets = [6, 0], sizes = [1, 64], strides = [1, 1]} : vector<7x64xf32> to vector<1x64xf32>
    %492 = vector.broadcast %490 : vector<58x1xf32> to vector<58x64xf32>
    %493 = vector.broadcast %491 : vector<1x64xf32> to vector<58x64xf32>
    %494 = arith.mulf %492, %493 : vector<58x64xf32>
    %495 = arith.addf %489, %494 : vector<58x64xf32>
    %496 = vector.broadcast %3 : vector<1x64xf32> to vector<58x64xf32>
    %497 = arith.addf %495, %496 : vector<58x64xf32>
    %cst_43 = arith.constant 0.000000e+00 : f32
    %498 = vector.broadcast %cst_43 : f32 to vector<58x64xf32>
    %499 = arith.maximumf %497, %498 : vector<58x64xf32>
    %500 = vector.extract_strided_slice %499 {offsets = [0, 0], sizes = [52, 64], strides = [1, 1]} : vector<58x64xf32> to vector<52x64xf32>
    %501 = vector.extract_strided_slice %499 {offsets = [1, 0], sizes = [52, 64], strides = [1, 1]} : vector<58x64xf32> to vector<52x64xf32>
    %502 = vector.extract_strided_slice %499 {offsets = [2, 0], sizes = [52, 64], strides = [1, 1]} : vector<58x64xf32> to vector<52x64xf32>
    %503 = vector.extract_strided_slice %499 {offsets = [3, 0], sizes = [52, 64], strides = [1, 1]} : vector<58x64xf32> to vector<52x64xf32>
    %504 = vector.extract_strided_slice %499 {offsets = [4, 0], sizes = [52, 64], strides = [1, 1]} : vector<58x64xf32> to vector<52x64xf32>
    %505 = vector.extract_strided_slice %499 {offsets = [5, 0], sizes = [52, 64], strides = [1, 1]} : vector<58x64xf32> to vector<52x64xf32>
    %506 = vector.extract_strided_slice %499 {offsets = [6, 0], sizes = [52, 64], strides = [1, 1]} : vector<58x64xf32> to vector<52x64xf32>
    %507 = tpu.concatenate %500, %501, %502, %503, %504, %505, %506 in 1 : vector<52x64xf32>, vector<52x64xf32>, vector<52x64xf32>, vector<52x64xf32>, vector<52x64xf32>, vector<52x64xf32>, vector<52x64xf32> -> vector<52x448xf32>
    %508 = arith.truncf %507 : vector<52x448xf32> to vector<52x448xbf16>
    %cst_44 = arith.constant dense<0.000000e+00> : vector<52x64xf32>
    %509 = tpu.matmul %508, %4, %cst_44 {dimension_numbers = #tpu.dot_dimension_numbers<[1], [0], [0], [1], [0, 0, 1, 1], [], []>} : vector<52x448xbf16>, vector<448x64xbf16>, vector<52x64xf32> -> vector<52x64xf32>
    %510 = vector.broadcast %5 : vector<1x64xf32> to vector<52x64xf32>
    %511 = arith.addf %509, %510 : vector<52x64xf32>
    %cst_45 = arith.constant 0.000000e+00 : f32
    %512 = vector.broadcast %cst_45 : f32 to vector<52x64xf32>
    %513 = arith.maximumf %511, %512 : vector<52x64xf32>
    %cst_46 = arith.constant dense<0.000000e+00> : vector<64xf32>
    %514 = vector.multi_reduction <add>, %513, %cst_46 [0] : vector<52x64xf32> to vector<64xf32>
    %515 = vector.shape_cast %514 : vector<64xf32> to vector<1x64xf32>
    %cst_47 = arith.constant 5.200000e+01 : f32
    %516 = vector.broadcast %cst_47 : f32 to vector<1x64xf32>
    %517 = arith.divf %515, %516 : vector<1x64xf32>
    %518 = tpu.concatenate %69, %133, %197, %261, %325, %389, %453, %517 in 0 : vector<1x64xf32>, vector<1x64xf32>, vector<1x64xf32>, vector<1x64xf32>, vector<1x64xf32>, vector<1x64xf32>, vector<1x64xf32>, vector<1x64xf32> -> vector<8x64xf32>
    %c0_48 = arith.constant 0 : index
    %c0_49 = arith.constant 0 : index
    %519 = vector.load %arg6[%c0_48, %c0_49] : memref<64x3xf32, #tpu.memory_space<vmem>>, vector<64x3xf32>
    %cst_50 = arith.constant dense<0.000000e+00> : vector<8x3xf32>
    %520 = tpu.matmul %518, %519, %cst_50 {dimension_numbers = #tpu.dot_dimension_numbers<[1], [0], [0], [1], [0, 0, 1, 1], [], []>} : vector<8x64xf32>, vector<64x3xf32>, vector<8x3xf32> -> vector<8x3xf32>
    %c0_51 = arith.constant 0 : index
    %c0_52 = arith.constant 0 : index
    %521 = vector.load %arg7[%c0_51, %c0_52] : memref<1x3xf32, #tpu.memory_space<vmem>>, vector<1x3xf32>
    %522 = vector.broadcast %521 : vector<1x3xf32> to vector<8x3xf32>
    %523 = arith.addf %520, %522 : vector<8x3xf32>
    %c0_53 = arith.constant 0 : index
    %c0_54 = arith.constant 0 : index
    %524 = vector.load %arg8[%c0_53, %c0_54] : memref<8x3xf32, #tpu.memory_space<vmem>>, vector<8x3xf32>
    tpu.vector_store %arg8[%c0_53, %c0_54], %523 {strides = array<i32>} : memref<8x3xf32, #tpu.memory_space<vmem>>, vector<8x3xf32>,
    return
  }
  func.func @transform_0(%arg0: i32) -> (i32, i32) {
    %c0_i32 = arith.constant 0 : i32
    %c0_i32_0 = arith.constant 0 : i32
    return %arg0, %c0_i32 : i32, i32
  }
  func.func @transform_1(%arg0: i32) -> (i32, i32) {
    %c0_i32 = arith.constant 0 : i32
    %c0_i32_0 = arith.constant 0 : i32
    %c0_i32_1 = arith.constant 0 : i32
    return %c0_i32, %c0_i32_0 : i32, i32
  }
  func.func @transform_2(%arg0: i32) -> (i32, i32) {
    %c0_i32 = arith.constant 0 : i32
    %c0_i32_0 = arith.constant 0 : i32
    %c0_i32_1 = arith.constant 0 : i32
    return %c0_i32, %c0_i32_0 : i32, i32
  }
  func.func @transform_3(%arg0: i32) -> (i32, i32) {
    %c0_i32 = arith.constant 0 : i32
    %c0_i32_0 = arith.constant 0 : i32
    %c0_i32_1 = arith.constant 0 : i32
    return %c0_i32, %c0_i32_0 : i32, i32
  }
  func.func @transform_4(%arg0: i32) -> (i32, i32) {
    %c0_i32 = arith.constant 0 : i32
    %c0_i32_0 = arith.constant 0 : i32
    %c0_i32_1 = arith.constant 0 : i32
    return %c0_i32, %c0_i32_0 : i32, i32
  }
  func.func @transform_5(%arg0: i32) -> (i32, i32) {
    %c0_i32 = arith.constant 0 : i32
    %c0_i32_0 = arith.constant 0 : i32
    %c0_i32_1 = arith.constant 0 : i32
    return %c0_i32, %c0_i32_0 : i32, i32
  }
  func.func @transform_6(%arg0: i32) -> (i32, i32) {
    %c0_i32 = arith.constant 0 : i32
    %c0_i32_0 = arith.constant 0 : i32
    %c0_i32_1 = arith.constant 0 : i32
    return %c0_i32, %c0_i32_0 : i32, i32
  }
  func.func @transform_7(%arg0: i32) -> (i32, i32) {
    %c0_i32 = arith.constant 0 : i32
    %c0_i32_0 = arith.constant 0 : i32
    return %arg0, %c0_i32 : i32, i32
  }
}

</mosaic_0001>

<llo_original>
// kernel: tpu_custom_call.1
$region0: #{tpu_custom_call.1}
  #allocation0 [shape = 'u32[]', space=smem, size = 0x4, offset = 0x4, fixed_abs, tag = 'smem constant byte address 0x4 - core index']
  #allocation1 [shape = 'u32[144,128]{1,0:T(1,128)}', space=vmem, size = 0x12000, scoped, tag = 'internal scratch']
  %s0 = inlined_call_operand.vmem [shape: f32[16,64], index: 0, kind: input, shape index: {}]
  %s1 = inlined_call_operand.vmem [shape: f32[7,64], index: 1, kind: input, shape index: {}]
  %s2 = inlined_call_operand.vmem [shape: f32[1,64], index: 2, kind: input, shape index: {}]
  %s3 = inlined_call_operand.vmem [shape: bf16[448,64], index: 3, kind: input, shape index: {}]
  %s4 = inlined_call_operand.vmem [shape: f32[1,64], index: 4, kind: input, shape index: {}]
  %s5 = inlined_call_operand.vmem [shape: f32[64,3], index: 5, kind: input, shape index: {}]
  %s6 = inlined_call_operand.vmem [shape: f32[1,3], index: 6, kind: input, shape index: {}]
  %s7 = inlined_call_operand.vmem [shape: f32[16,3], index: 7, kind: output, shape index: {}]
  %s8 = sld [smem:[#allocation0]]
  $region61: #{tpu_custom_call.1} parent=0
    _
  %s10 = ssub.s32 1, %s8
  %s11 = scalar_select 0, %s10, %s8
  loop: start=0, step=1, limit=4
  $region2: #{tpu_custom_call.1} parent=0 // loop_pre_header
    _
  $region3: #{tpu_custom_call.1} parent=0 // loop_header
    %s13 = sphi 0, %s17
    %p14 = scmp.ge.s32.totalorder %s13, 4
    %s23 = sphi 0, %s25
    %s26 = sphi 0, %s23
    %s27 = sphi 0, %s26
    %s43 = sphi 0, %s27
    %s47 = sphi 0, %s47
    %s49 = sphi 0, %s47
    %s50 = sphi 0, %s49
    %s64 = sphi 0, %s50
    %s68 = sphi 0, %s68
    %s70 = sphi 0, %s68
    %s71 = sphi 0, %s70
    %s85 = sphi 0, %s71
    %s89 = sphi 0, %s89
    %s91 = sphi 0, %s89
    %s92 = sphi 0, %s91
    %s106 = sphi 0, %s92
    %s110 = sphi 0, %s110
    %s112 = sphi 0, %s110
    %s113 = sphi 0, %s112
    %s127 = sphi 0, %s113
    %s131 = sphi 0, %s131
    %s133 = sphi 0, %s131
    %s134 = sphi 0, %s133
    %s148 = sphi 0, %s134
    %s152 = sphi 0, %s152
    %s154 = sphi 0, %s152
    %s155 = sphi 0, %s154
    %s169 = sphi 0, %s155
    %s175 = sphi 0, %s177
    %s178 = sphi 0, %s175
    %s179 = sphi 0, %s178
    %s195 = sphi 0, %s179
  $region4: #{tpu_custom_call.1} parent=0 // loop_header_branch
    %16 = sbr.rel (%p14) target = $region8
  $region5: #{tpu_custom_call.1} parent=0 // loop_body
    %s18 = ssub.s32 %s13, 1
    %s19 = ssub.s32 %s13, 2
    %s20 = sadd.s32 %s13, 1
    %s21 = ssub.s32 %s13, %s20
    %p22 = scmp.eq.s32.totalorder %s21, 0
    %s24 = sadd.s32 %s23, 1
    %s25 = scalar_select %p22, %s23, %s24
    %p28 = pneg %p22
    %p29 = scmp.eq.s32.totalorder %s13, 1
    %p30 = por %p28, %p29
    %p31 = scmp.ne.s32.totalorder %s23, %s26
    %p32 = scmp.eq.s32.totalorder %s13, 0
    %p33 = por %p31, %p32
    %p34 = scmp.ne.s32.totalorder %s23, %s26
    %p35 = scmp.eq.s32.totalorder %s18, 1
    %p36 = por %p34, %p35
    %p37 = scmp.ne.s32.totalorder %s26, %s27
    %p38 = scmp.eq.s32.totalorder %s18, 0
    %p39 = por %p37, %p38
    %p40 = scmp.ne.s32.totalorder %s26, %s27
    %p41 = scmp.eq.s32.totalorder %s19, 1
    %p42 = por %p40, %p41
    %p44 = scmp.ne.s32.totalorder %s27, %s43
    %p45 = scmp.eq.s32.totalorder %s19, 0
    %p46 = por %p44, %p45
    %s48 = sadd.s32 %s47, 1
    %p51 = scmp.eq.s32.totalorder %s13, 1
    %p52 = scmp.ne.s32.totalorder %s47, %s49
    %p53 = scmp.eq.s32.totalorder %s13, 0
    %p54 = por %p52, %p53
    %p55 = scmp.ne.s32.totalorder %s47, %s49
    %p56 = scmp.eq.s32.totalorder %s18, 1
    %p57 = por %p55, %p56
    %p58 = scmp.ne.s32.totalorder %s49, %s50
    %p59 = scmp.eq.s32.totalorder %s18, 0
    %p60 = por %p58, %p59
    %p61 = scmp.ne.s32.totalorder %s49, %s50
    %p62 = scmp.eq.s32.totalorder %s19, 1
    %p63 = por %p61, %p62
    %p65 = scmp.ne.s32.totalorder %s50, %s64
    %p66 = scmp.eq.s32.totalorder %s19, 0
    %p67 = por %p65, %p66
    %s69 = sadd.s32 %s68, 1
    %p72 = scmp.eq.s32.totalorder %s13, 1
    %p73 = scmp.ne.s32.totalorder %s68, %s70
    %p74 = scmp.eq.s32.totalorder %s13, 0
    %p75 = por %p73, %p74
    %p76 = scmp.ne.s32.totalorder %s68, %s70
    %p77 = scmp.eq.s32.totalorder %s18, 1
    %p78 = por %p76, %p77
    %p79 = scmp.ne.s32.totalorder %s70, %s71
    %p80 = scmp.eq.s32.totalorder %s18, 0
    %p81 = por %p79, %p80
    %p82 = scmp.ne.s32.totalorder %s70, %s71
    %p83 = scmp.eq.s32.totalorder %s19, 1
    %p84 = por %p82, %p83
    %p86 = scmp.ne.s32.totalorder %s71, %s85
    %p87 = scmp.eq.s32.totalorder %s19, 0
    %p88 = por %p86, %p87
    %s90 = sadd.s32 %s89, 1
    %p93 = scmp.eq.s32.totalorder %s13, 1
    %p94 = scmp.ne.s32.totalorder %s89, %s91
    %p95 = scmp.eq.s32.totalorder %s13, 0
    %p96 = por %p94, %p95
    %p97 = scmp.ne.s32.totalorder %s89, %s91
    %p98 = scmp.eq.s32.totalorder %s18, 1
    %p99 = por %p97, %p98
    %p100 = scmp.ne.s32.totalorder %s91, %s92
    %p101 = scmp.eq.s32.totalorder %s18, 0
    %p102 = por %p100, %p101
    %p103 = scmp.ne.s32.totalorder %s91, %s92
    %p104 = scmp.eq.s32.totalorder %s19, 1
    %p105 = por %p103, %p104
    %p107 = scmp.ne.s32.totalorder %s92, %s106
    %p108 = scmp.eq.s32.totalorder %s19, 0
    %p109 = por %p107, %p108
    %s111 = sadd.s32 %s110, 1
    %p114 = scmp.eq.s32.totalorder %s13, 1
    %p115 = scmp.ne.s32.totalorder %s110, %s112
    %p116 = scmp.eq.s32.totalorder %s13, 0
    %p117 = por %p115, %p116
    %p118 = scmp.ne.s32.totalorder %s110, %s112
    %p119 = scmp.eq.s32.totalorder %s18, 1
    %p120 = por %p118, %p119
    %p121 = scmp.ne.s32.totalorder %s112, %s113
    %p122 = scmp.eq.s32.totalorder %s18, 0
    %p123 = por %p121, %p122
    %p124 = scmp.ne.s32.totalorder %s112, %s113
    %p125 = scmp.eq.s32.totalorder %s19, 1
    %p126 = por %p124, %p125
    %p128 = scmp.ne.s32.totalorder %s113, %s127
    %p129 = scmp.eq.s32.totalorder %s19, 0
    %p130 = por %p128, %p129
    %s132 = sadd.s32 %s131, 1
    %p135 = scmp.eq.s32.totalorder %s13, 1
    %p136 = scmp.ne.s32.totalorder %s131, %s133
    %p137 = scmp.eq.s32.totalorder %s13, 0
    %p138 = por %p136, %p137
    %p139 = scmp.ne.s32.totalorder %s131, %s133
    %p140 = scmp.eq.s32.totalorder %s18, 1
    %p141 = por %p139, %p140
    %p142 = scmp.ne.s32.totalorder %s133, %s134
    %p143 = scmp.eq.s32.totalorder %s18, 0
    %p144 = por %p142, %p143
    %p145 = scmp.ne.s32.totalorder %s133, %s134
    %p146 = scmp.eq.s32.totalorder %s19, 1
    %p147 = por %p145, %p146
    %p149 = scmp.ne.s32.totalorder %s134, %s148
    %p150 = scmp.eq.s32.totalorder %s19, 0
    %p151 = por %p149, %p150
    %s153 = sadd.s32 %s152, 1
    %p156 = scmp.eq.s32.totalorder %s13, 1
    %p157 = scmp.ne.s32.totalorder %s152, %s154
    %p158 = scmp.eq.s32.totalorder %s13, 0
    %p159 = por %p157, %p158
    %p160 = scmp.ne.s32.totalorder %s152, %s154
    %p161 = scmp.eq.s32.totalorder %s18, 1
    %p162 = por %p160, %p161
    %p163 = scmp.ne.s32.totalorder %s154, %s155
    %p164 = scmp.eq.s32.totalorder %s18, 0
    %p165 = por %p163, %p164
    %p166 = scmp.ne.s32.totalorder %s154, %s155
    %p167 = scmp.eq.s32.totalorder %s19, 1
    %p168 = por %p166, %p167
    %p170 = scmp.ne.s32.totalorder %s155, %s169
    %p171 = scmp.eq.s32.totalorder %s19, 0
    %p172 = por %p170, %p171
    %s173 = ssub.s32 %s13, %s20
    %p174 = scmp.eq.s32.totalorder %s173, 0
    %s176 = sadd.s32 %s175, 1
    %s177 = scalar_select %p174, %s175, %s176
    %p180 = pneg %p174
    %p181 = scmp.eq.s32.totalorder %s13, 1
    %p182 = por %p180, %p181
    %p183 = scmp.ne.s32.totalorder %s175, %s178
    %p184 = scmp.eq.s32.totalorder %s13, 0
    %p185 = por %p183, %p184
    %p186 = scmp.ne.s32.totalorder %s175, %s178
    %p187 = scmp.eq.s32.totalorder %s18, 1
    %p188 = por %p186, %p187
    %p189 = scmp.ne.s32.totalorder %s178, %s179
    %p190 = scmp.eq.s32.totalorder %s18, 0
    %p191 = por %p189, %p190
    %p192 = scmp.ne.s32.totalorder %s178, %s179
    %p193 = scmp.eq.s32.totalorder %s19, 1
    %p194 = por %p192, %p193
    %p196 = scmp.ne.s32.totalorder %s179, %s195
    %p197 = scmp.eq.s32.totalorder %s19, 0
    %p198 = por %p196, %p197
    %p199 = scmp.le.s32.totalorder 1, %s13
    %p200 = scmp.lt.s32.totalorder %s13, 3
    %p201 = pnand %p199, %p200
    %p202 = pneg %p201
    // Predicated region
    $region9: #{tpu_custom_call.1} parent=5 // pred_check
      _
    $region10: #{tpu_custom_call.1} parent=5 // pred_check_branch
      %204 = sbr.rel (%p201) target = $region12
    $region11: #{tpu_custom_call.1} parent=5 // pred_region
      %s205 = ssub.s32 %s13, 1
      // Predicated region
      $region13: #{tpu_custom_call.1} parent=11 // pred_check
        %p206 = pneg %p60
      $region14: #{tpu_custom_call.1} parent=11 // pred_check_branch
        %208 = sbr.rel (%p206) target = $region16
      $region15: #{tpu_custom_call.1} parent=11 // pred_region
        _
      $region16: #{tpu_custom_call.1} parent=11 // pred_fallthru
        _
      // Predicated region
      $region17: #{tpu_custom_call.1} parent=11 // pred_check
        %p209 = pneg %p81
      $region18: #{tpu_custom_call.1} parent=11 // pred_check_branch
        %211 = sbr.rel (%p209) target = $region20
      $region19: #{tpu_custom_call.1} parent=11 // pred_region
        _
      $region20: #{tpu_custom_call.1} parent=11 // pred_fallthru
        _
      // Predicated region
      $region21: #{tpu_custom_call.1} parent=11 // pred_check
        %p212 = pneg %p102
      $region22: #{tpu_custom_call.1} parent=11 // pred_check_branch
        %214 = sbr.rel (%p212) target = $region24
      $region23: #{tpu_custom_call.1} parent=11 // pred_region
        _
      $region24: #{tpu_custom_call.1} parent=11 // pred_fallthru
        _
      // Predicated region
      $region25: #{tpu_custom_call.1} parent=11 // pred_check
        %p215 = pneg %p123
      $region26: #{tpu_custom_call.1} parent=11 // pred_check_branch
        %217 = sbr.rel (%p215) target = $region28
      $region27: #{tpu_custom_call.1} parent=11 // pred_region
        _
      $region28: #{tpu_custom_call.1} parent=11 // pred_fallthru
        _
      // Predicated region
      $region29: #{tpu_custom_call.1} parent=11 // pred_check
        %p218 = pneg %p144
      $region30: #{tpu_custom_call.1} parent=11 // pred_check_branch
        %220 = sbr.rel (%p218) target = $region32
      $region31: #{tpu_custom_call.1} parent=11 // pred_region
        _
      $region32: #{tpu_custom_call.1} parent=11 // pred_fallthru
        _
      // Predicated region
      $region33: #{tpu_custom_call.1} parent=11 // pred_check
        %p221 = pneg %p165
      $region34: #{tpu_custom_call.1} parent=11 // pred_check_branch
        %223 = sbr.rel (%p221) target = $region36
      $region35: #{tpu_custom_call.1} parent=11 // pred_region
        _
      $region36: #{tpu_custom_call.1} parent=11 // pred_fallthru
        _
    $region12: #{tpu_custom_call.1} parent=5 // pred_fallthru
      _
    %p224 = scmp.lt.s32.totalorder %s13, 2
    // Predicated region
    $region37: #{tpu_custom_call.1} parent=5 // pred_check
      %p225 = pneg %p224
    $region38: #{tpu_custom_call.1} parent=5 // pred_check_branch
      %227 = sbr.rel (%p225) target = $region40
    $region39: #{tpu_custom_call.1} parent=5 // pred_region
      // Predicated region
      $region41: #{tpu_custom_call.1} parent=39 // pred_check
        %p228 = pneg %p33
      $region42: #{tpu_custom_call.1} parent=39 // pred_check_branch
        %230 = sbr.rel (%p228) target = $region44
      $region43: #{tpu_custom_call.1} parent=39 // pred_region
        %p231 = scmp.lt.s32.totalorder %s13, 1
        %s232 = scalar_select %p231, %s13, 1
        %s233 = smul.addr %s232, 8
        %s234 = scalar_lea.vmem %s0, %s233
      $region44: #{tpu_custom_call.1} parent=39 // pred_fallthru
        _
    $region40: #{tpu_custom_call.1} parent=5 // pred_fallthru
      _
    %p235 = scmp.le.s32.totalorder 1, %s13
    %p236 = scmp.lt.s32.totalorder %s13, 3
    %p237 = pnand %p235, %p236
    %p238 = pneg %p237
    // Predicated region
    $region45: #{tpu_custom_call.1} parent=5 // pred_check
      _
    $region46: #{tpu_custom_call.1} parent=5 // pred_check_branch
      %240 = sbr.rel (%p237) target = $region48
    $region47: #{tpu_custom_call.1} parent=5 // pred_region
      %s241 = ssub.s32 %s13, 1
      %p242 = scmp.lt.s32.totalorder %s18, 1
      %s243 = scalar_select %p242, %s18, 1
      %s244 = smul.addr %s243, 8
      %s245 = scalar_lea.vmem %s0, %s244
      %p246 = pneg %p39
      %p247 = pneg %p36
      %p248 = pneg %p60
      %p249 = pneg %p57
      %p250 = pneg %p81
      %p251 = pneg %p78
      %p252 = pneg %p102
      %p253 = pneg %p99
      %p254 = pneg %p123
      %p255 = pneg %p120
      %p256 = pneg %p144
      %p257 = pneg %p141
      %p258 = pneg %p165
      %p259 = pneg %p162
      %p260 = pneg %p191
      %p261 = pneg %p188
      %p262 = scmp.lt.s32.totalorder %s18, 1
      %s263 = scalar_select %p262, %s18, 1
      %s264 = smul.addr %s263, 8
      %s265 = scalar_lea.vmem %s7, %s264
      %p266 = scmp.lt.s32.totalorder %s18, 1
      %s267 = scalar_select %p266, %s18, 1
      %s268 = smul.addr %s267, 8
      %s269 = scalar_lea.vmem %s0, %s268
      %p270 = scmp.lt.s32.totalorder %s18, 1
      %s271 = scalar_select %p270, %s18, 1
      %s272 = smul.addr %s271, 8
      %s273 = scalar_lea.vmem %s7, %s272
      %v275 = vld [vmem:[%s269] sm:$0xff]
      %276 = vxpose.xlu0.b32.start [1/16] %v275, 128
      %277 = vxpose.xlu0.b32.cont [2/16] 0.0, 128
      %278 = vxpose.xlu0.b32.cont [3/16] 0.0, 128
      %279 = vxpose.xlu0.b32.cont [4/16] 0.0, 128
      %280 = vxpose.xlu0.b32.cont [5/16] 0.0, 128
      %281 = vxpose.xlu0.b32.cont [6/16] 0.0, 128
      %282 = vxpose.xlu0.b32.cont [7/16] 0.0, 128
      %283 = vxpose.xlu0.b32.cont [8/16] 0.0, 128
      %284 = vxpose.xlu0.b32.cont [9/16] 0.0, 128
      %285 = vxpose.xlu0.b32.cont [10/16] 0.0, 128
      %286 = vxpose.xlu0.b32.cont [11/16] 0.0, 128
      %287 = vxpose.xlu0.b32.cont [12/16] 0.0, 128
      %288 = vxpose.xlu0.b32.cont [13/16] 0.0, 128
      %289 = vxpose.xlu0.b32.cont [14/16] 0.0, 128
      %290 = vxpose.xlu0.b32.cont [15/16] 0.0, 128
      %291 = vxpose.xlu0.b32.end [16/16] 0.0, 128
      %v292 = vpop.trf.xlu0
      %v293 = vpop.trf.xlu0
      %v294 = vpop.trf.xlu0
      %v295 = vpop.trf.xlu0
      %v296 = vpop.trf.xlu0
      %v297 = vpop.trf.xlu0
      %v298 = vpop.trf.xlu0
      %v299 = vpop.trf.xlu0
      %v300 = vpop.trf.xlu0
      %v301 = vpop.trf.xlu0
      %v302 = vpop.trf.xlu0
      %v303 = vpop.trf.xlu0
      %v304 = vpop.trf.xlu0
      %v305 = vpop.trf.xlu0
      %v306 = vpop.trf.xlu0
      %v307 = vpop.trf.xlu0
      %v308 = vld [vmem:[%s1] sm:$0x7f]
      %v309 = vld [vmem:[%s2] sm:$0x1]
      %v310 = vld [vmem:[%s3] sm:$0xf]
      %v311 = vld [vmem:[%s3 + $0x4] sm:$0xf]
      %v312 = vld [vmem:[%s3 + $0x8] sm:$0xf]
      %v313 = vld [vmem:[%s3 + $0xc] sm:$0xf]
      %v314 = vld [vmem:[%s3 + $0x10] sm:$0xf]
      %v315 = vld [vmem:[%s3 + $0x14] sm:$0xf]
      %v316 = vld [vmem:[%s3 + $0x18] sm:$0xf]
      %v317 = vld [vmem:[%s3 + $0x1c] sm:$0xf]
      %v318 = vld [vmem:[%s3 + $0x20] sm:$0xf]
      %v319 = vld [vmem:[%s3 + $0x24] sm:$0xf]
      %v320 = vld [vmem:[%s3 + $0x28] sm:$0xf]
      %v321 = vld [vmem:[%s3 + $0x2c] sm:$0xf]
      %v322 = vld [vmem:[%s3 + $0x30] sm:$0xf]
      %v323 = vld [vmem:[%s3 + $0x34] sm:$0xf]
      %v324 = vld [vmem:[%s3 + $0x38] sm:$0xf]
      %v325 = vld [vmem:[%s3 + $0x3c] sm:$0xf]
      %v326 = vld [vmem:[%s3 + $0x40] sm:$0xf]
      %v327 = vld [vmem:[%s3 + $0x44] sm:$0xf]
      %v328 = vld [vmem:[%s3 + $0x48] sm:$0xf]
      %v329 = vld [vmem:[%s3 + $0x4c] sm:$0xf]
      %v330 = vld [vmem:[%s3 + $0x50] sm:$0xf]
      %v331 = vld [vmem:[%s3 + $0x54] sm:$0xf]
      %v332 = vld [vmem:[%s3 + $0x58] sm:$0xf]
      %v333 = vld [vmem:[%s3 + $0x5c] sm:$0xf]
      %v334 = vld [vmem:[%s3 + $0x60] sm:$0xf]
      %v335 = vld [vmem:[%s3 + $0x64] sm:$0xf]
      %v336 = vld [vmem:[%s3 + $0x68] sm:$0xf]
      %v337 = vld [vmem:[%s3 + $0x6c] sm:$0xf]
      %v338 = vld [vmem:[%s3 + $0x70] sm:$0xf]
      %v339 = vld [vmem:[%s3 + $0x74] sm:$0xf]
      %v340 = vld [vmem:[%s3 + $0x78] sm:$0xf]
      %v341 = vld [vmem:[%s3 + $0x7c] sm:$0xf]
      %v342 = vld [vmem:[%s3 + $0x80] sm:$0xf]
      %v343 = vld [vmem:[%s3 + $0x84] sm:$0xf]
      %v344 = vld [vmem:[%s3 + $0x88] sm:$0xf]
      %v345 = vld [vmem:[%s3 + $0x8c] sm:$0xf]
      %v346 = vld [vmem:[%s3 + $0x90] sm:$0xf]
      %v347 = vld [vmem:[%s3 + $0x94] sm:$0xf]
      %v348 = vld [vmem:[%s3 + $0x98] sm:$0xf]
      %v349 = vld [vmem:[%s3 + $0x9c] sm:$0xf]
      %v350 = vld [vmem:[%s3 + $0xa0] sm:$0xf]
      %v351 = vld [vmem:[%s3 + $0xa4] sm:$0xf]
      %v352 = vld [vmem:[%s3 + $0xa8] sm:$0xf]
      %v353 = vld [vmem:[%s3 + $0xac] sm:$0xf]
      %v354 = vld [vmem:[%s3 + $0xb0] sm:$0xf]
      %v355 = vld [vmem:[%s3 + $0xb4] sm:$0xf]
      %v356 = vld [vmem:[%s3 + $0xb8] sm:$0xf]
      %v357 = vld [vmem:[%s3 + $0xbc] sm:$0xf]
      %v358 = vld [vmem:[%s3 + $0xc0] sm:$0xf]
      %v359 = vld [vmem:[%s3 + $0xc4] sm:$0xf]
      %v360 = vld [vmem:[%s3 + $0xc8] sm:$0xf]
      %v361 = vld [vmem:[%s3 + $0xcc] sm:$0xf]
      %v362 = vld [vmem:[%s3 + $0xd0] sm:$0xf]
      %v363 = vld [vmem:[%s3 + $0xd4] sm:$0xf]
      %v364 = vld [vmem:[%s3 + $0xd8] sm:$0xf]
      %v365 = vld [vmem:[%s3 + $0xdc] sm:$0xf]
      %v366 = vld [vmem:[%s4] sm:$0x1]
      %368 = vset.pattern.permute.xlu0 0
      %369 = vperm.xlu0 %368, %v292
      %v370 = vpop.permute.xlu0 %369
      %373 = vset.pattern.permute.xlu0 0
      %374 = vperm.xlu0 %373, %v293
      %v375 = vpop.permute.xlu0 %374
      %378 = vset.pattern.permute.xlu0 0
      %379 = vperm.xlu0 %378, %v294
      %v380 = vpop.permute.xlu0 %379
      %383 = vset.pattern.permute.xlu0 0
      %384 = vperm.xlu0 %383, %v295
      %v385 = vpop.permute.xlu0 %384
      %388 = vset.pattern.permute.xlu0 0
      %389 = vperm.xlu0 %388, %v296
      %v390 = vpop.permute.xlu0 %389
      %393 = vset.pattern.permute.xlu0 0
      %394 = vperm.xlu0 %393, %v297
      %v395 = vpop.permute.xlu0 %394
      %398 = vset.pattern.permute.xlu0 0
      %399 = vperm.xlu0 %398, %v298
      %v400 = vpop.permute.xlu0 %399
      %403 = vset.pattern.permute.xlu0 0
      %404 = vperm.xlu0 %403, %v299
      %v405 = vpop.permute.xlu0 %404
      %v407 = vlaneseq
      %v408 = vshrl.u32 %v407, 7
      %v409 = vsub.s32 0, %v408
      %v410 = vrot.slane %v308, %v409
      %v411 = vmul.f32 %v370, %v410
      %v412 = vmul.f32 %v375, %v410
      %v413 = vmul.f32 %v380, %v410
      %v414 = vmul.f32 %v385, %v410
      %v415 = vmul.f32 %v390, %v410
      %v416 = vmul.f32 %v395, %v410
      %v417 = vmul.f32 %v400, %v410
      %v418 = vmul.f32 %v405, %v410
      %v419 = vlaneseq
      %v420 = vshrl.u32 %v419, 7
      %v421 = vsub.s32 1, %v420
      %v422 = vrot.slane %v308, %v421
      %v423 = vmul.f32 %v370, %v422
      %v424 = vmul.f32 %v375, %v422
      %v425 = vmul.f32 %v380, %v422
      %v426 = vmul.f32 %v385, %v422
      %v427 = vmul.f32 %v390, %v422
      %v428 = vmul.f32 %v395, %v422
      %v429 = vmul.f32 %v400, %v422
      %v430 = vmul.f32 %v405, %v422
      %vm439 = vcmask 1046528
      %v440 = vrot.slane %v423, 1
      %v441 = vrot.slane %v424, 1
      %v442 = vsel %vm439, %v440, %v441
      %v443 = vrot.slane %v425, 1
      %v444 = vsel %vm439, %v441, %v443
      %v445 = vrot.slane %v426, 1
      %v446 = vsel %vm439, %v443, %v445
      %v447 = vrot.slane %v427, 1
      %v448 = vsel %vm439, %v445, %v447
      %v449 = vrot.slane %v428, 1
      %v450 = vsel %vm439, %v447, %v449
      %v451 = vrot.slane %v429, 1
      %v452 = vsel %vm439, %v449, %v451
      %v453 = vrot.slane %v430, 1
      %v454 = vsel %vm439, %v451, %v453
      %v463 = vadd.f32 %v411, %v442
      %v464 = vadd.f32 %v412, %v444
      %v465 = vadd.f32 %v413, %v446
      %v466 = vadd.f32 %v414, %v448
      %v467 = vadd.f32 %v415, %v450
      %v468 = vadd.f32 %v416, %v452
      %v469 = vadd.f32 %v417, %v454
      %v470 = vadd.f32 %v418, %v453
      %v471 = vlaneseq
      %v472 = vshrl.u32 %v471, 7
      %v473 = vsub.s32 2, %v472
      %v474 = vrot.slane %v308, %v473
      %v475 = vmul.f32 %v370, %v474
      %v476 = vmul.f32 %v375, %v474
      %v477 = vmul.f32 %v380, %v474
      %v478 = vmul.f32 %v385, %v474
      %v479 = vmul.f32 %v390, %v474
      %v480 = vmul.f32 %v395, %v474
      %v481 = vmul.f32 %v400, %v474
      %v482 = vmul.f32 %v405, %v474
      %vm491 = vcmask 1045504
      %v492 = vrot.slane %v475, 2
      %v493 = vrot.slane %v476, 2
      %v494 = vsel %vm491, %v492, %v493
      %v495 = vrot.slane %v477, 2
      %v496 = vsel %vm491, %v493, %v495
      %v497 = vrot.slane %v478, 2
      %v498 = vsel %vm491, %v495, %v497
      %v499 = vrot.slane %v479, 2
      %v500 = vsel %vm491, %v497, %v499
      %v501 = vrot.slane %v480, 2
      %v502 = vsel %vm491, %v499, %v501
      %v503 = vrot.slane %v481, 2
      %v504 = vsel %vm491, %v501, %v503
      %v505 = vrot.slane %v482, 2
      %v506 = vsel %vm491, %v503, %v505
      %v515 = vadd.f32 %v463, %v494
      %v516 = vadd.f32 %v464, %v496
      %v517 = vadd.f32 %v465, %v498
      %v518 = vadd.f32 %v466, %v500
      %v519 = vadd.f32 %v467, %v502
      %v520 = vadd.f32 %v468, %v504
      %v521 = vadd.f32 %v469, %v506
      %v522 = vadd.f32 %v470, %v505
      %v523 = vlaneseq
      %v524 = vshrl.u32 %v523, 7
      %v525 = vsub.s32 3, %v524
      %v526 = vrot.slane %v308, %v525
      %v527 = vmul.f32 %v370, %v526
      %v528 = vmul.f32 %v375, %v526
      %v529 = vmul.f32 %v380, %v526
      %v530 = vmul.f32 %v385, %v526
      %v531 = vmul.f32 %v390, %v526
      %v532 = vmul.f32 %v395, %v526
      %v533 = vmul.f32 %v400, %v526
      %v534 = vmul.f32 %v405, %v526
      %vm543 = vcmask 1044480
      %v544 = vrot.slane %v527, 3
      %v545 = vrot.slane %v528, 3
      %v546 = vsel %vm543, %v544, %v545
      %v547 = vrot.slane %v529, 3
      %v548 = vsel %vm543, %v545, %v547
      %v549 = vrot.slane %v530, 3
      %v550 = vsel %vm543, %v547, %v549
      %v551 = vrot.slane %v531, 3
      %v552 = vsel %vm543, %v549, %v551
      %v553 = vrot.slane %v532, 3
      %v554 = vsel %vm543, %v551, %v553
      %v555 = vrot.slane %v533, 3
      %v556 = vsel %vm543, %v553, %v555
      %v557 = vrot.slane %v534, 3
      %v558 = vsel %vm543, %v555, %v557
      %v567 = vadd.f32 %v515, %v546
      %v568 = vadd.f32 %v516, %v548
      %v569 = vadd.f32 %v517, %v550
      %v570 = vadd.f32 %v518, %v552
      %v571 = vadd.f32 %v519, %v554
      %v572 = vadd.f32 %v520, %v556
      %v573 = vadd.f32 %v521, %v558
      %v574 = vadd.f32 %v522, %v557
      %v575 = vlaneseq
      %v576 = vshrl.u32 %v575, 7
      %v577 = vsub.s32 4, %v576
      %v578 = vrot.slane %v308, %v577
      %v579 = vmul.f32 %v370, %v578
      %v580 = vmul.f32 %v375, %v578
      %v581 = vmul.f32 %v380, %v578
      %v582 = vmul.f32 %v385, %v578
      %v583 = vmul.f32 %v390, %v578
      %v584 = vmul.f32 %v395, %v578
      %v585 = vmul.f32 %v400, %v578
      %v586 = vmul.f32 %v405, %v578
      %vm595 = vcmask 1043456
      %v596 = vrot.slane %v579, 4
      %v597 = vrot.slane %v580, 4
      %v598 = vsel %vm595, %v596, %v597
      %v599 = vrot.slane %v581, 4
      %v600 = vsel %vm595, %v597, %v599
      %v601 = vrot.slane %v582, 4
      %v602 = vsel %vm595, %v599, %v601
      %v603 = vrot.slane %v583, 4
      %v604 = vsel %vm595, %v601, %v603
      %v605 = vrot.slane %v584, 4
      %v606 = vsel %vm595, %v603, %v605
      %v607 = vrot.slane %v585, 4
      %v608 = vsel %vm595, %v605, %v607
      %v609 = vrot.slane %v586, 4
      %v610 = vsel %vm595, %v607, %v609
      %v619 = vadd.f32 %v567, %v598
      %v620 = vadd.f32 %v568, %v600
      %v621 = vadd.f32 %v569, %v602
      %v622 = vadd.f32 %v570, %v604
      %v623 = vadd.f32 %v571, %v606
      %v624 = vadd.f32 %v572, %v608
      %v625 = vadd.f32 %v573, %v610
      %v626 = vadd.f32 %v574, %v609
      %v627 = vlaneseq
      %v628 = vshrl.u32 %v627, 7
      %v629 = vsub.s32 5, %v628
      %v630 = vrot.slane %v308, %v629
      %v631 = vmul.f32 %v370, %v630
      %v632 = vmul.f32 %v375, %v630
      %v633 = vmul.f32 %v380, %v630
      %v634 = vmul.f32 %v385, %v630
      %v635 = vmul.f32 %v390, %v630
      %v636 = vmul.f32 %v395, %v630
      %v637 = vmul.f32 %v400, %v630
      %v638 = vmul.f32 %v405, %v630
      %vm647 = vcmask 1042432
      %v648 = vrot.slane %v631, 5
      %v649 = vrot.slane %v632, 5
      %v650 = vsel %vm647, %v648, %v649
      %v651 = vrot.slane %v633, 5
      %v652 = vsel %vm647, %v649, %v651
      %v653 = vrot.slane %v634, 5
      %v654 = vsel %vm647, %v651, %v653
      %v655 = vrot.slane %v635, 5
      %v656 = vsel %vm647, %v653, %v655
      %v657 = vrot.slane %v636, 5
      %v658 = vsel %vm647, %v655, %v657
      %v659 = vrot.slane %v637, 5
      %v660 = vsel %vm647, %v657, %v659
      %v661 = vrot.slane %v638, 5
      %v662 = vsel %vm647, %v659, %v661
      %v671 = vadd.f32 %v619, %v650
      %v672 = vadd.f32 %v620, %v652
      %v673 = vadd.f32 %v621, %v654
      %v674 = vadd.f32 %v622, %v656
      %v675 = vadd.f32 %v623, %v658
      %v676 = vadd.f32 %v624, %v660
      %v677 = vadd.f32 %v625, %v662
      %v678 = vadd.f32 %v626, %v661
      %v679 = vlaneseq
      %v680 = vshrl.u32 %v679, 7
      %v681 = vsub.s32 6, %v680
      %v682 = vrot.slane %v308, %v681
      %v683 = vmul.f32 %v370, %v682
      %v684 = vmul.f32 %v375, %v682
      %v685 = vmul.f32 %v380, %v682
      %v686 = vmul.f32 %v385, %v682
      %v687 = vmul.f32 %v390, %v682
      %v688 = vmul.f32 %v395, %v682
      %v689 = vmul.f32 %v400, %v682
      %v690 = vmul.f32 %v405, %v682
      %vm699 = vcmask 1041408
      %v700 = vrot.slane %v683, 6
      %v701 = vrot.slane %v684, 6
      %v702 = vsel %vm699, %v700, %v701
      %v703 = vrot.slane %v685, 6
      %v704 = vsel %vm699, %v701, %v703
      %v705 = vrot.slane %v686, 6
      %v706 = vsel %vm699, %v703, %v705
      %v707 = vrot.slane %v687, 6
      %v708 = vsel %vm699, %v705, %v707
      %v709 = vrot.slane %v688, 6
      %v710 = vsel %vm699, %v707, %v709
      %v711 = vrot.slane %v689, 6
      %v712 = vsel %vm699, %v709, %v711
      %v713 = vrot.slane %v690, 6
      %v714 = vsel %vm699, %v711, %v713
      %v723 = vadd.f32 %v671, %v702
      %v724 = vadd.f32 %v672, %v704
      %v725 = vadd.f32 %v673, %v706
      %v726 = vadd.f32 %v674, %v708
      %v727 = vadd.f32 %v675, %v710
      %v728 = vadd.f32 %v676, %v712
      %v729 = vadd.f32 %v677, %v714
      %v730 = vadd.f32 %v678, %v713
      %v732 = vlaneseq
      %v733 = vshrl.u32 %v732, 7
      %v734 = vsub.s32 0, %v733
      %v735 = vrot.slane %v309, %v734
      %v737 = vadd.f32 %v723, %v735
      %v738 = vadd.f32 %v724, %v735
      %v739 = vadd.f32 %v725, %v735
      %v740 = vadd.f32 %v726, %v735
      %v741 = vadd.f32 %v727, %v735
      %v742 = vadd.f32 %v728, %v735
      %v743 = vadd.f32 %v729, %v735
      %v744 = vadd.f32 %v730, %v735
      %v745 = vmax.f32 %v737, 0.0
      %v746 = vmax.f32 %v738, 0.0
      %v747 = vmax.f32 %v739, 0.0
      %v748 = vmax.f32 %v740, 0.0
      %v749 = vmax.f32 %v741, 0.0
      %v750 = vmax.f32 %v742, 0.0
      %v751 = vmax.f32 %v743, 0.0
      %v752 = vmax.f32 %v744, 0.0
      %v760 = vrot.slane %v745, 1
      %v761 = vrot.slane %v746, 1
      %v762 = vsel %vm439, %v760, %v761
      %v763 = vrot.slane %v747, 1
      %v764 = vsel %vm439, %v761, %v763
      %v765 = vrot.slane %v748, 1
      %v766 = vsel %vm439, %v763, %v765
      %v767 = vrot.slane %v749, 1
      %v768 = vsel %vm439, %v765, %v767
      %v769 = vrot.slane %v750, 1
      %v770 = vsel %vm439, %v767, %v769
      %v771 = vrot.slane %v751, 1
      %v772 = vsel %vm439, %v769, %v771
      %773 = vrot.lane.b32.xlu0 %v762, 64
      %v774 = vpop.permute.xlu0 %773
      %775 = vrot.lane.b32.xlu0 %v764, 64
      %v776 = vpop.permute.xlu0 %775
      %777 = vrot.lane.b32.xlu0 %v766, 64
      %v778 = vpop.permute.xlu0 %777
      %779 = vrot.lane.b32.xlu0 %v768, 64
      %v780 = vpop.permute.xlu0 %779
      %781 = vrot.lane.b32.xlu0 %v770, 64
      %v782 = vpop.permute.xlu0 %781
      %783 = vrot.lane.b32.xlu0 %v772, 64
      %v784 = vpop.permute.xlu0 %783
      %785 = vrot.lane.b32.xlu0 %v771, 64
      %v786 = vpop.permute.xlu0 %785
      %v794 = vrot.slane %v745, 2
      %v795 = vrot.slane %v746, 2
      %v796 = vsel %vm491, %v794, %v795
      %v797 = vrot.slane %v747, 2
      %v798 = vsel %vm491, %v795, %v797
      %v799 = vrot.slane %v748, 2
      %v800 = vsel %vm491, %v797, %v799
      %v801 = vrot.slane %v749, 2
      %v802 = vsel %vm491, %v799, %v801
      %v803 = vrot.slane %v750, 2
      %v804 = vsel %vm491, %v801, %v803
      %v805 = vrot.slane %v751, 2
      %v806 = vsel %vm491, %v803, %v805
      %v814 = vrot.slane %v745, 3
      %v815 = vrot.slane %v746, 3
      %v816 = vsel %vm543, %v814, %v815
      %v817 = vrot.slane %v747, 3
      %v818 = vsel %vm543, %v815, %v817
      %v819 = vrot.slane %v748, 3
      %v820 = vsel %vm543, %v817, %v819
      %v821 = vrot.slane %v749, 3
      %v822 = vsel %vm543, %v819, %v821
      %v823 = vrot.slane %v750, 3
      %v824 = vsel %vm543, %v821, %v823
      %v825 = vrot.slane %v751, 3
      %v826 = vsel %vm543, %v823, %v825
      %827 = vrot.lane.b32.xlu0 %v816, 64
      %v828 = vpop.permute.xlu0 %827
      %829 = vrot.lane.b32.xlu0 %v818, 64
      %v830 = vpop.permute.xlu0 %829
      %831 = vrot.lane.b32.xlu0 %v820, 64
      %v832 = vpop.permute.xlu0 %831
      %833 = vrot.lane.b32.xlu0 %v822, 64
      %v834 = vpop.permute.xlu0 %833
      %835 = vrot.lane.b32.xlu0 %v824, 64
      %v836 = vpop.permute.xlu0 %835
      %837 = vrot.lane.b32.xlu0 %v826, 64
      %v838 = vpop.permute.xlu0 %837
      %839 = vrot.lane.b32.xlu0 %v825, 64
      %v840 = vpop.permute.xlu0 %839
      %v848 = vrot.slane %v745, 4
      %v849 = vrot.slane %v746, 4
      %v850 = vsel %vm595, %v848, %v849
      %v851 = vrot.slane %v747, 4
      %v852 = vsel %vm595, %v849, %v851
      %v853 = vrot.slane %v748, 4
      %v854 = vsel %vm595, %v851, %v853
      %v855 = vrot.slane %v749, 4
      %v856 = vsel %vm595, %v853, %v855
      %v857 = vrot.slane %v750, 4
      %v858 = vsel %vm595, %v855, %v857
      %v859 = vrot.slane %v751, 4
      %v860 = vsel %vm595, %v857, %v859
      %v869 = vrot.slane %v745, 5
      %v870 = vrot.slane %v746, 5
      %v871 = vsel %vm647, %v869, %v870
      %v872 = vrot.slane %v747, 5
      %v873 = vsel %vm647, %v870, %v872
      %v874 = vrot.slane %v748, 5
      %v875 = vsel %vm647, %v872, %v874
      %v876 = vrot.slane %v749, 5
      %v877 = vsel %vm647, %v874, %v876
      %v878 = vrot.slane %v750, 5
      %v879 = vsel %vm647, %v876, %v878
      %v880 = vrot.slane %v751, 5
      %v881 = vsel %vm647, %v878, %v880
      %v882 = vrot.slane %v752, 5
      %v883 = vsel %vm647, %v880, %v882
      %884 = vrot.lane.b32.xlu0 %v871, 64
      %v885 = vpop.permute.xlu0 %884
      %886 = vrot.lane.b32.xlu0 %v873, 64
      %v887 = vpop.permute.xlu0 %886
      %888 = vrot.lane.b32.xlu0 %v875, 64
      %v889 = vpop.permute.xlu0 %888
      %890 = vrot.lane.b32.xlu0 %v877, 64
      %v891 = vpop.permute.xlu0 %890
      %892 = vrot.lane.b32.xlu0 %v879, 64
      %v893 = vpop.permute.xlu0 %892
      %894 = vrot.lane.b32.xlu0 %v881, 64
      %v895 = vpop.permute.xlu0 %894
      %896 = vrot.lane.b32.xlu0 %v883, 64
      %v897 = vpop.permute.xlu0 %896
      %v905 = vrot.slane %v745, 6
      %v906 = vrot.slane %v746, 6
      %v907 = vsel %vm699, %v905, %v906
      %v908 = vrot.slane %v747, 6
      %v909 = vsel %vm699, %v906, %v908
      %v910 = vrot.slane %v748, 6
      %v911 = vsel %vm699, %v908, %v910
      %v912 = vrot.slane %v749, 6
      %v913 = vsel %vm699, %v910, %v912
      %v914 = vrot.slane %v750, 6
      %v915 = vsel %vm699, %v912, %v914
      %v916 = vrot.slane %v751, 6
      %v917 = vsel %vm699, %v914, %v916
      %v918 = vrot.slane %v752, 6
      %v919 = vsel %vm699, %v916, %v918
      %vm927 = vcmask 523264
      %v928 = vsel %vm927, %v745, %v774
      %v929 = vsel %vm927, %v746, %v776
      %v930 = vsel %vm927, %v747, %v778
      %v931 = vsel %vm927, %v748, %v780
      %v932 = vsel %vm927, %v749, %v782
      %v933 = vsel %vm927, %v750, %v784
      %v934 = vsel %vm927, %v751, %v786
      %v935 = vsel %vm927, %v796, %v828
      %v936 = vsel %vm927, %v798, %v830
      %v937 = vsel %vm927, %v800, %v832
      %v938 = vsel %vm927, %v802, %v834
      %v939 = vsel %vm927, %v804, %v836
      %v940 = vsel %vm927, %v806, %v838
      %v941 = vsel %vm927, %v805, %v840
      %v942 = vsel %vm927, %v850, %v885
      %v943 = vsel %vm927, %v852, %v887
      %v944 = vsel %vm927, %v854, %v889
      %v945 = vsel %vm927, %v856, %v891
      %v946 = vsel %vm927, %v858, %v893
      %v947 = vsel %vm927, %v860, %v895
      %v948 = vsel %vm927, %v859, %v897
      %v949 = vpack.c.bf16 %v929, %v928
      %v950 = vpack.c.bf16 %v936, %v935
      %v951 = vpack.c.bf16 %v943, %v942
      %v952 = vpack.c.bf16 %v909, %v907
      %v953 = vpack.c.bf16 %v931, %v930
      %v954 = vpack.c.bf16 %v938, %v937
      %v955 = vpack.c.bf16 %v945, %v944
      %v956 = vpack.c.bf16 %v913, %v911
      %v957 = vpack.c.bf16 %v933, %v932
      %v958 = vpack.c.bf16 %v940, %v939
      %v959 = vpack.c.bf16 %v947, %v946
      %v960 = vpack.c.bf16 %v917, %v915
      %v961 = vpack.c.bf16 %v934, %v934
      %v962 = vpack.c.bf16 %v941, %v941
      %v963 = vpack.c.bf16 %v948, %v948
      %v964 = vpack.c.bf16 %v919, %v919
      %v966 = vlaneseq
      %v967 = vshrl.u32 %v966, 7
      %v968 = vsub.s32 0, %v967
      %v969 = vrot.slane %v366, %v968
      %v1027 = vunpack.c.l.b16 %v310
      %v1028 = vunpack.c.l.b16 %v311
      %v1029 = vunpack.c.l.b16 %v312
      %v1030 = vunpack.c.l.b16 %v313
      %v1031 = vunpack.c.l.b16 %v314
      %v1032 = vunpack.c.l.b16 %v315
      %v1033 = vunpack.c.l.b16 %v316
      %v1034 = vunpack.c.l.b16 %v317
      %v1035 = vunpack.c.l.b16 %v318
      %v1036 = vunpack.c.l.b16 %v319
      %v1037 = vunpack.c.l.b16 %v320
      %v1038 = vunpack.c.l.b16 %v321
      %v1039 = vunpack.c.l.b16 %v322
      %v1040 = vunpack.c.l.b16 %v323
      %v1041 = vunpack.c.l.b16 %v324
      %v1042 = vunpack.c.l.b16 %v325
      %v1043 = vunpack.c.l.b16 %v326
      %v1044 = vunpack.c.l.b16 %v327
      %v1045 = vunpack.c.l.b16 %v328
      %v1046 = vunpack.c.l.b16 %v329
      %v1047 = vunpack.c.l.b16 %v330
      %v1048 = vunpack.c.l.b16 %v331
      %v1049 = vunpack.c.l.b16 %v332
      %v1050 = vunpack.c.l.b16 %v333
      %v1051 = vunpack.c.l.b16 %v334
      %v1052 = vunpack.c.l.b16 %v335
      %v1053 = vunpack.c.l.b16 %v336
      %v1054 = vunpack.c.l.b16 %v337
      %v1055 = vunpack.c.l.b16 %v338
      %v1056 = vunpack.c.l.b16 %v339
      %v1057 = vunpack.c.l.b16 %v340
      %v1058 = vunpack.c.l.b16 %v341
      %v1059 = vunpack.c.l.b16 %v342
      %v1060 = vunpack.c.l.b16 %v343
      %v1061 = vunpack.c.l.b16 %v344
      %v1062 = vunpack.c.l.b16 %v345
      %v1063 = vunpack.c.l.b16 %v346
      %v1064 = vunpack.c.l.b16 %v347
      %v1065 = vunpack.c.l.b16 %v348
      %v1066 = vunpack.c.l.b16 %v349
      %v1067 = vunpack.c.l.b16 %v350
      %v1068 = vunpack.c.l.b16 %v351
      %v1069 = vunpack.c.l.b16 %v352
      %v1070 = vunpack.c.l.b16 %v353
      %v1071 = vunpack.c.l.b16 %v354
      %v1072 = vunpack.c.l.b16 %v355
      %v1073 = vunpack.c.l.b16 %v356
      %v1074 = vunpack.c.l.b16 %v357
      %v1075 = vunpack.c.l.b16 %v358
      %v1076 = vunpack.c.l.b16 %v359
      %v1077 = vunpack.c.l.b16 %v360
      %v1078 = vunpack.c.l.b16 %v361
      %v1079 = vunpack.c.l.b16 %v362
      %v1080 = vunpack.c.l.b16 %v363
      %v1081 = vunpack.c.l.b16 %v364
      %v1082 = vunpack.c.l.b16 %v365
      %v1083 = vpack.c.b16 %v1028, %v1027
      %v1084 = vpack.c.b16 %v1030, %v1029
      %v1085 = vpack.c.b16 %v1032, %v1031
      %v1086 = vpack.c.b16 %v1034, %v1033
      %v1087 = vpack.c.b16 %v1036, %v1035
      %v1088 = vpack.c.b16 %v1038, %v1037
      %v1089 = vpack.c.b16 %v1040, %v1039
      %v1090 = vpack.c.b16 %v1042, %v1041
      %v1091 = vpack.c.b16 %v1044, %v1043
      %v1092 = vpack.c.b16 %v1046, %v1045
      %v1093 = vpack.c.b16 %v1048, %v1047
      %v1094 = vpack.c.b16 %v1050, %v1049
      %v1095 = vpack.c.b16 %v1052, %v1051
      %v1096 = vpack.c.b16 %v1054, %v1053
      %v1097 = vpack.c.b16 %v1056, %v1055
      %v1098 = vpack.c.b16 %v1058, %v1057
      %v1099 = vpack.c.b16 %v1060, %v1059
      %v1100 = vpack.c.b16 %v1062, %v1061
      %v1101 = vpack.c.b16 %v1064, %v1063
      %v1102 = vpack.c.b16 %v1066, %v1065
      %v1103 = vpack.c.b16 %v1068, %v1067
      %v1104 = vpack.c.b16 %v1070, %v1069
      %v1105 = vpack.c.b16 %v1072, %v1071
      %v1106 = vpack.c.b16 %v1074, %v1073
      %v1107 = vpack.c.b16 %v1076, %v1075
      %v1108 = vpack.c.b16 %v1078, %v1077
      %v1109 = vpack.c.b16 %v1080, %v1079
      %v1110 = vpack.c.b16 %v1082, %v1081
      %v1140 = vsel %vm927, %v952, 0
      %v1143 = vsel %vm927, %v956, 0
      %v1146 = vsel %vm927, %v960, 0
      %v1149 = vsel %vm927, %v964, 0
      %1151 = vmatprep.subr.bf16.mxu0 0
      %1152 = vmatpush1.bf16.msra.mxu0 %v1090
      %1153 = vmatprep.subr.bf16.mxu0 0
      %1154 = vmatpush1.bf16.msra.mxu0 %v1089
      %1155 = vmatprep.subr.bf16.mxu0 0
      %1156 = vmatpush1.bf16.msra.mxu0 %v1088
      %1157 = vmatprep.subr.bf16.mxu0 0
      %1158 = vmatpush1.bf16.msra.mxu0 %v1087
      %1159 = vmatprep.subr.bf16.mxu0 0
      %1160 = vmatpush1.bf16.msra.mxu0 %v1086
      %1161 = vmatprep.subr.bf16.mxu0 0
      %1162 = vmatpush1.bf16.msra.mxu0 %v1085
      %1163 = vmatprep.subr.bf16.mxu0 0
      %1164 = vmatpush1.bf16.msra.mxu0 %v1084
      %1165 = vmatprep.subr.bf16.mxu0 0
      %1166 = vmatpush1.bf16.msra.mxu0 %v1083
      %1167 = vmatprep.subr.bf16.mxu0 0
      %1168 = vmatpush2.bf16.msra.mxu0 %v1098
      %1169 = vmatprep.subr.bf16.mxu0 0
      %1170 = vmatpush2.bf16.msra.mxu0 %v1097
      %1171 = vmatprep.subr.bf16.mxu0 0
      %1172 = vmatpush2.bf16.msra.mxu0 %v1096
      %1173 = vmatprep.subr.bf16.mxu0 0
      %1174 = vmatpush2.bf16.msra.mxu0 %v1095
      %1175 = vmatprep.subr.bf16.mxu0 0
      %1176 = vmatpush2.bf16.msra.mxu0 %v1094
      %1177 = vmatprep.subr.bf16.mxu0 0
      %1178 = vmatpush2.bf16.msra.mxu0 %v1093
      %1179 = vmatprep.subr.bf16.mxu0 0
      %1180 = vmatpush2.bf16.msra.mxu0 %v1092
      %1181 = vmatprep.subr.bf16.mxu0 0
      %1182 = vmatpush2.bf16.msra.mxu0 %v1091
      %1183 = vmatprep.mubr.bf16.mxu0 %v950
      %1184 = vmatmul.mubr.bf16.gmra.mxu0 %v949
      %v1185 = vpop.f32.mrf.mxu0
      %v1186 = vadd.f32 %v969, %v1185
      %v1187 = vpop.f32.mrf.mxu0
      %v1188 = vpop.f32.mrf.mxu0
      %v1189 = vadd.f32 %v969, %v1188
      %v1190 = vpop.f32.mrf.mxu0
      %1191 = vmatprep.mubr.bf16.mxu0 %v954
      %1192 = vmatmul.mubr.bf16.gmra.mxu0 %v953
      %v1193 = vpop.f32.mrf.mxu0
      %v1194 = vadd.f32 %v969, %v1193
      %v1195 = vpop.f32.mrf.mxu0
      %v1196 = vpop.f32.mrf.mxu0
      %v1197 = vadd.f32 %v969, %v1196
      %v1198 = vpop.f32.mrf.mxu0
      %1199 = vmatprep.mubr.bf16.mxu0 %v958
      %1200 = vmatmul.mubr.bf16.gmra.mxu0 %v957
      %v1201 = vpop.f32.mrf.mxu0
      %v1202 = vadd.f32 %v969, %v1201
      %v1203 = vpop.f32.mrf.mxu0
      %v1204 = vpop.f32.mrf.mxu0
      %v1205 = vadd.f32 %v969, %v1204
      %v1206 = vpop.f32.mrf.mxu0
      %1207 = vmatprep.mubr.bf16.mxu0 %v962
      %1208 = vmatmul.mubr.bf16.gmra.mxu0 %v961
      %v1209 = vpop.f32.mrf.mxu0
      %v1210 = vadd.f32 %v969, %v1209
      %v1211 = vpop.f32.mrf.mxu0
      %v1212 = vpop.f32.mrf.mxu0
      %v1213 = vpop.f32.mrf.mxu0
      %1214 = vdwg.mxu0
      %1215 = vmatprep.subr.bf16.mxu0 0
      %1216 = vmatpush1.bf16.msra.mxu0 %v1106
      %1217 = vmatprep.subr.bf16.mxu0 0
      %1218 = vmatpush1.bf16.msra.mxu0 %v1105
      %1219 = vmatprep.subr.bf16.mxu0 0
      %1220 = vmatpush1.bf16.msra.mxu0 %v1104
      %1221 = vmatprep.subr.bf16.mxu0 0
      %1222 = vmatpush1.bf16.msra.mxu0 %v1103
      %1223 = vmatprep.subr.bf16.mxu0 0
      %1224 = vmatpush1.bf16.msra.mxu0 %v1102
      %1225 = vmatprep.subr.bf16.mxu0 0
      %1226 = vmatpush1.bf16.msra.mxu0 %v1101
      %1227 = vmatprep.subr.bf16.mxu0 0
      %1228 = vmatpush1.bf16.msra.mxu0 %v1100
      %1229 = vmatprep.subr.bf16.mxu0 0
      %1230 = vmatpush1.bf16.msra.mxu0 %v1099
      %1231 = vmatprep.subr.bf16.mxu0 0
      %1232 = vmatpush2.bf16.msra.mxu0 0
      %1233 = vmatprep.subr.bf16.mxu0 0
      %1234 = vmatpush2.bf16.msra.mxu0 0
      %1235 = vmatprep.subr.bf16.mxu0 0
      %1236 = vmatpush2.bf16.msra.mxu0 0
      %1237 = vmatprep.subr.bf16.mxu0 0
      %1238 = vmatpush2.bf16.msra.mxu0 0
      %1239 = vmatprep.subr.bf16.mxu0 0
      %1240 = vmatpush2.bf16.msra.mxu0 %v1110
      %1241 = vmatprep.subr.bf16.mxu0 0
      %1242 = vmatpush2.bf16.msra.mxu0 %v1109
      %1243 = vmatprep.subr.bf16.mxu0 0
      %1244 = vmatpush2.bf16.msra.mxu0 %v1108
      %1245 = vmatprep.subr.bf16.mxu0 0
      %1246 = vmatpush2.bf16.msra.mxu0 %v1107
      %1247 = vmatprep.mubr.bf16.mxu0 %v1140
      %1248 = vmatmul.mubr.bf16.gmra.mxu0 %v951
      %v1249 = vpop.f32.mrf.mxu0
      %v1250 = vadd.f32 %v1186, %v1249
      %v1251 = vpop.f32.mrf.mxu0
      %v1252 = vpop.f32.mrf.mxu0
      %v1253 = vadd.f32 %v1189, %v1252
      %v1254 = vpop.f32.mrf.mxu0
      %1255 = vmatprep.mubr.bf16.mxu0 %v1143
      %1256 = vmatmul.mubr.bf16.gmra.mxu0 %v955
      %v1257 = vpop.f32.mrf.mxu0
      %v1258 = vadd.f32 %v1194, %v1257
      %v1259 = vpop.f32.mrf.mxu0
      %v1260 = vpop.f32.mrf.mxu0
      %v1261 = vadd.f32 %v1197, %v1260
      %v1262 = vpop.f32.mrf.mxu0
      %1263 = vmatprep.mubr.bf16.mxu0 %v1146
      %1264 = vmatmul.mubr.bf16.gmra.mxu0 %v959
      %v1265 = vpop.f32.mrf.mxu0
      %v1266 = vadd.f32 %v1202, %v1265
      %v1267 = vpop.f32.mrf.mxu0
      %v1268 = vpop.f32.mrf.mxu0
      %v1269 = vadd.f32 %v1205, %v1268
      %v1270 = vpop.f32.mrf.mxu0
      %1271 = vmatprep.mubr.bf16.mxu0 %v1149
      %1272 = vmatmul.mubr.bf16.gmra.mxu0 %v963
      %v1273 = vpop.f32.mrf.mxu0
      %v1274 = vadd.f32 %v1210, %v1273
      %v1275 = vpop.f32.mrf.mxu0
      %v1276 = vpop.f32.mrf.mxu0
      %v1277 = vpop.f32.mrf.mxu0
      %1278 = vdwg.mxu0
      %v1279 = vmax.f32 %v1250, 0.0
      %v1280 = vmax.f32 %v1253, 0.0
      %v1281 = vmax.f32 %v1258, 0.0
      %v1282 = vmax.f32 %v1261, 0.0
      %v1283 = vmax.f32 %v1266, 0.0
      %v1284 = vmax.f32 %v1269, 0.0
      %v1285 = vmax.f32 %v1274, 0.0
      %v1286 = vsel %vm927, %v1279, 0.0
      %v1287 = vsel %vm927, %v1280, 0.0
      %v1288 = vadd.f32 %v1286, %v1287
      %v1289 = vsel %vm927, %v1281, 0.0
      %v1290 = vadd.f32 %v1288, %v1289
      %v1291 = vsel %vm927, %v1282, 0.0
      %v1292 = vadd.f32 %v1290, %v1291
      %v1293 = vsel %vm927, %v1283, 0.0
      %v1294 = vadd.f32 %v1292, %v1293
      %v1295 = vsel %vm927, %v1284, 0.0
      %v1296 = vadd.f32 %v1294, %v1295
      %vm1297 = vcmask 519168
      %v1298 = vsel %vm1297, %v1285, 0.0
      %v1299 = vadd.f32 %v1296, %v1298
      %v1300 = vrot.slane %v1299, 4
      %v1301 = vadd.f32 %v1299, %v1300
      %v1302 = vrot.slane %v1301, 2
      %v1303 = vadd.f32 %v1301, %v1302
      %v1304 = vrot.slane %v1303, 1
      %v1305 = vadd.f32 %v1303, %v1304
      %v1306 = vrcp.pop 52.0
      %v1307 = vmul.f32 %v1305, %v1306
      %1308 = vset.pattern.permute.xlu0 1
      %1309 = vperm.xlu0 %1308, %v292
      %v1310 = vpop.permute.xlu0 %1309
      %1312 = vset.pattern.permute.xlu0 1
      %1313 = vperm.xlu0 %1312, %v293
      %v1314 = vpop.permute.xlu0 %1313
      %1316 = vset.pattern.permute.xlu0 1
      %1317 = vperm.xlu0 %1316, %v294
      %v1318 = vpop.permute.xlu0 %1317
      %1320 = vset.pattern.permute.xlu0 1
      %1321 = vperm.xlu0 %1320, %v295
      %v1322 = vpop.permute.xlu0 %1321
      %1324 = vset.pattern.permute.xlu0 1
      %1325 = vperm.xlu0 %1324, %v296
      %v1326 = vpop.permute.xlu0 %1325
      %1328 = vset.pattern.permute.xlu0 1
      %1329 = vperm.xlu0 %1328, %v297
      %v1330 = vpop.permute.xlu0 %1329
      %1332 = vset.pattern.permute.xlu0 1
      %1333 = vperm.xlu0 %1332, %v298
      %v1334 = vpop.permute.xlu0 %1333
      %1336 = vset.pattern.permute.xlu0 1
      %1337 = vperm.xlu0 %1336, %v299
      %v1338 = vpop.permute.xlu0 %1337
      %v1340 = vmul.f32 %v1310, %v410
      %v1341 = vmul.f32 %v1314, %v410
      %v1342 = vmul.f32 %v1318, %v410
      %v1343 = vmul.f32 %v1322, %v410
      %v1344 = vmul.f32 %v1326, %v410
      %v1345 = vmul.f32 %v1330, %v410
      %v1346 = vmul.f32 %v1334, %v410
      %v1347 = vmul.f32 %v1338, %v410
      %v1348 = vmul.f32 %v1310, %v422
      %v1349 = vmul.f32 %v1314, %v422
      %v1350 = vmul.f32 %v1318, %v422
      %v1351 = vmul.f32 %v1322, %v422
      %v1352 = vmul.f32 %v1326, %v422
      %v1353 = vmul.f32 %v1330, %v422
      %v1354 = vmul.f32 %v1334, %v422
      %v1355 = vmul.f32 %v1338, %v422
      %v1364 = vrot.slane %v1348, 1
      %v1365 = vrot.slane %v1349, 1
      %v1366 = vsel %vm439, %v1364, %v1365
      %v1367 = vrot.slane %v1350, 1
      %v1368 = vsel %vm439, %v1365, %v1367
      %v1369 = vrot.slane %v1351, 1
      %v1370 = vsel %vm439, %v1367, %v1369
      %v1371 = vrot.slane %v1352, 1
      %v1372 = vsel %vm439, %v1369, %v1371
      %v1373 = vrot.slane %v1353, 1
      %v1374 = vsel %vm439, %v1371, %v1373
      %v1375 = vrot.slane %v1354, 1
      %v1376 = vsel %vm439, %v1373, %v1375
      %v1377 = vrot.slane %v1355, 1
      %v1378 = vsel %vm439, %v1375, %v1377
      %v1387 = vadd.f32 %v1340, %v1366
      %v1388 = vadd.f32 %v1341, %v1368
      %v1389 = vadd.f32 %v1342, %v1370
      %v1390 = vadd.f32 %v1343, %v1372
      %v1391 = vadd.f32 %v1344, %v1374
      %v1392 = vadd.f32 %v1345, %v1376
      %v1393 = vadd.f32 %v1346, %v1378
      %v1394 = vadd.f32 %v1347, %v1377
      %v1395 = vmul.f32 %v1310, %v474
      %v1396 = vmul.f32 %v1314, %v474
      %v1397 = vmul.f32 %v1318, %v474
      %v1398 = vmul.f32 %v1322, %v474
      %v1399 = vmul.f32 %v1326, %v474
      %v1400 = vmul.f32 %v1330, %v474
      %v1401 = vmul.f32 %v1334, %v474
      %v1402 = vmul.f32 %v1338, %v474
      %v1411 = vrot.slane %v1395, 2
      %v1412 = vrot.slane %v1396, 2
      %v1413 = vsel %vm491, %v1411, %v1412
      %v1414 = vrot.slane %v1397, 2
      %v1415 = vsel %vm491, %v1412, %v1414
      %v1416 = vrot.slane %v1398, 2
      %v1417 = vsel %vm491, %v1414, %v1416
      %v1418 = vrot.slane %v1399, 2
      %v1419 = vsel %vm491, %v1416, %v1418
      %v1420 = vrot.slane %v1400, 2
      %v1421 = vsel %vm491, %v1418, %v1420
      %v1422 = vrot.slane %v1401, 2
      %v1423 = vsel %vm491, %v1420, %v1422
      %v1424 = vrot.slane %v1402, 2
      %v1425 = vsel %vm491, %v1422, %v1424
      %v1434 = vadd.f32 %v1387, %v1413
      %v1435 = vadd.f32 %v1388, %v1415
      %v1436 = vadd.f32 %v1389, %v1417
      %v1437 = vadd.f32 %v1390, %v1419
      %v1438 = vadd.f32 %v1391, %v1421
      %v1439 = vadd.f32 %v1392, %v1423
      %v1440 = vadd.f32 %v1393, %v1425
      %v1441 = vadd.f32 %v1394, %v1424
      %v1442 = vmul.f32 %v1310, %v526
      %v1443 = vmul.f32 %v1314, %v526
      %v1444 = vmul.f32 %v1318, %v526
      %v1445 = vmul.f32 %v1322, %v526
      %v1446 = vmul.f32 %v1326, %v526
      %v1447 = vmul.f32 %v1330, %v526
      %v1448 = vmul.f32 %v1334, %v526
      %v1449 = vmul.f32 %v1338, %v526
      %v1458 = vrot.slane %v1442, 3
      %v1459 = vrot.slane %v1443, 3
      %v1460 = vsel %vm543, %v1458, %v1459
      %v1461 = vrot.slane %v1444, 3
      %v1462 = vsel %vm543, %v1459, %v1461
      %v1463 = vrot.slane %v1445, 3
      %v1464 = vsel %vm543, %v1461, %v1463
      %v1465 = vrot.slane %v1446, 3
      %v1466 = vsel %vm543, %v1463, %v1465
      %v1467 = vrot.slane %v1447, 3
      %v1468 = vsel %vm543, %v1465, %v1467
      %v1469 = vrot.slane %v1448, 3
      %v1470 = vsel %vm543, %v1467, %v1469
      %v1471 = vrot.slane %v1449, 3
      %v1472 = vsel %vm543, %v1469, %v1471
      %v1481 = vadd.f32 %v1434, %v1460
      %v1482 = vadd.f32 %v1435, %v1462
      %v1483 = vadd.f32 %v1436, %v1464
      %v1484 = vadd.f32 %v1437, %v1466
      %v1485 = vadd.f32 %v1438, %v1468
      %v1486 = vadd.f32 %v1439, %v1470
      %v1487 = vadd.f32 %v1440, %v1472
      %v1488 = vadd.f32 %v1441, %v1471
      %v1489 = vmul.f32 %v1310, %v578
      %v1490 = vmul.f32 %v1314, %v578
      %v1491 = vmul.f32 %v1318, %v578
      %v1492 = vmul.f32 %v1322, %v578
      %v1493 = vmul.f32 %v1326, %v578
      %v1494 = vmul.f32 %v1330, %v578
      %v1495 = vmul.f32 %v1334, %v578
      %v1496 = vmul.f32 %v1338, %v578
      %v1505 = vrot.slane %v1489, 4
      %v1506 = vrot.slane %v1490, 4
      %v1507 = vsel %vm595, %v1505, %v1506
      %v1508 = vrot.slane %v1491, 4
      %v1509 = vsel %vm595, %v1506, %v1508
      %v1510 = vrot.slane %v1492, 4
      %v1511 = vsel %vm595, %v1508, %v1510
      %v1512 = vrot.slane %v1493, 4
      %v1513 = vsel %vm595, %v1510, %v1512
      %v1514 = vrot.slane %v1494, 4
      %v1515 = vsel %vm595, %v1512, %v1514
      %v1516 = vrot.slane %v1495, 4
      %v1517 = vsel %vm595, %v1514, %v1516
      %v1518 = vrot.slane %v1496, 4
      %v1519 = vsel %vm595, %v1516, %v1518
      %v1528 = vadd.f32 %v1481, %v1507
      %v1529 = vadd.f32 %v1482, %v1509
      %v1530 = vadd.f32 %v1483, %v1511
      %v1531 = vadd.f32 %v1484, %v1513
      %v1532 = vadd.f32 %v1485, %v1515
      %v1533 = vadd.f32 %v1486, %v1517
      %v1534 = vadd.f32 %v1487, %v1519
      %v1535 = vadd.f32 %v1488, %v1518
      %v1536 = vmul.f32 %v1310, %v630
      %v1537 = vmul.f32 %v1314, %v630
      %v1538 = vmul.f32 %v1318, %v630
      %v1539 = vmul.f32 %v1322, %v630
      %v1540 = vmul.f32 %v1326, %v630
      %v1541 = vmul.f32 %v1330, %v630
      %v1542 = vmul.f32 %v1334, %v630
      %v1543 = vmul.f32 %v1338, %v630
      %v1552 = vrot.slane %v1536, 5
      %v1553 = vrot.slane %v1537, 5
      %v1554 = vsel %vm647, %v1552, %v1553
      %v1555 = vrot.slane %v1538, 5
      %v1556 = vsel %vm647, %v1553, %v1555
      %v1557 = vrot.slane %v1539, 5
      %v1558 = vsel %vm647, %v1555, %v1557
      %v1559 = vrot.slane %v1540, 5
      %v1560 = vsel %vm647, %v1557, %v1559
      %v1561 = vrot.slane %v1541, 5
      %v1562 = vsel %vm647, %v1559, %v1561
      %v1563 = vrot.slane %v1542, 5
      %v1564 = vsel %vm647, %v1561, %v1563
      %v1565 = vrot.slane %v1543, 5
      %v1566 = vsel %vm647, %v1563, %v1565
      %v1575 = vadd.f32 %v1528, %v1554
      %v1576 = vadd.f32 %v1529, %v1556
      %v1577 = vadd.f32 %v1530, %v1558
      %v1578 = vadd.f32 %v1531, %v1560
      %v1579 = vadd.f32 %v1532, %v1562
      %v1580 = vadd.f32 %v1533, %v1564
      %v1581 = vadd.f32 %v1534, %v1566
      %v1582 = vadd.f32 %v1535, %v1565
      %v1583 = vmul.f32 %v1310, %v682
      %v1584 = vmul.f32 %v1314, %v682
      %v1585 = vmul.f32 %v1318, %v682
      %v1586 = vmul.f32 %v1322, %v682
      %v1587 = vmul.f32 %v1326, %v682
      %v1588 = vmul.f32 %v1330, %v682
      %v1589 = vmul.f32 %v1334, %v682
      %v1590 = vmul.f32 %v1338, %v682
      %v1599 = vrot.slane %v1583, 6
      %v1600 = vrot.slane %v1584, 6
      %v1601 = vsel %vm699, %v1599, %v1600
      %v1602 = vrot.slane %v1585, 6
      %v1603 = vsel %vm699, %v1600, %v1602
      %v1604 = vrot.slane %v1586, 6
      %v1605 = vsel %vm699, %v1602, %v1604
      %v1606 = vrot.slane %v1587, 6
      %v1607 = vsel %vm699, %v1604, %v1606
      %v1608 = vrot.slane %v1588, 6
      %v1609 = vsel %vm699, %v1606, %v1608
      %v1610 = vrot.slane %v1589, 6
      %v1611 = vsel %vm699, %v1608, %v1610
      %v1612 = vrot.slane %v1590, 6
      %v1613 = vsel %vm699, %v1610, %v1612
      %v1622 = vadd.f32 %v1575, %v1601
      %v1623 = vadd.f32 %v1576, %v1603
      %v1624 = vadd.f32 %v1577, %v1605
      %v1625 = vadd.f32 %v1578, %v1607
      %v1626 = vadd.f32 %v1579, %v1609
      %v1627 = vadd.f32 %v1580, %v1611
      %v1628 = vadd.f32 %v1581, %v1613
      %v1629 = vadd.f32 %v1582, %v1612
      %v1630 = vadd.f32 %v1622, %v735
      %v1631 = vadd.f32 %v1623, %v735
      %v1632 = vadd.f32 %v1624, %v735
      %v1633 = vadd.f32 %v1625, %v735
      %v1634 = vadd.f32 %v1626, %v735
      %v1635 = vadd.f32 %v1627, %v735
      %v1636 = vadd.f32 %v1628, %v735
      %v1637 = vadd.f32 %v1629, %v735
      %v1638 = vmax.f32 %v1630, 0.0
      %v1639 = vmax.f32 %v1631, 0.0
      %v1640 = vmax.f32 %v1632, 0.0
      %v1641 = vmax.f32 %v1633, 0.0
      %v1642 = vmax.f32 %v1634, 0.0
      %v1643 = vmax.f32 %v1635, 0.0
      %v1644 = vmax.f32 %v1636, 0.0
      %v1645 = vmax.f32 %v1637, 0.0
      %v1653 = vrot.slane %v1638, 1
      %v1654 = vrot.slane %v1639, 1
      %v1655 = vsel %vm439, %v1653, %v1654
      %v1656 = vrot.slane %v1640, 1
      %v1657 = vsel %vm439, %v1654, %v1656
      %v1658 = vrot.slane %v1641, 1
      %v1659 = vsel %vm439, %v1656, %v1658
      %v1660 = vrot.slane %v1642, 1
      %v1661 = vsel %vm439, %v1658, %v1660
      %v1662 = vrot.slane %v1643, 1
      %v1663 = vsel %vm439, %v1660, %v1662
      %v1664 = vrot.slane %v1644, 1
      %v1665 = vsel %vm439, %v1662, %v1664
      %1666 = vrot.lane.b32.xlu0 %v1655, 64
      %v1667 = vpop.permute.xlu0 %1666
      %1668 = vrot.lane.b32.xlu0 %v1657, 64
      %v1669 = vpop.permute.xlu0 %1668
      %1670 = vrot.lane.b32.xlu0 %v1659, 64
      %v1671 = vpop.permute.xlu0 %1670
      %1672 = vrot.lane.b32.xlu0 %v1661, 64
      %v1673 = vpop.permute.xlu0 %1672
      %1674 = vrot.lane.b32.xlu0 %v1663, 64
      %v1675 = vpop.permute.xlu0 %1674
      %1676 = vrot.lane.b32.xlu0 %v1665, 64
      %v1677 = vpop.permute.xlu0 %1676
      %1678 = vrot.lane.b32.xlu0 %v1664, 64
      %v1679 = vpop.permute.xlu0 %1678
      %v1687 = vrot.slane %v1638, 2
      %v1688 = vrot.slane %v1639, 2
      %v1689 = vsel %vm491, %v1687, %v1688
      %v1690 = vrot.slane %v1640, 2
      %v1691 = vsel %vm491, %v1688, %v1690
      %v1692 = vrot.slane %v1641, 2
      %v1693 = vsel %vm491, %v1690, %v1692
      %v1694 = vrot.slane %v1642, 2
      %v1695 = vsel %vm491, %v1692, %v1694
      %v1696 = vrot.slane %v1643, 2
      %v1697 = vsel %vm491, %v1694, %v1696
      %v1698 = vrot.slane %v1644, 2
      %v1699 = vsel %vm491, %v1696, %v1698
      %v1707 = vrot.slane %v1638, 3
      %v1708 = vrot.slane %v1639, 3
      %v1709 = vsel %vm543, %v1707, %v1708
      %v1710 = vrot.slane %v1640, 3
      %v1711 = vsel %vm543, %v1708, %v1710
      %v1712 = vrot.slane %v1641, 3
      %v1713 = vsel %vm543, %v1710, %v1712
      %v1714 = vrot.slane %v1642, 3
      %v1715 = vsel %vm543, %v1712, %v1714
      %v1716 = vrot.slane %v1643, 3
      %v1717 = vsel %vm543, %v1714, %v1716
      %v1718 = vrot.slane %v1644, 3
      %v1719 = vsel %vm543, %v1716, %v1718
      %1720 = vrot.lane.b32.xlu0 %v1709, 64
      %v1721 = vpop.permute.xlu0 %1720
      %1722 = vrot.lane.b32.xlu0 %v1711, 64
      %v1723 = vpop.permute.xlu0 %1722
      %1724 = vrot.lane.b32.xlu0 %v1713, 64
      %v1725 = vpop.permute.xlu0 %1724
      %1726 = vrot.lane.b32.xlu0 %v1715, 64
      %v1727 = vpop.permute.xlu0 %1726
      %1728 = vrot.lane.b32.xlu0 %v1717, 64
      %v1729 = vpop.permute.xlu0 %1728
      %1730 = vrot.lane.b32.xlu0 %v1719, 64
      %v1731 = vpop.permute.xlu0 %1730
      %1732 = vrot.lane.b32.xlu0 %v1718, 64
      %v1733 = vpop.permute.xlu0 %1732
      %v1741 = vrot.slane %v1638, 4
      %v1742 = vrot.slane %v1639, 4
      %v1743 = vsel %vm595, %v1741, %v1742
      %v1744 = vrot.slane %v1640, 4
      %v1745 = vsel %vm595, %v1742, %v1744
      %v1746 = vrot.slane %v1641, 4
      %v1747 = vsel %vm595, %v1744, %v1746
      %v1748 = vrot.slane %v1642, 4
      %v1749 = vsel %vm595, %v1746, %v1748
      %v1750 = vrot.slane %v1643, 4
      %v1751 = vsel %vm595, %v1748, %v1750
      %v1752 = vrot.slane %v1644, 4
      %v1753 = vsel %vm595, %v1750, %v1752
      %v1762 = vrot.slane %v1638, 5
      %v1763 = vrot.slane %v1639, 5
      %v1764 = vsel %vm647, %v1762, %v1763
      %v1765 = vrot.slane %v1640, 5
      %v1766 = vsel %vm647, %v1763, %v1765
      %v1767 = vrot.slane %v1641, 5
      %v1768 = vsel %vm647, %v1765, %v1767
      %v1769 = vrot.slane %v1642, 5
      %v1770 = vsel %vm647, %v1767, %v1769
      %v1771 = vrot.slane %v1643, 5
      %v1772 = vsel %vm647, %v1769, %v1771
      %v1773 = vrot.slane %v1644, 5
      %v1774 = vsel %vm647, %v1771, %v1773
      %v1775 = vrot.slane %v1645, 5
      %v1776 = vsel %vm647, %v1773, %v1775
      %1777 = vrot.lane.b32.xlu0 %v1764, 64
      %v1778 = vpop.permute.xlu0 %1777
      %1779 = vrot.lane.b32.xlu0 %v1766, 64
      %v1780 = vpop.permute.xlu0 %1779
      %1781 = vrot.lane.b32.xlu0 %v1768, 64
      %v1782 = vpop.permute.xlu0 %1781
      %1783 = vrot.lane.b32.xlu0 %v1770, 64
      %v1784 = vpop.permute.xlu0 %1783
      %1785 = vrot.lane.b32.xlu0 %v1772, 64
      %v1786 = vpop.permute.xlu0 %1785
      %1787 = vrot.lane.b32.xlu0 %v1774, 64
      %v1788 = vpop.permute.xlu0 %1787
      %1789 = vrot.lane.b32.xlu0 %v1776, 64
      %v1790 = vpop.permute.xlu0 %1789
      %v1798 = vrot.slane %v1638, 6
      %v1799 = vrot.slane %v1639, 6
      %v1800 = vsel %vm699, %v1798, %v1799
      %v1801 = vrot.slane %v1640, 6
      %v1802 = vsel %vm699, %v1799, %v1801
      %v1803 = vrot.slane %v1641, 6
      %v1804 = vsel %vm699, %v1801, %v1803
      %v1805 = vrot.slane %v1642, 6
      %v1806 = vsel %vm699, %v1803, %v1805
      %v1807 = vrot.slane %v1643, 6
      %v1808 = vsel %vm699, %v1805, %v1807
      %v1809 = vrot.slane %v1644, 6
      %v1810 = vsel %vm699, %v1807, %v1809
      %v1811 = vrot.slane %v1645, 6
      %v1812 = vsel %vm699, %v1809, %v1811
      %v1820 = vsel %vm927, %v1638, %v1667
      %v1821 = vsel %vm927, %v1639, %v1669
      %v1822 = vsel %vm927, %v1640, %v1671
      %v1823 = vsel %vm927, %v1641, %v1673
      %v1824 = vsel %vm927, %v1642, %v1675
      %v1825 = vsel %vm927, %v1643, %v1677
      %v1826 = vsel %vm927, %v1644, %v1679
      %v1827 = vsel %vm927, %v1689, %v1721
      %v1828 = vsel %vm927, %v1691, %v1723
      %v1829 = vsel %vm927, %v1693, %v1725
      %v1830 = vsel %vm927, %v1695, %v1727
      %v1831 = vsel %vm927, %v1697, %v1729
      %v1832 = vsel %vm927, %v1699, %v1731
      %v1833 = vsel %vm927, %v1698, %v1733
      %v1834 = vsel %vm927, %v1743, %v1778
      %v1835 = vsel %vm927, %v1745, %v1780
      %v1836 = vsel %vm927, %v1747, %v1782
      %v1837 = vsel %vm927, %v1749, %v1784
      %v1838 = vsel %vm927, %v1751, %v1786
      %v1839 = vsel %vm927, %v1753, %v1788
      %v1840 = vsel %vm927, %v1752, %v1790
      %v1841 = vpack.c.bf16 %v1821, %v1820
      %v1842 = vpack.c.bf16 %v1828, %v1827
      %v1843 = vpack.c.bf16 %v1835, %v1834
      %v1844 = vpack.c.bf16 %v1802, %v1800
      %v1845 = vpack.c.bf16 %v1823, %v1822
      %v1846 = vpack.c.bf16 %v1830, %v1829
      %v1847 = vpack.c.bf16 %v1837, %v1836
      %v1848 = vpack.c.bf16 %v1806, %v1804
      %v1849 = vpack.c.bf16 %v1825, %v1824
      %v1850 = vpack.c.bf16 %v1832, %v1831
      %v1851 = vpack.c.bf16 %v1839, %v1838
      %v1852 = vpack.c.bf16 %v1810, %v1808
      %v1853 = vpack.c.bf16 %v1826, %v1826
      %v1854 = vpack.c.bf16 %v1833, %v1833
      %v1855 = vpack.c.bf16 %v1840, %v1840
      %v1856 = vpack.c.bf16 %v1812, %v1812
      %v1858 = vsel %vm927, %v1844, 0
      %v1861 = vsel %vm927, %v1848, 0
      %v1864 = vsel %vm927, %v1852, 0
      %v1867 = vsel %vm927, %v1856, 0
      %1869 = vmatprep.subr.bf16.mxu0 0
      %1870 = vmatpush1.bf16.msra.mxu0 %v1090
      %1871 = vmatprep.subr.bf16.mxu0 0
      %1872 = vmatpush1.bf16.msra.mxu0 %v1089
      %1873 = vmatprep.subr.bf16.mxu0 0
      %1874 = vmatpush1.bf16.msra.mxu0 %v1088
      %1875 = vmatprep.subr.bf16.mxu0 0
      %1876 = vmatpush1.bf16.msra.mxu0 %v1087
      %1877 = vmatprep.subr.bf16.mxu0 0
      %1878 = vmatpush1.bf16.msra.mxu0 %v1086
      %1879 = vmatprep.subr.bf16.mxu0 0
      %1880 = vmatpush1.bf16.msra.mxu0 %v1085
      %1881 = vmatprep.subr.bf16.mxu0 0
      %1882 = vmatpush1.bf16.msra.mxu0 %v1084
      %1883 = vmatprep.subr.bf16.mxu0 0
      %1884 = vmatpush1.bf16.msra.mxu0 %v1083
      %1885 = vmatprep.subr.bf16.mxu0 0
      %1886 = vmatpush2.bf16.msra.mxu0 %v1098
      %1887 = vmatprep.subr.bf16.mxu0 0
      %1888 = vmatpush2.bf16.msra.mxu0 %v1097
      %1889 = vmatprep.subr.bf16.mxu0 0
      %1890 = vmatpush2.bf16.msra.mxu0 %v1096
      %1891 = vmatprep.subr.bf16.mxu0 0
      %1892 = vmatpush2.bf16.msra.mxu0 %v1095
      %1893 = vmatprep.subr.bf16.mxu0 0
      %1894 = vmatpush2.bf16.msra.mxu0 %v1094
      %1895 = vmatprep.subr.bf16.mxu0 0
      %1896 = vmatpush2.bf16.msra.mxu0 %v1093
      %1897 = vmatprep.subr.bf16.mxu0 0
      %1898 = vmatpush2.bf16.msra.mxu0 %v1092
      %1899 = vmatprep.subr.bf16.mxu0 0
      %1900 = vmatpush2.bf16.msra.mxu0 %v1091
      %1901 = vmatprep.mubr.bf16.mxu0 %v1842
      %1902 = vmatmul.mubr.bf16.gmra.mxu0 %v1841
      %v1903 = vpop.f32.mrf.mxu0
      %v1904 = vadd.f32 %v969, %v1903
      %v1905 = vpop.f32.mrf.mxu0
      %v1906 = vpop.f32.mrf.mxu0
      %v1907 = vadd.f32 %v969, %v1906
      %v1908 = vpop.f32.mrf.mxu0
      %1909 = vmatprep.mubr.bf16.mxu0 %v1846
      %1910 = vmatmul.mubr.bf16.gmra.mxu0 %v1845
      %v1911 = vpop.f32.mrf.mxu0
      %v1912 = vadd.f32 %v969, %v1911
      %v1913 = vpop.f32.mrf.mxu0
      %v1914 = vpop.f32.mrf.mxu0
      %v1915 = vadd.f32 %v969, %v1914
      %v1916 = vpop.f32.mrf.mxu0
      %1917 = vmatprep.mubr.bf16.mxu0 %v1850
      %1918 = vmatmul.mubr.bf16.gmra.mxu0 %v1849
      %v1919 = vpop.f32.mrf.mxu0
      %v1920 = vadd.f32 %v969, %v1919
      %v1921 = vpop.f32.mrf.mxu0
      %v1922 = vpop.f32.mrf.mxu0
      %v1923 = vadd.f32 %v969, %v1922
      %v1924 = vpop.f32.mrf.mxu0
      %1925 = vmatprep.mubr.bf16.mxu0 %v1854
      %1926 = vmatmul.mubr.bf16.gmra.mxu0 %v1853
      %v1927 = vpop.f32.mrf.mxu0
      %v1928 = vadd.f32 %v969, %v1927
      %v1929 = vpop.f32.mrf.mxu0
      %v1930 = vpop.f32.mrf.mxu0
      %v1931 = vpop.f32.mrf.mxu0
      %1932 = vdwg.mxu0
      %1933 = vmatprep.subr.bf16.mxu0 0
      %1934 = vmatpush1.bf16.msra.mxu0 %v1106
      %1935 = vmatprep.subr.bf16.mxu0 0
      %1936 = vmatpush1.bf16.msra.mxu0 %v1105
      %1937 = vmatprep.subr.bf16.mxu0 0
      %1938 = vmatpush1.bf16.msra.mxu0 %v1104
      %1939 = vmatprep.subr.bf16.mxu0 0
      %1940 = vmatpush1.bf16.msra.mxu0 %v1103
      %1941 = vmatprep.subr.bf16.mxu0 0
      %1942 = vmatpush1.bf16.msra.mxu0 %v1102
      %1943 = vmatprep.subr.bf16.mxu0 0
      %1944 = vmatpush1.bf16.msra.mxu0 %v1101
      %1945 = vmatprep.subr.bf16.mxu0 0
      %1946 = vmatpush1.bf16.msra.mxu0 %v1100
      %1947 = vmatprep.subr.bf16.mxu0 0
      %1948 = vmatpush1.bf16.msra.mxu0 %v1099
      %1949 = vmatprep.subr.bf16.mxu0 0
      %1950 = vmatpush2.bf16.msra.mxu0 0
      %1951 = vmatprep.subr.bf16.mxu0 0
      %1952 = vmatpush2.bf16.msra.mxu0 0
      %1953 = vmatprep.subr.bf16.mxu0 0
      %1954 = vmatpush2.bf16.msra.mxu0 0
      %1955 = vmatprep.subr.bf16.mxu0 0
      %1956 = vmatpush2.bf16.msra.mxu0 0
      %1957 = vmatprep.subr.bf16.mxu0 0
      %1958 = vmatpush2.bf16.msra.mxu0 %v1110
      %1959 = vmatprep.subr.bf16.mxu0 0
      %1960 = vmatpush2.bf16.msra.mxu0 %v1109
      %1961 = vmatprep.subr.bf16.mxu0 0
      %1962 = vmatpush2.bf16.msra.mxu0 %v1108
      %1963 = vmatprep.subr.bf16.mxu0 0
      %1964 = vmatpush2.bf16.msra.mxu0 %v1107
      %1965 = vmatprep.mubr.bf16.mxu0 %v1858
      %1966 = vmatmul.mubr.bf16.gmra.mxu0 %v1843
      %v1967 = vpop.f32.mrf.mxu0
      %v1968 = vadd.f32 %v1904, %v1967
      %v1969 = vpop.f32.mrf.mxu0
      %v1970 = vpop.f32.mrf.mxu0
      %v1971 = vadd.f32 %v1907, %v1970
      %v1972 = vpop.f32.mrf.mxu0
      %1973 = vmatprep.mubr.bf16.mxu0 %v1861
      %1974 = vmatmul.mubr.bf16.gmra.mxu0 %v1847
      %v1975 = vpop.f32.mrf.mxu0
      %v1976 = vadd.f32 %v1912, %v1975
      %v1977 = vpop.f32.mrf.mxu0
      %v1978 = vpop.f32.mrf.mxu0
      %v1979 = vadd.f32 %v1915, %v1978
      %v1980 = vpop.f32.mrf.mxu0
      %1981 = vmatprep.mubr.bf16.mxu0 %v1864
      %1982 = vmatmul.mubr.bf16.gmra.mxu0 %v1851
      %v1983 = vpop.f32.mrf.mxu0
      %v1984 = vadd.f32 %v1920, %v1983
      %v1985 = vpop.f32.mrf.mxu0
      %v1986 = vpop.f32.mrf.mxu0
      %v1987 = vadd.f32 %v1923, %v1986
      %v1988 = vpop.f32.mrf.mxu0
      %1989 = vmatprep.mubr.bf16.mxu0 %v1867
      %1990 = vmatmul.mubr.bf16.gmra.mxu0 %v1855
      %v1991 = vpop.f32.mrf.mxu0
      %v1992 = vadd.f32 %v1928, %v1991
      %v1993 = vpop.f32.mrf.mxu0
      %v1994 = vpop.f32.mrf.mxu0
      %v1995 = vpop.f32.mrf.mxu0
      %1996 = vdwg.mxu0
      %v1997 = vmax.f32 %v1968, 0.0
      %v1998 = vmax.f32 %v1971, 0.0
      %v1999 = vmax.f32 %v1976, 0.0
      %v2000 = vmax.f32 %v1979, 0.0
      %v2001 = vmax.f32 %v1984, 0.0
      %v2002 = vmax.f32 %v1987, 0.0
      %v2003 = vmax.f32 %v1992, 0.0
      %v2004 = vsel %vm927, %v1997, 0.0
      %v2005 = vsel %vm927, %v1998, 0.0
      %v2006 = vadd.f32 %v2004, %v2005
      %v2007 = vsel %vm927, %v1999, 0.0
      %v2008 = vadd.f32 %v2006, %v2007
      %v2009 = vsel %vm927, %v2000, 0.0
      %v2010 = vadd.f32 %v2008, %v2009
      %v2011 = vsel %vm927, %v2001, 0.0
      %v2012 = vadd.f32 %v2010, %v2011
      %v2013 = vsel %vm927, %v2002, 0.0
      %v2014 = vadd.f32 %v2012, %v2013
      %v2015 = vsel %vm1297, %v2003, 0.0
      %v2016 = vadd.f32 %v2014, %v2015
      %v2017 = vrot.slane %v2016, 4
      %v2018 = vadd.f32 %v2016, %v2017
      %v2019 = vrot.slane %v2018, 2
      %v2020 = vadd.f32 %v2018, %v2019
      %v2021 = vrot.slane %v2020, 1
      %v2022 = vadd.f32 %v2020, %v2021
      %v2023 = vmul.f32 %v2022, %v1306
      %2024 = vset.pattern.permute.xlu0 2
      %2025 = vperm.xlu0 %2024, %v292
      %v2026 = vpop.permute.xlu0 %2025
      %2028 = vset.pattern.permute.xlu0 2
      %2029 = vperm.xlu0 %2028, %v293
      %v2030 = vpop.permute.xlu0 %2029
      %2032 = vset.pattern.permute.xlu0 2
      %2033 = vperm.xlu0 %2032, %v294
      %v2034 = vpop.permute.xlu0 %2033
      %2036 = vset.pattern.permute.xlu0 2
      %2037 = vperm.xlu0 %2036, %v295
      %v2038 = vpop.permute.xlu0 %2037
      %2040 = vset.pattern.permute.xlu0 2
      %2041 = vperm.xlu0 %2040, %v296
      %v2042 = vpop.permute.xlu0 %2041
      %2044 = vset.pattern.permute.xlu0 2
      %2045 = vperm.xlu0 %2044, %v297
      %v2046 = vpop.permute.xlu0 %2045
      %2048 = vset.pattern.permute.xlu0 2
      %2049 = vperm.xlu0 %2048, %v298
      %v2050 = vpop.permute.xlu0 %2049
      %2052 = vset.pattern.permute.xlu0 2
      %2053 = vperm.xlu0 %2052, %v299
      %v2054 = vpop.permute.xlu0 %2053
      %v2056 = vmul.f32 %v2026, %v410
      %v2057 = vmul.f32 %v2030, %v410
      %v2058 = vmul.f32 %v2034, %v410
      %v2059 = vmul.f32 %v2038, %v410
      %v2060 = vmul.f32 %v2042, %v410
      %v2061 = vmul.f32 %v2046, %v410
      %v2062 = vmul.f32 %v2050, %v410
      %v2063 = vmul.f32 %v2054, %v410
      %v2064 = vmul.f32 %v2026, %v422
      %v2065 = vmul.f32 %v2030, %v422
      %v2066 = vmul.f32 %v2034, %v422
      %v2067 = vmul.f32 %v2038, %v422
      %v2068 = vmul.f32 %v2042, %v422
      %v2069 = vmul.f32 %v2046, %v422
      %v2070 = vmul.f32 %v2050, %v422
      %v2071 = vmul.f32 %v2054, %v422
      %v2080 = vrot.slane %v2064, 1
      %v2081 = vrot.slane %v2065, 1
      %v2082 = vsel %vm439, %v2080, %v2081
      %v2083 = vrot.slane %v2066, 1
      %v2084 = vsel %vm439, %v2081, %v2083
      %v2085 = vrot.slane %v2067, 1
      %v2086 = vsel %vm439, %v2083, %v2085
      %v2087 = vrot.slane %v2068, 1
      %v2088 = vsel %vm439, %v2085, %v2087
      %v2089 = vrot.slane %v2069, 1
      %v2090 = vsel %vm439, %v2087, %v2089
      %v2091 = vrot.slane %v2070, 1
      %v2092 = vsel %vm439, %v2089, %v2091
      %v2093 = vrot.slane %v2071, 1
      %v2094 = vsel %vm439, %v2091, %v2093
      %v2103 = vadd.f32 %v2056, %v2082
      %v2104 = vadd.f32 %v2057, %v2084
      %v2105 = vadd.f32 %v2058, %v2086
      %v2106 = vadd.f32 %v2059, %v2088
      %v2107 = vadd.f32 %v2060, %v2090
      %v2108 = vadd.f32 %v2061, %v2092
      %v2109 = vadd.f32 %v2062, %v2094
      %v2110 = vadd.f32 %v2063, %v2093
      %v2111 = vmul.f32 %v2026, %v474
      %v2112 = vmul.f32 %v2030, %v474
      %v2113 = vmul.f32 %v2034, %v474
      %v2114 = vmul.f32 %v2038, %v474
      %v2115 = vmul.f32 %v2042, %v474
      %v2116 = vmul.f32 %v2046, %v474
      %v2117 = vmul.f32 %v2050, %v474
      %v2118 = vmul.f32 %v2054, %v474
      %v2127 = vrot.slane %v2111, 2
      %v2128 = vrot.slane %v2112, 2
      %v2129 = vsel %vm491, %v2127, %v2128
      %v2130 = vrot.slane %v2113, 2
      %v2131 = vsel %vm491, %v2128, %v2130
      %v2132 = vrot.slane %v2114, 2
      %v2133 = vsel %vm491, %v2130, %v2132
      %v2134 = vrot.slane %v2115, 2
      %v2135 = vsel %vm491, %v2132, %v2134
      %v2136 = vrot.slane %v2116, 2
      %v2137 = vsel %vm491, %v2134, %v2136
      %v2138 = vrot.slane %v2117, 2
      %v2139 = vsel %vm491, %v2136, %v2138
      %v2140 = vrot.slane %v2118, 2
      %v2141 = vsel %vm491, %v2138, %v2140
      %v2150 = vadd.f32 %v2103, %v2129
      %v2151 = vadd.f32 %v2104, %v2131
      %v2152 = vadd.f32 %v2105, %v2133
      %v2153 = vadd.f32 %v2106, %v2135
      %v2154 = vadd.f32 %v2107, %v2137
      %v2155 = vadd.f32 %v2108, %v2139
      %v2156 = vadd.f32 %v2109, %v2141
      %v2157 = vadd.f32 %v2110, %v2140
      %v2158 = vmul.f32 %v2026, %v526
      %v2159 = vmul.f32 %v2030, %v526
      %v2160 = vmul.f32 %v2034, %v526
      %v2161 = vmul.f32 %v2038, %v526
      %v2162 = vmul.f32 %v2042, %v526
      %v2163 = vmul.f32 %v2046, %v526
      %v2164 = vmul.f32 %v2050, %v526
      %v2165 = vmul.f32 %v2054, %v526
      %v2174 = vrot.slane %v2158, 3
      %v2175 = vrot.slane %v2159, 3
      %v2176 = vsel %vm543, %v2174, %v2175
      %v2177 = vrot.slane %v2160, 3
      %v2178 = vsel %vm543, %v2175, %v2177
      %v2179 = vrot.slane %v2161, 3
      %v2180 = vsel %vm543, %v2177, %v2179
      %v2181 = vrot.slane %v2162, 3
      %v2182 = vsel %vm543, %v2179, %v2181
      %v2183 = vrot.slane %v2163, 3
      %v2184 = vsel %vm543, %v2181, %v2183
      %v2185 = vrot.slane %v2164, 3
      %v2186 = vsel %vm543, %v2183, %v2185
      %v2187 = vrot.slane %v2165, 3
      %v2188 = vsel %vm543, %v2185, %v2187
      %v2197 = vadd.f32 %v2150, %v2176
      %v2198 = vadd.f32 %v2151, %v2178
      %v2199 = vadd.f32 %v2152, %v2180
      %v2200 = vadd.f32 %v2153, %v2182
      %v2201 = vadd.f32 %v2154, %v2184
      %v2202 = vadd.f32 %v2155, %v2186
      %v2203 = vadd.f32 %v2156, %v2188
      %v2204 = vadd.f32 %v2157, %v2187
      %v2205 = vmul.f32 %v2026, %v578
      %v2206 = vmul.f32 %v2030, %v578
      %v2207 = vmul.f32 %v2034, %v578
      %v2208 = vmul.f32 %v2038, %v578
      %v2209 = vmul.f32 %v2042, %v578
      %v2210 = vmul.f32 %v2046, %v578
      %v2211 = vmul.f32 %v2050, %v578
      %v2212 = vmul.f32 %v2054, %v578
      %v2221 = vrot.slane %v2205, 4
      %v2222 = vrot.slane %v2206, 4
      %v2223 = vsel %vm595, %v2221, %v2222
      %v2224 = vrot.slane %v2207, 4
      %v2225 = vsel %vm595, %v2222, %v2224
      %v2226 = vrot.slane %v2208, 4
      %v2227 = vsel %vm595, %v2224, %v2226
      %v2228 = vrot.slane %v2209, 4
      %v2229 = vsel %vm595, %v2226, %v2228
      %v2230 = vrot.slane %v2210, 4
      %v2231 = vsel %vm595, %v2228, %v2230
      %v2232 = vrot.slane %v2211, 4
      %v2233 = vsel %vm595, %v2230, %v2232
      %v2234 = vrot.slane %v2212, 4
      %v2235 = vsel %vm595, %v2232, %v2234
      %v2244 = vadd.f32 %v2197, %v2223
      %v2245 = vadd.f32 %v2198, %v2225
      %v2246 = vadd.f32 %v2199, %v2227
      %v2247 = vadd.f32 %v2200, %v2229
      %v2248 = vadd.f32 %v2201, %v2231
      %v2249 = vadd.f32 %v2202, %v2233
      %v2250 = vadd.f32 %v2203, %v2235
      %v2251 = vadd.f32 %v2204, %v2234
      %v2252 = vmul.f32 %v2026, %v630
      %v2253 = vmul.f32 %v2030, %v630
      %v2254 = vmul.f32 %v2034, %v630
      %v2255 = vmul.f32 %v2038, %v630
      %v2256 = vmul.f32 %v2042, %v630
      %v2257 = vmul.f32 %v2046, %v630
      %v2258 = vmul.f32 %v2050, %v630
      %v2259 = vmul.f32 %v2054, %v630
      %v2268 = vrot.slane %v2252, 5
      %v2269 = vrot.slane %v2253, 5
      %v2270 = vsel %vm647, %v2268, %v2269
      %v2271 = vrot.slane %v2254, 5
      %v2272 = vsel %vm647, %v2269, %v2271
      %v2273 = vrot.slane %v2255, 5
      %v2274 = vsel %vm647, %v2271, %v2273
      %v2275 = vrot.slane %v2256, 5
      %v2276 = vsel %vm647, %v2273, %v2275
      %v2277 = vrot.slane %v2257, 5
      %v2278 = vsel %vm647, %v2275, %v2277
      %v2279 = vrot.slane %v2258, 5
      %v2280 = vsel %vm647, %v2277, %v2279
      %v2281 = vrot.slane %v2259, 5
      %v2282 = vsel %vm647, %v2279, %v2281
      %v2291 = vadd.f32 %v2244, %v2270
      %v2292 = vadd.f32 %v2245, %v2272
      %v2293 = vadd.f32 %v2246, %v2274
      %v2294 = vadd.f32 %v2247, %v2276
      %v2295 = vadd.f32 %v2248, %v2278
      %v2296 = vadd.f32 %v2249, %v2280
      %v2297 = vadd.f32 %v2250, %v2282
      %v2298 = vadd.f32 %v2251, %v2281
      %v2299 = vmul.f32 %v2026, %v682
      %v2300 = vmul.f32 %v2030, %v682
      %v2301 = vmul.f32 %v2034, %v682
      %v2302 = vmul.f32 %v2038, %v682
      %v2303 = vmul.f32 %v2042, %v682
      %v2304 = vmul.f32 %v2046, %v682
      %v2305 = vmul.f32 %v2050, %v682
      %v2306 = vmul.f32 %v2054, %v682
      %v2315 = vrot.slane %v2299, 6
      %v2316 = vrot.slane %v2300, 6
      %v2317 = vsel %vm699, %v2315, %v2316
      %v2318 = vrot.slane %v2301, 6
      %v2319 = vsel %vm699, %v2316, %v2318
      %v2320 = vrot.slane %v2302, 6
      %v2321 = vsel %vm699, %v2318, %v2320
      %v2322 = vrot.slane %v2303, 6
      %v2323 = vsel %vm699, %v2320, %v2322
      %v2324 = vrot.slane %v2304, 6
      %v2325 = vsel %vm699, %v2322, %v2324
      %v2326 = vrot.slane %v2305, 6
      %v2327 = vsel %vm699, %v2324, %v2326
      %v2328 = vrot.slane %v2306, 6
      %v2329 = vsel %vm699, %v2326, %v2328
      %v2338 = vadd.f32 %v2291, %v2317
      %v2339 = vadd.f32 %v2292, %v2319
      %v2340 = vadd.f32 %v2293, %v2321
      %v2341 = vadd.f32 %v2294, %v2323
      %v2342 = vadd.f32 %v2295, %v2325
      %v2343 = vadd.f32 %v2296, %v2327
      %v2344 = vadd.f32 %v2297, %v2329
      %v2345 = vadd.f32 %v2298, %v2328
      %v2346 = vadd.f32 %v2338, %v735
      %v2347 = vadd.f32 %v2339, %v735
      %v2348 = vadd.f32 %v2340, %v735
      %v2349 = vadd.f32 %v2341, %v735
      %v2350 = vadd.f32 %v2342, %v735
      %v2351 = vadd.f32 %v2343, %v735
      %v2352 = vadd.f32 %v2344, %v735
      %v2353 = vadd.f32 %v2345, %v735
      %v2354 = vmax.f32 %v2346, 0.0
      %v2355 = vmax.f32 %v2347, 0.0
      %v2356 = vmax.f32 %v2348, 0.0
      %v2357 = vmax.f32 %v2349, 0.0
      %v2358 = vmax.f32 %v2350, 0.0
      %v2359 = vmax.f32 %v2351, 0.0
      %v2360 = vmax.f32 %v2352, 0.0
      %v2361 = vmax.f32 %v2353, 0.0
      %v2369 = vrot.slane %v2354, 1
      %v2370 = vrot.slane %v2355, 1
      %v2371 = vsel %vm439, %v2369, %v2370
      %v2372 = vrot.slane %v2356, 1
      %v2373 = vsel %vm439, %v2370, %v2372
      %v2374 = vrot.slane %v2357, 1
      %v2375 = vsel %vm439, %v2372, %v2374
      %v2376 = vrot.slane %v2358, 1
      %v2377 = vsel %vm439, %v2374, %v2376
      %v2378 = vrot.slane %v2359, 1
      %v2379 = vsel %vm439, %v2376, %v2378
      %v2380 = vrot.slane %v2360, 1
      %v2381 = vsel %vm439, %v2378, %v2380
      %2382 = vrot.lane.b32.xlu0 %v2371, 64
      %v2383 = vpop.permute.xlu0 %2382
      %2384 = vrot.lane.b32.xlu0 %v2373, 64
      %v2385 = vpop.permute.xlu0 %2384
      %2386 = vrot.lane.b32.xlu0 %v2375, 64
      %v2387 = vpop.permute.xlu0 %2386
      %2388 = vrot.lane.b32.xlu0 %v2377, 64
      %v2389 = vpop.permute.xlu0 %2388
      %2390 = vrot.lane.b32.xlu0 %v2379, 64
      %v2391 = vpop.permute.xlu0 %2390
      %2392 = vrot.lane.b32.xlu0 %v2381, 64
      %v2393 = vpop.permute.xlu0 %2392
      %2394 = vrot.lane.b32.xlu0 %v2380, 64
      %v2395 = vpop.permute.xlu0 %2394
      %v2403 = vrot.slane %v2354, 2
      %v2404 = vrot.slane %v2355, 2
      %v2405 = vsel %vm491, %v2403, %v2404
      %v2406 = vrot.slane %v2356, 2
      %v2407 = vsel %vm491, %v2404, %v2406
      %v2408 = vrot.slane %v2357, 2
      %v2409 = vsel %vm491, %v2406, %v2408
      %v2410 = vrot.slane %v2358, 2
      %v2411 = vsel %vm491, %v2408, %v2410
      %v2412 = vrot.slane %v2359, 2
      %v2413 = vsel %vm491, %v2410, %v2412
      %v2414 = vrot.slane %v2360, 2
      %v2415 = vsel %vm491, %v2412, %v2414
      %v2423 = vrot.slane %v2354, 3
      %v2424 = vrot.slane %v2355, 3
      %v2425 = vsel %vm543, %v2423, %v2424
      %v2426 = vrot.slane %v2356, 3
      %v2427 = vsel %vm543, %v2424, %v2426
      %v2428 = vrot.slane %v2357, 3
      %v2429 = vsel %vm543, %v2426, %v2428
      %v2430 = vrot.slane %v2358, 3
      %v2431 = vsel %vm543, %v2428, %v2430
      %v2432 = vrot.slane %v2359, 3
      %v2433 = vsel %vm543, %v2430, %v2432
      %v2434 = vrot.slane %v2360, 3
      %v2435 = vsel %vm543, %v2432, %v2434
      %2436 = vrot.lane.b32.xlu0 %v2425, 64
      %v2437 = vpop.permute.xlu0 %2436
      %2438 = vrot.lane.b32.xlu0 %v2427, 64
      %v2439 = vpop.permute.xlu0 %2438
      %2440 = vrot.lane.b32.xlu0 %v2429, 64
      %v2441 = vpop.permute.xlu0 %2440
      %2442 = vrot.lane.b32.xlu0 %v2431, 64
      %v2443 = vpop.permute.xlu0 %2442
      %2444 = vrot.lane.b32.xlu0 %v2433, 64
      %v2445 = vpop.permute.xlu0 %2444
      %2446 = vrot.lane.b32.xlu0 %v2435, 64
      %v2447 = vpop.permute.xlu0 %2446
      %2448 = vrot.lane.b32.xlu0 %v2434, 64
      %v2449 = vpop.permute.xlu0 %2448
      %v2457 = vrot.slane %v2354, 4
      %v2458 = vrot.slane %v2355, 4
      %v2459 = vsel %vm595, %v2457, %v2458
      %v2460 = vrot.slane %v2356, 4
      %v2461 = vsel %vm595, %v2458, %v2460
      %v2462 = vrot.slane %v2357, 4
      %v2463 = vsel %vm595, %v2460, %v2462
      %v2464 = vrot.slane %v2358, 4
      %v2465 = vsel %vm595, %v2462, %v2464
      %v2466 = vrot.slane %v2359, 4
      %v2467 = vsel %vm595, %v2464, %v2466
      %v2468 = vrot.slane %v2360, 4
      %v2469 = vsel %vm595, %v2466, %v2468
      %v2478 = vrot.slane %v2354, 5
      %v2479 = vrot.slane %v2355, 5
      %v2480 = vsel %vm647, %v2478, %v2479
      %v2481 = vrot.slane %v2356, 5
      %v2482 = vsel %vm647, %v2479, %v2481
      %v2483 = vrot.slane %v2357, 5
      %v2484 = vsel %vm647, %v2481, %v2483
      %v2485 = vrot.slane %v2358, 5
      %v2486 = vsel %vm647, %v2483, %v2485
      %v2487 = vrot.slane %v2359, 5
      %v2488 = vsel %vm647, %v2485, %v2487
      %v2489 = vrot.slane %v2360, 5
      %v2490 = vsel %vm647, %v2487, %v2489
      %v2491 = vrot.slane %v2361, 5
      %v2492 = vsel %vm647, %v2489, %v2491
      %2493 = vrot.lane.b32.xlu0 %v2480, 64
      %v2494 = vpop.permute.xlu0 %2493
      %2495 = vrot.lane.b32.xlu0 %v2482, 64
      %v2496 = vpop.permute.xlu0 %2495
      %2497 = vrot.lane.b32.xlu0 %v2484, 64
      %v2498 = vpop.permute.xlu0 %2497
      %2499 = vrot.lane.b32.xlu0 %v2486, 64
      %v2500 = vpop.permute.xlu0 %2499
      %2501 = vrot.lane.b32.xlu0 %v2488, 64
      %v2502 = vpop.permute.xlu0 %2501
      %2503 = vrot.lane.b32.xlu0 %v2490, 64
      %v2504 = vpop.permute.xlu0 %2503
      %2505 = vrot.lane.b32.xlu0 %v2492, 64
      %v2506 = vpop.permute.xlu0 %2505
      %v2514 = vrot.slane %v2354, 6
      %v2515 = vrot.slane %v2355, 6
      %v2516 = vsel %vm699, %v2514, %v2515
      %v2517 = vrot.slane %v2356, 6
      %v2518 = vsel %vm699, %v2515, %v2517
      %v2519 = vrot.slane %v2357, 6
      %v2520 = vsel %vm699, %v2517, %v2519
      %v2521 = vrot.slane %v2358, 6
      %v2522 = vsel %vm699, %v2519, %v2521
      %v2523 = vrot.slane %v2359, 6
      %v2524 = vsel %vm699, %v2521, %v2523
      %v2525 = vrot.slane %v2360, 6
      %v2526 = vsel %vm699, %v2523, %v2525
      %v2527 = vrot.slane %v2361, 6
      %v2528 = vsel %vm699, %v2525, %v2527
      %v2536 = vsel %vm927, %v2354, %v2383
      %v2537 = vsel %vm927, %v2355, %v2385
      %v2538 = vsel %vm927, %v2356, %v2387
      %v2539 = vsel %vm927, %v2357, %v2389
      %v2540 = vsel %vm927, %v2358, %v2391
      %v2541 = vsel %vm927, %v2359, %v2393
      %v2542 = vsel %vm927, %v2360, %v2395
      %v2543 = vsel %vm927, %v2405, %v2437
      %v2544 = vsel %vm927, %v2407, %v2439
      %v2545 = vsel %vm927, %v2409, %v2441
      %v2546 = vsel %vm927, %v2411, %v2443
      %v2547 = vsel %vm927, %v2413, %v2445
      %v2548 = vsel %vm927, %v2415, %v2447
      %v2549 = vsel %vm927, %v2414, %v2449
      %v2550 = vsel %vm927, %v2459, %v2494
      %v2551 = vsel %vm927, %v2461, %v2496
      %v2552 = vsel %vm927, %v2463, %v2498
      %v2553 = vsel %vm927, %v2465, %v2500
      %v2554 = vsel %vm927, %v2467, %v2502
      %v2555 = vsel %vm927, %v2469, %v2504
      %v2556 = vsel %vm927, %v2468, %v2506
      %v2557 = vpack.c.bf16 %v2537, %v2536
      %v2558 = vpack.c.bf16 %v2544, %v2543
      %v2559 = vpack.c.bf16 %v2551, %v2550
      %v2560 = vpack.c.bf16 %v2518, %v2516
      %v2561 = vpack.c.bf16 %v2539, %v2538
      %v2562 = vpack.c.bf16 %v2546, %v2545
      %v2563 = vpack.c.bf16 %v2553, %v2552
      %v2564 = vpack.c.bf16 %v2522, %v2520
      %v2565 = vpack.c.bf16 %v2541, %v2540
      %v2566 = vpack.c.bf16 %v2548, %v2547
      %v2567 = vpack.c.bf16 %v2555, %v2554
      %v2568 = vpack.c.bf16 %v2526, %v2524
      %v2569 = vpack.c.bf16 %v2542, %v2542
      %v2570 = vpack.c.bf16 %v2549, %v2549
      %v2571 = vpack.c.bf16 %v2556, %v2556
      %v2572 = vpack.c.bf16 %v2528, %v2528
      %v2574 = vsel %vm927, %v2560, 0
      %v2577 = vsel %vm927, %v2564, 0
      %v2580 = vsel %vm927, %v2568, 0
      %v2583 = vsel %vm927, %v2572, 0
      %2585 = vmatprep.subr.bf16.mxu0 0
      %2586 = vmatpush1.bf16.msra.mxu0 %v1090
      %2587 = vmatprep.subr.bf16.mxu0 0
      %2588 = vmatpush1.bf16.msra.mxu0 %v1089
      %2589 = vmatprep.subr.bf16.mxu0 0
      %2590 = vmatpush1.bf16.msra.mxu0 %v1088
      %2591 = vmatprep.subr.bf16.mxu0 0
      %2592 = vmatpush1.bf16.msra.mxu0 %v1087
      %2593 = vmatprep.subr.bf16.mxu0 0
      %2594 = vmatpush1.bf16.msra.mxu0 %v1086
      %2595 = vmatprep.subr.bf16.mxu0 0
      %2596 = vmatpush1.bf16.msra.mxu0 %v1085
      %2597 = vmatprep.subr.bf16.mxu0 0
      %2598 = vmatpush1.bf16.msra.mxu0 %v1084
      %2599 = vmatprep.subr.bf16.mxu0 0
      %2600 = vmatpush1.bf16.msra.mxu0 %v1083
      %2601 = vmatprep.subr.bf16.mxu0 0
      %2602 = vmatpush2.bf16.msra.mxu0 %v1098
      %2603 = vmatprep.subr.bf16.mxu0 0
      %2604 = vmatpush2.bf16.msra.mxu0 %v1097
      %2605 = vmatprep.subr.bf16.mxu0 0
      %2606 = vmatpush2.bf16.msra.mxu0 %v1096
      %2607 = vmatprep.subr.bf16.mxu0 0
      %2608 = vmatpush2.bf16.msra.mxu0 %v1095
      %2609 = vmatprep.subr.bf16.mxu0 0
      %2610 = vmatpush2.bf16.msra.mxu0 %v1094
      %2611 = vmatprep.subr.bf16.mxu0 0
      %2612 = vmatpush2.bf16.msra.mxu0 %v1093
      %2613 = vmatprep.subr.bf16.mxu0 0
      %2614 = vmatpush2.bf16.msra.mxu0 %v1092
      %2615 = vmatprep.subr.bf16.mxu0 0
      %2616 = vmatpush2.bf16.msra.mxu0 %v1091
      %2617 = vmatprep.mubr.bf16.mxu0 %v2558
      %2618 = vmatmul.mubr.bf16.gmra.mxu0 %v2557
      %v2619 = vpop.f32.mrf.mxu0
      %v2620 = vadd.f32 %v969, %v2619
      %v2621 = vpop.f32.mrf.mxu0
      %v2622 = vpop.f32.mrf.mxu0
      %v2623 = vadd.f32 %v969, %v2622
      %v2624 = vpop.f32.mrf.mxu0
      %2625 = vmatprep.mubr.bf16.mxu0 %v2562
      %2626 = vmatmul.mubr.bf16.gmra.mxu0 %v2561
      %v2627 = vpop.f32.mrf.mxu0
      %v2628 = vadd.f32 %v969, %v2627
      %v2629 = vpop.f32.mrf.mxu0
      %v2630 = vpop.f32.mrf.mxu0
      %v2631 = vadd.f32 %v969, %v2630
      %v2632 = vpop.f32.mrf.mxu0
      %2633 = vmatprep.mubr.bf16.mxu0 %v2566
      %2634 = vmatmul.mubr.bf16.gmra.mxu0 %v2565
      %v2635 = vpop.f32.mrf.mxu0
      %v2636 = vadd.f32 %v969, %v2635
      %v2637 = vpop.f32.mrf.mxu0
      %v2638 = vpop.f32.mrf.mxu0
      %v2639 = vadd.f32 %v969, %v2638
      %v2640 = vpop.f32.mrf.mxu0
      %2641 = vmatprep.mubr.bf16.mxu0 %v2570
      %2642 = vmatmul.mubr.bf16.gmra.mxu0 %v2569
      %v2643 = vpop.f32.mrf.mxu0
      %v2644 = vadd.f32 %v969, %v2643
      %v2645 = vpop.f32.mrf.mxu0
      %v2646 = vpop.f32.mrf.mxu0
      %v2647 = vpop.f32.mrf.mxu0
      %2648 = vdwg.mxu0
      %2649 = vmatprep.subr.bf16.mxu0 0
      %2650 = vmatpush1.bf16.msra.mxu0 %v1106
      %2651 = vmatprep.subr.bf16.mxu0 0
      %2652 = vmatpush1.bf16.msra.mxu0 %v1105
      %2653 = vmatprep.subr.bf16.mxu0 0
      %2654 = vmatpush1.bf16.msra.mxu0 %v1104
      %2655 = vmatprep.subr.bf16.mxu0 0
      %2656 = vmatpush1.bf16.msra.mxu0 %v1103
      %2657 = vmatprep.subr.bf16.mxu0 0
      %2658 = vmatpush1.bf16.msra.mxu0 %v1102
      %2659 = vmatprep.subr.bf16.mxu0 0
      %2660 = vmatpush1.bf16.msra.mxu0 %v1101
      %2661 = vmatprep.subr.bf16.mxu0 0
      %2662 = vmatpush1.bf16.msra.mxu0 %v1100
      %2663 = vmatprep.subr.bf16.mxu0 0
      %2664 = vmatpush1.bf16.msra.mxu0 %v1099
      %2665 = vmatprep.subr.bf16.mxu0 0
      %2666 = vmatpush2.bf16.msra.mxu0 0
      %2667 = vmatprep.subr.bf16.mxu0 0
      %2668 = vmatpush2.bf16.msra.mxu0 0
      %2669 = vmatprep.subr.bf16.mxu0 0
      %2670 = vmatpush2.bf16.msra.mxu0 0
      %2671 = vmatprep.subr.bf16.mxu0 0
      %2672 = vmatpush2.bf16.msra.mxu0 0
      %2673 = vmatprep.subr.bf16.mxu0 0
      %2674 = vmatpush2.bf16.msra.mxu0 %v1110
      %2675 = vmatprep.subr.bf16.mxu0 0
      %2676 = vmatpush2.bf16.msra.mxu0 %v1109
      %2677 = vmatprep.subr.bf16.mxu0 0
      %2678 = vmatpush2.bf16.msra.mxu0 %v1108
      %2679 = vmatprep.subr.bf16.mxu0 0
      %2680 = vmatpush2.bf16.msra.mxu0 %v1107
      %2681 = vmatprep.mubr.bf16.mxu0 %v2574
      %2682 = vmatmul.mubr.bf16.gmra.mxu0 %v2559
      %v2683 = vpop.f32.mrf.mxu0
      %v2684 = vadd.f32 %v2620, %v2683
      %v2685 = vpop.f32.mrf.mxu0
      %v2686 = vpop.f32.mrf.mxu0
      %v2687 = vadd.f32 %v2623, %v2686
      %v2688 = vpop.f32.mrf.mxu0
      %2689 = vmatprep.mubr.bf16.mxu0 %v2577
      %2690 = vmatmul.mubr.bf16.gmra.mxu0 %v2563
      %v2691 = vpop.f32.mrf.mxu0
      %v2692 = vadd.f32 %v2628, %v2691
      %v2693 = vpop.f32.mrf.mxu0
      %v2694 = vpop.f32.mrf.mxu0
      %v2695 = vadd.f32 %v2631, %v2694
      %v2696 = vpop.f32.mrf.mxu0
      %2697 = vmatprep.mubr.bf16.mxu0 %v2580
      %2698 = vmatmul.mubr.bf16.gmra.mxu0 %v2567
      %v2699 = vpop.f32.mrf.mxu0
      %v2700 = vadd.f32 %v2636, %v2699
      %v2701 = vpop.f32.mrf.mxu0
      %v2702 = vpop.f32.mrf.mxu0
      %v2703 = vadd.f32 %v2639, %v2702
      %v2704 = vpop.f32.mrf.mxu0
      %2705 = vmatprep.mubr.bf16.mxu0 %v2583
      %2706 = vmatmul.mubr.bf16.gmra.mxu0 %v2571
      %v2707 = vpop.f32.mrf.mxu0
      %v2708 = vadd.f32 %v2644, %v2707
      %v2709 = vpop.f32.mrf.mxu0
      %v2710 = vpop.f32.mrf.mxu0
      %v2711 = vpop.f32.mrf.mxu0
      %2712 = vdwg.mxu0
      %v2713 = vmax.f32 %v2684, 0.0
      %v2714 = vmax.f32 %v2687, 0.0
      %v2715 = vmax.f32 %v2692, 0.0
      %v2716 = vmax.f32 %v2695, 0.0
      %v2717 = vmax.f32 %v2700, 0.0
      %v2718 = vmax.f32 %v2703, 0.0
      %v2719 = vmax.f32 %v2708, 0.0
      %v2720 = vsel %vm927, %v2713, 0.0
      %v2721 = vsel %vm927, %v2714, 0.0
      %v2722 = vadd.f32 %v2720, %v2721
      %v2723 = vsel %vm927, %v2715, 0.0
      %v2724 = vadd.f32 %v2722, %v2723
      %v2725 = vsel %vm927, %v2716, 0.0
      %v2726 = vadd.f32 %v2724, %v2725
      %v2727 = vsel %vm927, %v2717, 0.0
      %v2728 = vadd.f32 %v2726, %v2727
      %v2729 = vsel %vm927, %v2718, 0.0
      %v2730 = vadd.f32 %v2728, %v2729
      %v2731 = vsel %vm1297, %v2719, 0.0
      %v2732 = vadd.f32 %v2730, %v2731
      %v2733 = vrot.slane %v2732, 4
      %v2734 = vadd.f32 %v2732, %v2733
      %v2735 = vrot.slane %v2734, 2
      %v2736 = vadd.f32 %v2734, %v2735
      %v2737 = vrot.slane %v2736, 1
      %v2738 = vadd.f32 %v2736, %v2737
      %v2739 = vmul.f32 %v2738, %v1306
      %2740 = vset.pattern.permute.xlu0 3
      %2741 = vperm.xlu0 %2740, %v292
      %v2742 = vpop.permute.xlu0 %2741
      %2744 = vset.pattern.permute.xlu0 3
      %2745 = vperm.xlu0 %2744, %v293
      %v2746 = vpop.permute.xlu0 %2745
      %2748 = vset.pattern.permute.xlu0 3
      %2749 = vperm.xlu0 %2748, %v294
      %v2750 = vpop.permute.xlu0 %2749
      %2752 = vset.pattern.permute.xlu0 3
      %2753 = vperm.xlu0 %2752, %v295
      %v2754 = vpop.permute.xlu0 %2753
      %2756 = vset.pattern.permute.xlu0 3
      %2757 = vperm.xlu0 %2756, %v296
      %v2758 = vpop.permute.xlu0 %2757
      %2760 = vset.pattern.permute.xlu0 3
      %2761 = vperm.xlu0 %2760, %v297
      %v2762 = vpop.permute.xlu0 %2761
      %2764 = vset.pattern.permute.xlu0 3
      %2765 = vperm.xlu0 %2764, %v298
      %v2766 = vpop.permute.xlu0 %2765
      %2768 = vset.pattern.permute.xlu0 3
      %2769 = vperm.xlu0 %2768, %v299
      %v2770 = vpop.permute.xlu0 %2769
      %v2772 = vmul.f32 %v2742, %v410
      %v2773 = vmul.f32 %v2746, %v410
      %v2774 = vmul.f32 %v2750, %v410
      %v2775 = vmul.f32 %v2754, %v410
      %v2776 = vmul.f32 %v2758, %v410
      %v2777 = vmul.f32 %v2762, %v410
      %v2778 = vmul.f32 %v2766, %v410
      %v2779 = vmul.f32 %v2770, %v410
      %v2780 = vmul.f32 %v2742, %v422
      %v2781 = vmul.f32 %v2746, %v422
      %v2782 = vmul.f32 %v2750, %v422
      %v2783 = vmul.f32 %v2754, %v422
      %v2784 = vmul.f32 %v2758, %v422
      %v2785 = vmul.f32 %v2762, %v422
      %v2786 = vmul.f32 %v2766, %v422
      %v2787 = vmul.f32 %v2770, %v422
      %v2796 = vrot.slane %v2780, 1
      %v2797 = vrot.slane %v2781, 1
      %v2798 = vsel %vm439, %v2796, %v2797
      %v2799 = vrot.slane %v2782, 1
      %v2800 = vsel %vm439, %v2797, %v2799
      %v2801 = vrot.slane %v2783, 1
      %v2802 = vsel %vm439, %v2799, %v2801
      %v2803 = vrot.slane %v2784, 1
      %v2804 = vsel %vm439, %v2801, %v2803
      %v2805 = vrot.slane %v2785, 1
      %v2806 = vsel %vm439, %v2803, %v2805
      %v2807 = vrot.slane %v2786, 1
      %v2808 = vsel %vm439, %v2805, %v2807
      %v2809 = vrot.slane %v2787, 1
      %v2810 = vsel %vm439, %v2807, %v2809
      %v2819 = vadd.f32 %v2772, %v2798
      %v2820 = vadd.f32 %v2773, %v2800
      %v2821 = vadd.f32 %v2774, %v2802
      %v2822 = vadd.f32 %v2775, %v2804
      %v2823 = vadd.f32 %v2776, %v2806
      %v2824 = vadd.f32 %v2777, %v2808
      %v2825 = vadd.f32 %v2778, %v2810
      %v2826 = vadd.f32 %v2779, %v2809
      %v2827 = vmul.f32 %v2742, %v474
      %v2828 = vmul.f32 %v2746, %v474
      %v2829 = vmul.f32 %v2750, %v474
      %v2830 = vmul.f32 %v2754, %v474
      %v2831 = vmul.f32 %v2758, %v474
      %v2832 = vmul.f32 %v2762, %v474
      %v2833 = vmul.f32 %v2766, %v474
      %v2834 = vmul.f32 %v2770, %v474
      %v2843 = vrot.slane %v2827, 2
      %v2844 = vrot.slane %v2828, 2
      %v2845 = vsel %vm491, %v2843, %v2844
      %v2846 = vrot.slane %v2829, 2
      %v2847 = vsel %vm491, %v2844, %v2846
      %v2848 = vrot.slane %v2830, 2
      %v2849 = vsel %vm491, %v2846, %v2848
      %v2850 = vrot.slane %v2831, 2
      %v2851 = vsel %vm491, %v2848, %v2850
      %v2852 = vrot.slane %v2832, 2
      %v2853 = vsel %vm491, %v2850, %v2852
      %v2854 = vrot.slane %v2833, 2
      %v2855 = vsel %vm491, %v2852, %v2854
      %v2856 = vrot.slane %v2834, 2
      %v2857 = vsel %vm491, %v2854, %v2856
      %v2866 = vadd.f32 %v2819, %v2845
      %v2867 = vadd.f32 %v2820, %v2847
      %v2868 = vadd.f32 %v2821, %v2849
      %v2869 = vadd.f32 %v2822, %v2851
      %v2870 = vadd.f32 %v2823, %v2853
      %v2871 = vadd.f32 %v2824, %v2855
      %v2872 = vadd.f32 %v2825, %v2857
      %v2873 = vadd.f32 %v2826, %v2856
      %v2874 = vmul.f32 %v2742, %v526
      %v2875 = vmul.f32 %v2746, %v526
      %v2876 = vmul.f32 %v2750, %v526
      %v2877 = vmul.f32 %v2754, %v526
      %v2878 = vmul.f32 %v2758, %v526
      %v2879 = vmul.f32 %v2762, %v526
      %v2880 = vmul.f32 %v2766, %v526
      %v2881 = vmul.f32 %v2770, %v526
      %v2890 = vrot.slane %v2874, 3
      %v2891 = vrot.slane %v2875, 3
      %v2892 = vsel %vm543, %v2890, %v2891
      %v2893 = vrot.slane %v2876, 3
      %v2894 = vsel %vm543, %v2891, %v2893
      %v2895 = vrot.slane %v2877, 3
      %v2896 = vsel %vm543, %v2893, %v2895
      %v2897 = vrot.slane %v2878, 3
      %v2898 = vsel %vm543, %v2895, %v2897
      %v2899 = vrot.slane %v2879, 3
      %v2900 = vsel %vm543, %v2897, %v2899
      %v2901 = vrot.slane %v2880, 3
      %v2902 = vsel %vm543, %v2899, %v2901
      %v2903 = vrot.slane %v2881, 3
      %v2904 = vsel %vm543, %v2901, %v2903
      %v2913 = vadd.f32 %v2866, %v2892
      %v2914 = vadd.f32 %v2867, %v2894
      %v2915 = vadd.f32 %v2868, %v2896
      %v2916 = vadd.f32 %v2869, %v2898
      %v2917 = vadd.f32 %v2870, %v2900
      %v2918 = vadd.f32 %v2871, %v2902
      %v2919 = vadd.f32 %v2872, %v2904
      %v2920 = vadd.f32 %v2873, %v2903
      %v2921 = vmul.f32 %v2742, %v578
      %v2922 = vmul.f32 %v2746, %v578
      %v2923 = vmul.f32 %v2750, %v578
      %v2924 = vmul.f32 %v2754, %v578
      %v2925 = vmul.f32 %v2758, %v578
      %v2926 = vmul.f32 %v2762, %v578
      %v2927 = vmul.f32 %v2766, %v578
      %v2928 = vmul.f32 %v2770, %v578
      %v2937 = vrot.slane %v2921, 4
      %v2938 = vrot.slane %v2922, 4
      %v2939 = vsel %vm595, %v2937, %v2938
      %v2940 = vrot.slane %v2923, 4
      %v2941 = vsel %vm595, %v2938, %v2940
      %v2942 = vrot.slane %v2924, 4
      %v2943 = vsel %vm595, %v2940, %v2942
      %v2944 = vrot.slane %v2925, 4
      %v2945 = vsel %vm595, %v2942, %v2944
      %v2946 = vrot.slane %v2926, 4
      %v2947 = vsel %vm595, %v2944, %v2946
      %v2948 = vrot.slane %v2927, 4
      %v2949 = vsel %vm595, %v2946, %v2948
      %v2950 = vrot.slane %v2928, 4
      %v2951 = vsel %vm595, %v2948, %v2950
      %v2960 = vadd.f32 %v2913, %v2939
      %v2961 = vadd.f32 %v2914, %v2941
      %v2962 = vadd.f32 %v2915, %v2943
      %v2963 = vadd.f32 %v2916, %v2945
      %v2964 = vadd.f32 %v2917, %v2947
      %v2965 = vadd.f32 %v2918, %v2949
      %v2966 = vadd.f32 %v2919, %v2951
      %v2967 = vadd.f32 %v2920, %v2950
      %v2968 = vmul.f32 %v2742, %v630
      %v2969 = vmul.f32 %v2746, %v630
      %v2970 = vmul.f32 %v2750, %v630
      %v2971 = vmul.f32 %v2754, %v630
      %v2972 = vmul.f32 %v2758, %v630
      %v2973 = vmul.f32 %v2762, %v630
      %v2974 = vmul.f32 %v2766, %v630
      %v2975 = vmul.f32 %v2770, %v630
      %v2984 = vrot.slane %v2968, 5
      %v2985 = vrot.slane %v2969, 5
      %v2986 = vsel %vm647, %v2984, %v2985
      %v2987 = vrot.slane %v2970, 5
      %v2988 = vsel %vm647, %v2985, %v2987
      %v2989 = vrot.slane %v2971, 5
      %v2990 = vsel %vm647, %v2987, %v2989
      %v2991 = vrot.slane %v2972, 5
      %v2992 = vsel %vm647, %v2989, %v2991
      %v2993 = vrot.slane %v2973, 5
      %v2994 = vsel %vm647, %v2991, %v2993
      %v2995 = vrot.slane %v2974, 5
      %v2996 = vsel %vm647, %v2993, %v2995
      %v2997 = vrot.slane %v2975, 5
      %v2998 = vsel %vm647, %v2995, %v2997
      %v3007 = vadd.f32 %v2960, %v2986
      %v3008 = vadd.f32 %v2961, %v2988
      %v3009 = vadd.f32 %v2962, %v2990
      %v3010 = vadd.f32 %v2963, %v2992
      %v3011 = vadd.f32 %v2964, %v2994
      %v3012 = vadd.f32 %v2965, %v2996
      %v3013 = vadd.f32 %v2966, %v2998
      %v3014 = vadd.f32 %v2967, %v2997
      %v3015 = vmul.f32 %v2742, %v682
      %v3016 = vmul.f32 %v2746, %v682
      %v3017 = vmul.f32 %v2750, %v682
      %v3018 = vmul.f32 %v2754, %v682
      %v3019 = vmul.f32 %v2758, %v682
      %v3020 = vmul.f32 %v2762, %v682
      %v3021 = vmul.f32 %v2766, %v682
      %v3022 = vmul.f32 %v2770, %v682
      %v3031 = vrot.slane %v3015, 6
      %v3032 = vrot.slane %v3016, 6
      %v3033 = vsel %vm699, %v3031, %v3032
      %v3034 = vrot.slane %v3017, 6
      %v3035 = vsel %vm699, %v3032, %v3034
      %v3036 = vrot.slane %v3018, 6
      %v3037 = vsel %vm699, %v3034, %v3036
      %v3038 = vrot.slane %v3019, 6
      %v3039 = vsel %vm699, %v3036, %v3038
      %v3040 = vrot.slane %v3020, 6
      %v3041 = vsel %vm699, %v3038, %v3040
      %v3042 = vrot.slane %v3021, 6
      %v3043 = vsel %vm699, %v3040, %v3042
      %v3044 = vrot.slane %v3022, 6
      %v3045 = vsel %vm699, %v3042, %v3044
      %v3054 = vadd.f32 %v3007, %v3033
      %v3055 = vadd.f32 %v3008, %v3035
      %v3056 = vadd.f32 %v3009, %v3037
      %v3057 = vadd.f32 %v3010, %v3039
      %v3058 = vadd.f32 %v3011, %v3041
      %v3059 = vadd.f32 %v3012, %v3043
      %v3060 = vadd.f32 %v3013, %v3045
      %v3061 = vadd.f32 %v3014, %v3044
      %v3062 = vadd.f32 %v3054, %v735
      %v3063 = vadd.f32 %v3055, %v735
      %v3064 = vadd.f32 %v3056, %v735
      %v3065 = vadd.f32 %v3057, %v735
      %v3066 = vadd.f32 %v3058, %v735
      %v3067 = vadd.f32 %v3059, %v735
      %v3068 = vadd.f32 %v3060, %v735
      %v3069 = vadd.f32 %v3061, %v735
      %v3070 = vmax.f32 %v3062, 0.0
      %v3071 = vmax.f32 %v3063, 0.0
      %v3072 = vmax.f32 %v3064, 0.0
      %v3073 = vmax.f32 %v3065, 0.0
      %v3074 = vmax.f32 %v3066, 0.0
      %v3075 = vmax.f32 %v3067, 0.0
      %v3076 = vmax.f32 %v3068, 0.0
      %v3077 = vmax.f32 %v3069, 0.0
      %v3085 = vrot.slane %v3070, 1
      %v3086 = vrot.slane %v3071, 1
      %v3087 = vsel %vm439, %v3085, %v3086
      %v3088 = vrot.slane %v3072, 1
      %v3089 = vsel %vm439, %v3086, %v3088
      %v3090 = vrot.slane %v3073, 1
      %v3091 = vsel %vm439, %v3088, %v3090
      %v3092 = vrot.slane %v3074, 1
      %v3093 = vsel %vm439, %v3090, %v3092
      %v3094 = vrot.slane %v3075, 1
      %v3095 = vsel %vm439, %v3092, %v3094
      %v3096 = vrot.slane %v3076, 1
      %v3097 = vsel %vm439, %v3094, %v3096
      %3098 = vrot.lane.b32.xlu0 %v3087, 64
      %v3099 = vpop.permute.xlu0 %3098
      %3100 = vrot.lane.b32.xlu0 %v3089, 64
      %v3101 = vpop.permute.xlu0 %3100
      %3102 = vrot.lane.b32.xlu0 %v3091, 64
      %v3103 = vpop.permute.xlu0 %3102
      %3104 = vrot.lane.b32.xlu0 %v3093, 64
      %v3105 = vpop.permute.xlu0 %3104
      %3106 = vrot.lane.b32.xlu0 %v3095, 64
      %v3107 = vpop.permute.xlu0 %3106
      %3108 = vrot.lane.b32.xlu0 %v3097, 64
      %v3109 = vpop.permute.xlu0 %3108
      %3110 = vrot.lane.b32.xlu0 %v3096, 64
      %v3111 = vpop.permute.xlu0 %3110
      %v3119 = vrot.slane %v3070, 2
      %v3120 = vrot.slane %v3071, 2
      %v3121 = vsel %vm491, %v3119, %v3120
      %v3122 = vrot.slane %v3072, 2
      %v3123 = vsel %vm491, %v3120, %v3122
      %v3124 = vrot.slane %v3073, 2
      %v3125 = vsel %vm491, %v3122, %v3124
      %v3126 = vrot.slane %v3074, 2
      %v3127 = vsel %vm491, %v3124, %v3126
      %v3128 = vrot.slane %v3075, 2
      %v3129 = vsel %vm491, %v3126, %v3128
      %v3130 = vrot.slane %v3076, 2
      %v3131 = vsel %vm491, %v3128, %v3130
      %v3139 = vrot.slane %v3070, 3
      %v3140 = vrot.slane %v3071, 3
      %v3141 = vsel %vm543, %v3139, %v3140
      %v3142 = vrot.slane %v3072, 3
      %v3143 = vsel %vm543, %v3140, %v3142
      %v3144 = vrot.slane %v3073, 3
      %v3145 = vsel %vm543, %v3142, %v3144
      %v3146 = vrot.slane %v3074, 3
      %v3147 = vsel %vm543, %v3144, %v3146
      %v3148 = vrot.slane %v3075, 3
      %v3149 = vsel %vm543, %v3146, %v3148
      %v3150 = vrot.slane %v3076, 3
      %v3151 = vsel %vm543, %v3148, %v3150
      %3152 = vrot.lane.b32.xlu0 %v3141, 64
      %v3153 = vpop.permute.xlu0 %3152
      %3154 = vrot.lane.b32.xlu0 %v3143, 64
      %v3155 = vpop.permute.xlu0 %3154
      %3156 = vrot.lane.b32.xlu0 %v3145, 64
      %v3157 = vpop.permute.xlu0 %3156
      %3158 = vrot.lane.b32.xlu0 %v3147, 64
      %v3159 = vpop.permute.xlu0 %3158
      %3160 = vrot.lane.b32.xlu0 %v3149, 64
      %v3161 = vpop.permute.xlu0 %3160
      %3162 = vrot.lane.b32.xlu0 %v3151, 64
      %v3163 = vpop.permute.xlu0 %3162
      %3164 = vrot.lane.b32.xlu0 %v3150, 64
      %v3165 = vpop.permute.xlu0 %3164
      %v3173 = vrot.slane %v3070, 4
      %v3174 = vrot.slane %v3071, 4
      %v3175 = vsel %vm595, %v3173, %v3174
      %v3176 = vrot.slane %v3072, 4
      %v3177 = vsel %vm595, %v3174, %v3176
      %v3178 = vrot.slane %v3073, 4
      %v3179 = vsel %vm595, %v3176, %v3178
      %v3180 = vrot.slane %v3074, 4
      %v3181 = vsel %vm595, %v3178, %v3180
      %v3182 = vrot.slane %v3075, 4
      %v3183 = vsel %vm595, %v3180, %v3182
      %v3184 = vrot.slane %v3076, 4
      %v3185 = vsel %vm595, %v3182, %v3184
      %v3194 = vrot.slane %v3070, 5
      %v3195 = vrot.slane %v3071, 5
      %v3196 = vsel %vm647, %v3194, %v3195
      %v3197 = vrot.slane %v3072, 5
      %v3198 = vsel %vm647, %v3195, %v3197
      %v3199 = vrot.slane %v3073, 5
      %v3200 = vsel %vm647, %v3197, %v3199
      %v3201 = vrot.slane %v3074, 5
      %v3202 = vsel %vm647, %v3199, %v3201
      %v3203 = vrot.slane %v3075, 5
      %v3204 = vsel %vm647, %v3201, %v3203
      %v3205 = vrot.slane %v3076, 5
      %v3206 = vsel %vm647, %v3203, %v3205
      %v3207 = vrot.slane %v3077, 5
      %v3208 = vsel %vm647, %v3205, %v3207
      %3209 = vrot.lane.b32.xlu0 %v3196, 64
      %v3210 = vpop.permute.xlu0 %3209
      %3211 = vrot.lane.b32.xlu0 %v3198, 64
      %v3212 = vpop.permute.xlu0 %3211
      %3213 = vrot.lane.b32.xlu0 %v3200, 64
      %v3214 = vpop.permute.xlu0 %3213
      %3215 = vrot.lane.b32.xlu0 %v3202, 64
      %v3216 = vpop.permute.xlu0 %3215
      %3217 = vrot.lane.b32.xlu0 %v3204, 64
      %v3218 = vpop.permute.xlu0 %3217
      %3219 = vrot.lane.b32.xlu0 %v3206, 64
      %v3220 = vpop.permute.xlu0 %3219
      %3221 = vrot.lane.b32.xlu0 %v3208, 64
      %v3222 = vpop.permute.xlu0 %3221
      %v3230 = vrot.slane %v3070, 6
      %v3231 = vrot.slane %v3071, 6
      %v3232 = vsel %vm699, %v3230, %v3231
      %v3233 = vrot.slane %v3072, 6
      %v3234 = vsel %vm699, %v3231, %v3233
      %v3235 = vrot.slane %v3073, 6
      %v3236 = vsel %vm699, %v3233, %v3235
      %v3237 = vrot.slane %v3074, 6
      %v3238 = vsel %vm699, %v3235, %v3237
      %v3239 = vrot.slane %v3075, 6
      %v3240 = vsel %vm699, %v3237, %v3239
      %v3241 = vrot.slane %v3076, 6
      %v3242 = vsel %vm699, %v3239, %v3241
      %v3243 = vrot.slane %v3077, 6
      %v3244 = vsel %vm699, %v3241, %v3243
      %v3252 = vsel %vm927, %v3070, %v3099
      %v3253 = vsel %vm927, %v3071, %v3101
      %v3254 = vsel %vm927, %v3072, %v3103
      %v3255 = vsel %vm927, %v3073, %v3105
      %v3256 = vsel %vm927, %v3074, %v3107
      %v3257 = vsel %vm927, %v3075, %v3109
      %v3258 = vsel %vm927, %v3076, %v3111
      %v3259 = vsel %vm927, %v3121, %v3153
      %v3260 = vsel %vm927, %v3123, %v3155
      %v3261 = vsel %vm927, %v3125, %v3157
      %v3262 = vsel %vm927, %v3127, %v3159
      %v3263 = vsel %vm927, %v3129, %v3161
      %v3264 = vsel %vm927, %v3131, %v3163
      %v3265 = vsel %vm927, %v3130, %v3165
      %v3266 = vsel %vm927, %v3175, %v3210
      %v3267 = vsel %vm927, %v3177, %v3212
      %v3268 = vsel %vm927, %v3179, %v3214
      %v3269 = vsel %vm927, %v3181, %v3216
      %v3270 = vsel %vm927, %v3183, %v3218
      %v3271 = vsel %vm927, %v3185, %v3220
      %v3272 = vsel %vm927, %v3184, %v3222
      %v3273 = vpack.c.bf16 %v3253, %v3252
      %v3274 = vpack.c.bf16 %v3260, %v3259
      %v3275 = vpack.c.bf16 %v3267, %v3266
      %v3276 = vpack.c.bf16 %v3234, %v3232
      %v3277 = vpack.c.bf16 %v3255, %v3254
      %v3278 = vpack.c.bf16 %v3262, %v3261
      %v3279 = vpack.c.bf16 %v3269, %v3268
      %v3280 = vpack.c.bf16 %v3238, %v3236
      %v3281 = vpack.c.bf16 %v3257, %v3256
      %v3282 = vpack.c.bf16 %v3264, %v3263
      %v3283 = vpack.c.bf16 %v3271, %v3270
      %v3284 = vpack.c.bf16 %v3242, %v3240
      %v3285 = vpack.c.bf16 %v3258, %v3258
      %v3286 = vpack.c.bf16 %v3265, %v3265
      %v3287 = vpack.c.bf16 %v3272, %v3272
      %v3288 = vpack.c.bf16 %v3244, %v3244
      %v3290 = vsel %vm927, %v3276, 0
      %v3293 = vsel %vm927, %v3280, 0
      %v3296 = vsel %vm927, %v3284, 0
      %v3299 = vsel %vm927, %v3288, 0
      %3301 = vmatprep.subr.bf16.mxu0 0
      %3302 = vmatpush1.bf16.msra.mxu0 %v1090
      %3303 = vmatprep.subr.bf16.mxu0 0
      %3304 = vmatpush1.bf16.msra.mxu0 %v1089
      %3305 = vmatprep.subr.bf16.mxu0 0
      %3306 = vmatpush1.bf16.msra.mxu0 %v1088
      %3307 = vmatprep.subr.bf16.mxu0 0
      %3308 = vmatpush1.bf16.msra.mxu0 %v1087
      %3309 = vmatprep.subr.bf16.mxu0 0
      %3310 = vmatpush1.bf16.msra.mxu0 %v1086
      %3311 = vmatprep.subr.bf16.mxu0 0
      %3312 = vmatpush1.bf16.msra.mxu0 %v1085
      %3313 = vmatprep.subr.bf16.mxu0 0
      %3314 = vmatpush1.bf16.msra.mxu0 %v1084
      %3315 = vmatprep.subr.bf16.mxu0 0
      %3316 = vmatpush1.bf16.msra.mxu0 %v1083
      %3317 = vmatprep.subr.bf16.mxu0 0
      %3318 = vmatpush2.bf16.msra.mxu0 %v1098
      %3319 = vmatprep.subr.bf16.mxu0 0
      %3320 = vmatpush2.bf16.msra.mxu0 %v1097
      %3321 = vmatprep.subr.bf16.mxu0 0
      %3322 = vmatpush2.bf16.msra.mxu0 %v1096
      %3323 = vmatprep.subr.bf16.mxu0 0
      %3324 = vmatpush2.bf16.msra.mxu0 %v1095
      %3325 = vmatprep.subr.bf16.mxu0 0
      %3326 = vmatpush2.bf16.msra.mxu0 %v1094
      %3327 = vmatprep.subr.bf16.mxu0 0
      %3328 = vmatpush2.bf16.msra.mxu0 %v1093
      %3329 = vmatprep.subr.bf16.mxu0 0
      %3330 = vmatpush2.bf16.msra.mxu0 %v1092
      %3331 = vmatprep.subr.bf16.mxu0 0
      %3332 = vmatpush2.bf16.msra.mxu0 %v1091
      %3333 = vmatprep.mubr.bf16.mxu0 %v3274
      %3334 = vmatmul.mubr.bf16.gmra.mxu0 %v3273
      %v3335 = vpop.f32.mrf.mxu0
      %v3336 = vadd.f32 %v969, %v3335
      %v3337 = vpop.f32.mrf.mxu0
      %v3338 = vpop.f32.mrf.mxu0
      %v3339 = vadd.f32 %v969, %v3338
      %v3340 = vpop.f32.mrf.mxu0
      %3341 = vmatprep.mubr.bf16.mxu0 %v3278
      %3342 = vmatmul.mubr.bf16.gmra.mxu0 %v3277
      %v3343 = vpop.f32.mrf.mxu0
      %v3344 = vadd.f32 %v969, %v3343
      %v3345 = vpop.f32.mrf.mxu0
      %v3346 = vpop.f32.mrf.mxu0
      %v3347 = vadd.f32 %v969, %v3346
      %v3348 = vpop.f32.mrf.mxu0
      %3349 = vmatprep.mubr.bf16.mxu0 %v3282
      %3350 = vmatmul.mubr.bf16.gmra.mxu0 %v3281
      %v3351 = vpop.f32.mrf.mxu0
      %v3352 = vadd.f32 %v969, %v3351
      %v3353 = vpop.f32.mrf.mxu0
      %v3354 = vpop.f32.mrf.mxu0
      %v3355 = vadd.f32 %v969, %v3354
      %v3356 = vpop.f32.mrf.mxu0
      %3357 = vmatprep.mubr.bf16.mxu0 %v3286
      %3358 = vmatmul.mubr.bf16.gmra.mxu0 %v3285
      %v3359 = vpop.f32.mrf.mxu0
      %v3360 = vadd.f32 %v969, %v3359
      %v3361 = vpop.f32.mrf.mxu0
      %v3362 = vpop.f32.mrf.mxu0
      %v3363 = vpop.f32.mrf.mxu0
      %3364 = vdwg.mxu0
      %3365 = vmatprep.subr.bf16.mxu0 0
      %3366 = vmatpush1.bf16.msra.mxu0 %v1106
      %3367 = vmatprep.subr.bf16.mxu0 0
      %3368 = vmatpush1.bf16.msra.mxu0 %v1105
      %3369 = vmatprep.subr.bf16.mxu0 0
      %3370 = vmatpush1.bf16.msra.mxu0 %v1104
      %3371 = vmatprep.subr.bf16.mxu0 0
      %3372 = vmatpush1.bf16.msra.mxu0 %v1103
      %3373 = vmatprep.subr.bf16.mxu0 0
      %3374 = vmatpush1.bf16.msra.mxu0 %v1102
      %3375 = vmatprep.subr.bf16.mxu0 0
      %3376 = vmatpush1.bf16.msra.mxu0 %v1101
      %3377 = vmatprep.subr.bf16.mxu0 0
      %3378 = vmatpush1.bf16.msra.mxu0 %v1100
      %3379 = vmatprep.subr.bf16.mxu0 0
      %3380 = vmatpush1.bf16.msra.mxu0 %v1099
      %3381 = vmatprep.subr.bf16.mxu0 0
      %3382 = vmatpush2.bf16.msra.mxu0 0
      %3383 = vmatprep.subr.bf16.mxu0 0
      %3384 = vmatpush2.bf16.msra.mxu0 0
      %3385 = vmatprep.subr.bf16.mxu0 0
      %3386 = vmatpush2.bf16.msra.mxu0 0
      %3387 = vmatprep.subr.bf16.mxu0 0
      %3388 = vmatpush2.bf16.msra.mxu0 0
      %3389 = vmatprep.subr.bf16.mxu0 0
      %3390 = vmatpush2.bf16.msra.mxu0 %v1110
      %3391 = vmatprep.subr.bf16.mxu0 0
      %3392 = vmatpush2.bf16.msra.mxu0 %v1109
      %3393 = vmatprep.subr.bf16.mxu0 0
      %3394 = vmatpush2.bf16.msra.mxu0 %v1108
      %3395 = vmatprep.subr.bf16.mxu0 0
      %3396 = vmatpush2.bf16.msra.mxu0 %v1107
      %3397 = vmatprep.mubr.bf16.mxu0 %v3290
      %3398 = vmatmul.mubr.bf16.gmra.mxu0 %v3275
      %v3399 = vpop.f32.mrf.mxu0
      %v3400 = vadd.f32 %v3336, %v3399
      %v3401 = vpop.f32.mrf.mxu0
      %v3402 = vpop.f32.mrf.mxu0
      %v3403 = vadd.f32 %v3339, %v3402
      %v3404 = vpop.f32.mrf.mxu0
      %3405 = vmatprep.mubr.bf16.mxu0 %v3293
      %3406 = vmatmul.mubr.bf16.gmra.mxu0 %v3279
      %v3407 = vpop.f32.mrf.mxu0
      %v3408 = vadd.f32 %v3344, %v3407
      %v3409 = vpop.f32.mrf.mxu0
      %v3410 = vpop.f32.mrf.mxu0
      %v3411 = vadd.f32 %v3347, %v3410
      %v3412 = vpop.f32.mrf.mxu0
      %3413 = vmatprep.mubr.bf16.mxu0 %v3296
      %3414 = vmatmul.mubr.bf16.gmra.mxu0 %v3283
      %v3415 = vpop.f32.mrf.mxu0
      %v3416 = vadd.f32 %v3352, %v3415
      %v3417 = vpop.f32.mrf.mxu0
      %v3418 = vpop.f32.mrf.mxu0
      %v3419 = vadd.f32 %v3355, %v3418
      %v3420 = vpop.f32.mrf.mxu0
      %3421 = vmatprep.mubr.bf16.mxu0 %v3299
      %3422 = vmatmul.mubr.bf16.gmra.mxu0 %v3287
      %v3423 = vpop.f32.mrf.mxu0
      %v3424 = vadd.f32 %v3360, %v3423
      %v3425 = vpop.f32.mrf.mxu0
      %v3426 = vpop.f32.mrf.mxu0
      %v3427 = vpop.f32.mrf.mxu0
      %3428 = vdwg.mxu0
      %v3429 = vmax.f32 %v3400, 0.0
      %v3430 = vmax.f32 %v3403, 0.0
      %v3431 = vmax.f32 %v3408, 0.0
      %v3432 = vmax.f32 %v3411, 0.0
      %v3433 = vmax.f32 %v3416, 0.0
      %v3434 = vmax.f32 %v3419, 0.0
      %v3435 = vmax.f32 %v3424, 0.0
      %v3436 = vsel %vm927, %v3429, 0.0
      %v3437 = vsel %vm927, %v3430, 0.0
      %v3438 = vadd.f32 %v3436, %v3437
      %v3439 = vsel %vm927, %v3431, 0.0
      %v3440 = vadd.f32 %v3438, %v3439
      %v3441 = vsel %vm927, %v3432, 0.0
      %v3442 = vadd.f32 %v3440, %v3441
      %v3443 = vsel %vm927, %v3433, 0.0
      %v3444 = vadd.f32 %v3442, %v3443
      %v3445 = vsel %vm927, %v3434, 0.0
      %v3446 = vadd.f32 %v3444, %v3445
      %v3447 = vsel %vm1297, %v3435, 0.0
      %v3448 = vadd.f32 %v3446, %v3447
      %v3449 = vrot.slane %v3448, 4
      %v3450 = vadd.f32 %v3448, %v3449
      %v3451 = vrot.slane %v3450, 2
      %v3452 = vadd.f32 %v3450, %v3451
      %v3453 = vrot.slane %v3452, 1
      %v3454 = vadd.f32 %v3452, %v3453
      %v3455 = vmul.f32 %v3454, %v1306
      %3456 = vset.pattern.permute.xlu0 4
      %3457 = vperm.xlu0 %3456, %v292
      %v3458 = vpop.permute.xlu0 %3457
      %3460 = vset.pattern.permute.xlu0 4
      %3461 = vperm.xlu0 %3460, %v293
      %v3462 = vpop.permute.xlu0 %3461
      %3464 = vset.pattern.permute.xlu0 4
      %3465 = vperm.xlu0 %3464, %v294
      %v3466 = vpop.permute.xlu0 %3465
      %3468 = vset.pattern.permute.xlu0 4
      %3469 = vperm.xlu0 %3468, %v295
      %v3470 = vpop.permute.xlu0 %3469
      %3472 = vset.pattern.permute.xlu0 4
      %3473 = vperm.xlu0 %3472, %v296
      %v3474 = vpop.permute.xlu0 %3473
      %3476 = vset.pattern.permute.xlu0 4
      %3477 = vperm.xlu0 %3476, %v297
      %v3478 = vpop.permute.xlu0 %3477
      %3480 = vset.pattern.permute.xlu0 4
      %3481 = vperm.xlu0 %3480, %v298
      %v3482 = vpop.permute.xlu0 %3481
      %3484 = vset.pattern.permute.xlu0 4
      %3485 = vperm.xlu0 %3484, %v299
      %v3486 = vpop.permute.xlu0 %3485
      %v3488 = vmul.f32 %v3458, %v410
      %v3489 = vmul.f32 %v3462, %v410
      %v3490 = vmul.f32 %v3466, %v410
      %v3491 = vmul.f32 %v3470, %v410
      %v3492 = vmul.f32 %v3474, %v410
      %v3493 = vmul.f32 %v3478, %v410
      %v3494 = vmul.f32 %v3482, %v410
      %v3495 = vmul.f32 %v3486, %v410
      %v3496 = vmul.f32 %v3458, %v422
      %v3497 = vmul.f32 %v3462, %v422
      %v3498 = vmul.f32 %v3466, %v422
      %v3499 = vmul.f32 %v3470, %v422
      %v3500 = vmul.f32 %v3474, %v422
      %v3501 = vmul.f32 %v3478, %v422
      %v3502 = vmul.f32 %v3482, %v422
      %v3503 = vmul.f32 %v3486, %v422
      %v3512 = vrot.slane %v3496, 1
      %v3513 = vrot.slane %v3497, 1
      %v3514 = vsel %vm439, %v3512, %v3513
      %v3515 = vrot.slane %v3498, 1
      %v3516 = vsel %vm439, %v3513, %v3515
      %v3517 = vrot.slane %v3499, 1
      %v3518 = vsel %vm439, %v3515, %v3517
      %v3519 = vrot.slane %v3500, 1
      %v3520 = vsel %vm439, %v3517, %v3519
      %v3521 = vrot.slane %v3501, 1
      %v3522 = vsel %vm439, %v3519, %v3521
      %v3523 = vrot.slane %v3502, 1
      %v3524 = vsel %vm439, %v3521, %v3523
      %v3525 = vrot.slane %v3503, 1
      %v3526 = vsel %vm439, %v3523, %v3525
      %v3535 = vadd.f32 %v3488, %v3514
      %v3536 = vadd.f32 %v3489, %v3516
      %v3537 = vadd.f32 %v3490, %v3518
      %v3538 = vadd.f32 %v3491, %v3520
      %v3539 = vadd.f32 %v3492, %v3522
      %v3540 = vadd.f32 %v3493, %v3524
      %v3541 = vadd.f32 %v3494, %v3526
      %v3542 = vadd.f32 %v3495, %v3525
      %v3543 = vmul.f32 %v3458, %v474
      %v3544 = vmul.f32 %v3462, %v474
      %v3545 = vmul.f32 %v3466, %v474
      %v3546 = vmul.f32 %v3470, %v474
      %v3547 = vmul.f32 %v3474, %v474
      %v3548 = vmul.f32 %v3478, %v474
      %v3549 = vmul.f32 %v3482, %v474
      %v3550 = vmul.f32 %v3486, %v474
      %v3559 = vrot.slane %v3543, 2
      %v3560 = vrot.slane %v3544, 2
      %v3561 = vsel %vm491, %v3559, %v3560
      %v3562 = vrot.slane %v3545, 2
      %v3563 = vsel %vm491, %v3560, %v3562
      %v3564 = vrot.slane %v3546, 2
      %v3565 = vsel %vm491, %v3562, %v3564
      %v3566 = vrot.slane %v3547, 2
      %v3567 = vsel %vm491, %v3564, %v3566
      %v3568 = vrot.slane %v3548, 2
      %v3569 = vsel %vm491, %v3566, %v3568
      %v3570 = vrot.slane %v3549, 2
      %v3571 = vsel %vm491, %v3568, %v3570
      %v3572 = vrot.slane %v3550, 2
      %v3573 = vsel %vm491, %v3570, %v3572
      %v3582 = vadd.f32 %v3535, %v3561
      %v3583 = vadd.f32 %v3536, %v3563
      %v3584 = vadd.f32 %v3537, %v3565
      %v3585 = vadd.f32 %v3538, %v3567
      %v3586 = vadd.f32 %v3539, %v3569
      %v3587 = vadd.f32 %v3540, %v3571
      %v3588 = vadd.f32 %v3541, %v3573
      %v3589 = vadd.f32 %v3542, %v3572
      %v3590 = vmul.f32 %v3458, %v526
      %v3591 = vmul.f32 %v3462, %v526
      %v3592 = vmul.f32 %v3466, %v526
      %v3593 = vmul.f32 %v3470, %v526
      %v3594 = vmul.f32 %v3474, %v526
      %v3595 = vmul.f32 %v3478, %v526
      %v3596 = vmul.f32 %v3482, %v526
      %v3597 = vmul.f32 %v3486, %v526
      %v3606 = vrot.slane %v3590, 3
      %v3607 = vrot.slane %v3591, 3
      %v3608 = vsel %vm543, %v3606, %v3607
      %v3609 = vrot.slane %v3592, 3
      %v3610 = vsel %vm543, %v3607, %v3609
      %v3611 = vrot.slane %v3593, 3
      %v3612 = vsel %vm543, %v3609, %v3611
      %v3613 = vrot.slane %v3594, 3
      %v3614 = vsel %vm543, %v3611, %v3613
      %v3615 = vrot.slane %v3595, 3
      %v3616 = vsel %vm543, %v3613, %v3615
      %v3617 = vrot.slane %v3596, 3
      %v3618 = vsel %vm543, %v3615, %v3617
      %v3619 = vrot.slane %v3597, 3
      %v3620 = vsel %vm543, %v3617, %v3619
      %v3629 = vadd.f32 %v3582, %v3608
      %v3630 = vadd.f32 %v3583, %v3610
      %v3631 = vadd.f32 %v3584, %v3612
      %v3632 = vadd.f32 %v3585, %v3614
      %v3633 = vadd.f32 %v3586, %v3616
      %v3634 = vadd.f32 %v3587, %v3618
      %v3635 = vadd.f32 %v3588, %v3620
      %v3636 = vadd.f32 %v3589, %v3619
      %v3637 = vmul.f32 %v3458, %v578
      %v3638 = vmul.f32 %v3462, %v578
      %v3639 = vmul.f32 %v3466, %v578
      %v3640 = vmul.f32 %v3470, %v578
      %v3641 = vmul.f32 %v3474, %v578
      %v3642 = vmul.f32 %v3478, %v578
      %v3643 = vmul.f32 %v3482, %v578
      %v3644 = vmul.f32 %v3486, %v578
      %v3653 = vrot.slane %v3637, 4
      %v3654 = vrot.slane %v3638, 4
      %v3655 = vsel %vm595, %v3653, %v3654
      %v3656 = vrot.slane %v3639, 4
      %v3657 = vsel %vm595, %v3654, %v3656
      %v3658 = vrot.slane %v3640, 4
      %v3659 = vsel %vm595, %v3656, %v3658
      %v3660 = vrot.slane %v3641, 4
      %v3661 = vsel %vm595, %v3658, %v3660
      %v3662 = vrot.slane %v3642, 4
      %v3663 = vsel %vm595, %v3660, %v3662
      %v3664 = vrot.slane %v3643, 4
      %v3665 = vsel %vm595, %v3662, %v3664
      %v3666 = vrot.slane %v3644, 4
      %v3667 = vsel %vm595, %v3664, %v3666
      %v3676 = vadd.f32 %v3629, %v3655
      %v3677 = vadd.f32 %v3630, %v3657
      %v3678 = vadd.f32 %v3631, %v3659
      %v3679 = vadd.f32 %v3632, %v3661
      %v3680 = vadd.f32 %v3633, %v3663
      %v3681 = vadd.f32 %v3634, %v3665
      %v3682 = vadd.f32 %v3635, %v3667
      %v3683 = vadd.f32 %v3636, %v3666
      %v3684 = vmul.f32 %v3458, %v630
      %v3685 = vmul.f32 %v3462, %v630
      %v3686 = vmul.f32 %v3466, %v630
      %v3687 = vmul.f32 %v3470, %v630
      %v3688 = vmul.f32 %v3474, %v630
      %v3689 = vmul.f32 %v3478, %v630
      %v3690 = vmul.f32 %v3482, %v630
      %v3691 = vmul.f32 %v3486, %v630
      %v3700 = vrot.slane %v3684, 5
      %v3701 = vrot.slane %v3685, 5
      %v3702 = vsel %vm647, %v3700, %v3701
      %v3703 = vrot.slane %v3686, 5
      %v3704 = vsel %vm647, %v3701, %v3703
      %v3705 = vrot.slane %v3687, 5
      %v3706 = vsel %vm647, %v3703, %v3705
      %v3707 = vrot.slane %v3688, 5
      %v3708 = vsel %vm647, %v3705, %v3707
      %v3709 = vrot.slane %v3689, 5
      %v3710 = vsel %vm647, %v3707, %v3709
      %v3711 = vrot.slane %v3690, 5
      %v3712 = vsel %vm647, %v3709, %v3711
      %v3713 = vrot.slane %v3691, 5
      %v3714 = vsel %vm647, %v3711, %v3713
      %v3723 = vadd.f32 %v3676, %v3702
      %v3724 = vadd.f32 %v3677, %v3704
      %v3725 = vadd.f32 %v3678, %v3706
      %v3726 = vadd.f32 %v3679, %v3708
      %v3727 = vadd.f32 %v3680, %v3710
      %v3728 = vadd.f32 %v3681, %v3712
      %v3729 = vadd.f32 %v3682, %v3714
      %v3730 = vadd.f32 %v3683, %v3713
      %v3731 = vmul.f32 %v3458, %v682
      %v3732 = vmul.f32 %v3462, %v682
      %v3733 = vmul.f32 %v3466, %v682
      %v3734 = vmul.f32 %v3470, %v682
      %v3735 = vmul.f32 %v3474, %v682
      %v3736 = vmul.f32 %v3478, %v682
      %v3737 = vmul.f32 %v3482, %v682
      %v3738 = vmul.f32 %v3486, %v682
      %v3747 = vrot.slane %v3731, 6
      %v3748 = vrot.slane %v3732, 6
      %v3749 = vsel %vm699, %v3747, %v3748
      %v3750 = vrot.slane %v3733, 6
      %v3751 = vsel %vm699, %v3748, %v3750
      %v3752 = vrot.slane %v3734, 6
      %v3753 = vsel %vm699, %v3750, %v3752
      %v3754 = vrot.slane %v3735, 6
      %v3755 = vsel %vm699, %v3752, %v3754
      %v3756 = vrot.slane %v3736, 6
      %v3757 = vsel %vm699, %v3754, %v3756
      %v3758 = vrot.slane %v3737, 6
      %v3759 = vsel %vm699, %v3756, %v3758
      %v3760 = vrot.slane %v3738, 6
      %v3761 = vsel %vm699, %v3758, %v3760
      %v3770 = vadd.f32 %v3723, %v3749
      %v3771 = vadd.f32 %v3724, %v3751
      %v3772 = vadd.f32 %v3725, %v3753
      %v3773 = vadd.f32 %v3726, %v3755
      %v3774 = vadd.f32 %v3727, %v3757
      %v3775 = vadd.f32 %v3728, %v3759
      %v3776 = vadd.f32 %v3729, %v3761
      %v3777 = vadd.f32 %v3730, %v3760
      %v3778 = vadd.f32 %v3770, %v735
      %v3779 = vadd.f32 %v3771, %v735
      %v3780 = vadd.f32 %v3772, %v735
      %v3781 = vadd.f32 %v3773, %v735
      %v3782 = vadd.f32 %v3774, %v735
      %v3783 = vadd.f32 %v3775, %v735
      %v3784 = vadd.f32 %v3776, %v735
      %v3785 = vadd.f32 %v3777, %v735
      %v3786 = vmax.f32 %v3778, 0.0
      %v3787 = vmax.f32 %v3779, 0.0
      %v3788 = vmax.f32 %v3780, 0.0
      %v3789 = vmax.f32 %v3781, 0.0
      %v3790 = vmax.f32 %v3782, 0.0
      %v3791 = vmax.f32 %v3783, 0.0
      %v3792 = vmax.f32 %v3784, 0.0
      %v3793 = vmax.f32 %v3785, 0.0
      %v3801 = vrot.slane %v3786, 1
      %v3802 = vrot.slane %v3787, 1
      %v3803 = vsel %vm439, %v3801, %v3802
      %v3804 = vrot.slane %v3788, 1
      %v3805 = vsel %vm439, %v3802, %v3804
      %v3806 = vrot.slane %v3789, 1
      %v3807 = vsel %vm439, %v3804, %v3806
      %v3808 = vrot.slane %v3790, 1
      %v3809 = vsel %vm439, %v3806, %v3808
      %v3810 = vrot.slane %v3791, 1
      %v3811 = vsel %vm439, %v3808, %v3810
      %v3812 = vrot.slane %v3792, 1
      %v3813 = vsel %vm439, %v3810, %v3812
      %3814 = vrot.lane.b32.xlu0 %v3803, 64
      %v3815 = vpop.permute.xlu0 %3814
      %3816 = vrot.lane.b32.xlu0 %v3805, 64
      %v3817 = vpop.permute.xlu0 %3816
      %3818 = vrot.lane.b32.xlu0 %v3807, 64
      %v3819 = vpop.permute.xlu0 %3818
      %3820 = vrot.lane.b32.xlu0 %v3809, 64
      %v3821 = vpop.permute.xlu0 %3820
      %3822 = vrot.lane.b32.xlu0 %v3811, 64
      %v3823 = vpop.permute.xlu0 %3822
      %3824 = vrot.lane.b32.xlu0 %v3813, 64
      %v3825 = vpop.permute.xlu0 %3824
      %3826 = vrot.lane.b32.xlu0 %v3812, 64
      %v3827 = vpop.permute.xlu0 %3826
      %v3835 = vrot.slane %v3786, 2
      %v3836 = vrot.slane %v3787, 2
      %v3837 = vsel %vm491, %v3835, %v3836
      %v3838 = vrot.slane %v3788, 2
      %v3839 = vsel %vm491, %v3836, %v3838
      %v3840 = vrot.slane %v3789, 2
      %v3841 = vsel %vm491, %v3838, %v3840
      %v3842 = vrot.slane %v3790, 2
      %v3843 = vsel %vm491, %v3840, %v3842
      %v3844 = vrot.slane %v3791, 2
      %v3845 = vsel %vm491, %v3842, %v3844
      %v3846 = vrot.slane %v3792, 2
      %v3847 = vsel %vm491, %v3844, %v3846
      %v3855 = vrot.slane %v3786, 3
      %v3856 = vrot.slane %v3787, 3
      %v3857 = vsel %vm543, %v3855, %v3856
      %v3858 = vrot.slane %v3788, 3
      %v3859 = vsel %vm543, %v3856, %v3858
      %v3860 = vrot.slane %v3789, 3
      %v3861 = vsel %vm543, %v3858, %v3860
      %v3862 = vrot.slane %v3790, 3
      %v3863 = vsel %vm543, %v3860, %v3862
      %v3864 = vrot.slane %v3791, 3
      %v3865 = vsel %vm543, %v3862, %v3864
      %v3866 = vrot.slane %v3792, 3
      %v3867 = vsel %vm543, %v3864, %v3866
      %3868 = vrot.lane.b32.xlu0 %v3857, 64
      %v3869 = vpop.permute.xlu0 %3868
      %3870 = vrot.lane.b32.xlu0 %v3859, 64
      %v3871 = vpop.permute.xlu0 %3870
      %3872 = vrot.lane.b32.xlu0 %v3861, 64
      %v3873 = vpop.permute.xlu0 %3872
      %3874 = vrot.lane.b32.xlu0 %v3863, 64
      %v3875 = vpop.permute.xlu0 %3874
      %3876 = vrot.lane.b32.xlu0 %v3865, 64
      %v3877 = vpop.permute.xlu0 %3876
      %3878 = vrot.lane.b32.xlu0 %v3867, 64
      %v3879 = vpop.permute.xlu0 %3878
      %3880 = vrot.lane.b32.xlu0 %v3866, 64
      %v3881 = vpop.permute.xlu0 %3880
      %v3889 = vrot.slane %v3786, 4
      %v3890 = vrot.slane %v3787, 4
      %v3891 = vsel %vm595, %v3889, %v3890
      %v3892 = vrot.slane %v3788, 4
      %v3893 = vsel %vm595, %v3890, %v3892
      %v3894 = vrot.slane %v3789, 4
      %v3895 = vsel %vm595, %v3892, %v3894
      %v3896 = vrot.slane %v3790, 4
      %v3897 = vsel %vm595, %v3894, %v3896
      %v3898 = vrot.slane %v3791, 4
      %v3899 = vsel %vm595, %v3896, %v3898
      %v3900 = vrot.slane %v3792, 4
      %v3901 = vsel %vm595, %v3898, %v3900
      %v3910 = vrot.slane %v3786, 5
      %v3911 = vrot.slane %v3787, 5
      %v3912 = vsel %vm647, %v3910, %v3911
      %v3913 = vrot.slane %v3788, 5
      %v3914 = vsel %vm647, %v3911, %v3913
      %v3915 = vrot.slane %v3789, 5
      %v3916 = vsel %vm647, %v3913, %v3915
      %v3917 = vrot.slane %v3790, 5
      %v3918 = vsel %vm647, %v3915, %v3917
      %v3919 = vrot.slane %v3791, 5
      %v3920 = vsel %vm647, %v3917, %v3919
      %v3921 = vrot.slane %v3792, 5
      %v3922 = vsel %vm647, %v3919, %v3921
      %v3923 = vrot.slane %v3793, 5
      %v3924 = vsel %vm647, %v3921, %v3923
      %3925 = vrot.lane.b32.xlu0 %v3912, 64
      %v3926 = vpop.permute.xlu0 %3925
      %3927 = vrot.lane.b32.xlu0 %v3914, 64
      %v3928 = vpop.permute.xlu0 %3927
      %3929 = vrot.lane.b32.xlu0 %v3916, 64
      %v3930 = vpop.permute.xlu0 %3929
      %3931 = vrot.lane.b32.xlu0 %v3918, 64
      %v3932 = vpop.permute.xlu0 %3931
      %3933 = vrot.lane.b32.xlu0 %v3920, 64
      %v3934 = vpop.permute.xlu0 %3933
      %3935 = vrot.lane.b32.xlu0 %v3922, 64
      %v3936 = vpop.permute.xlu0 %3935
      %3937 = vrot.lane.b32.xlu0 %v3924, 64
      %v3938 = vpop.permute.xlu0 %3937
      %v3946 = vrot.slane %v3786, 6
      %v3947 = vrot.slane %v3787, 6
      %v3948 = vsel %vm699, %v3946, %v3947
      %v3949 = vrot.slane %v3788, 6
      %v3950 = vsel %vm699, %v3947, %v3949
      %v3951 = vrot.slane %v3789, 6
      %v3952 = vsel %vm699, %v3949, %v3951
      %v3953 = vrot.slane %v3790, 6
      %v3954 = vsel %vm699, %v3951, %v3953
      %v3955 = vrot.slane %v3791, 6
      %v3956 = vsel %vm699, %v3953, %v3955
      %v3957 = vrot.slane %v3792, 6
      %v3958 = vsel %vm699, %v3955, %v3957
      %v3959 = vrot.slane %v3793, 6
      %v3960 = vsel %vm699, %v3957, %v3959
      %v3968 = vsel %vm927, %v3786, %v3815
      %v3969 = vsel %vm927, %v3787, %v3817
      %v3970 = vsel %vm927, %v3788, %v3819
      %v3971 = vsel %vm927, %v3789, %v3821
      %v3972 = vsel %vm927, %v3790, %v3823
      %v3973 = vsel %vm927, %v3791, %v3825
      %v3974 = vsel %vm927, %v3792, %v3827
      %v3975 = vsel %vm927, %v3837, %v3869
      %v3976 = vsel %vm927, %v3839, %v3871
      %v3977 = vsel %vm927, %v3841, %v3873
      %v3978 = vsel %vm927, %v3843, %v3875
      %v3979 = vsel %vm927, %v3845, %v3877
      %v3980 = vsel %vm927, %v3847, %v3879
      %v3981 = vsel %vm927, %v3846, %v3881
      %v3982 = vsel %vm927, %v3891, %v3926
      %v3983 = vsel %vm927, %v3893, %v3928
      %v3984 = vsel %vm927, %v3895, %v3930
      %v3985 = vsel %vm927, %v3897, %v3932
      %v3986 = vsel %vm927, %v3899, %v3934
      %v3987 = vsel %vm927, %v3901, %v3936
      %v3988 = vsel %vm927, %v3900, %v3938
      %v3989 = vpack.c.bf16 %v3969, %v3968
      %v3990 = vpack.c.bf16 %v3976, %v3975
      %v3991 = vpack.c.bf16 %v3983, %v3982
      %v3992 = vpack.c.bf16 %v3950, %v3948
      %v3993 = vpack.c.bf16 %v3971, %v3970
      %v3994 = vpack.c.bf16 %v3978, %v3977
      %v3995 = vpack.c.bf16 %v3985, %v3984
      %v3996 = vpack.c.bf16 %v3954, %v3952
      %v3997 = vpack.c.bf16 %v3973, %v3972
      %v3998 = vpack.c.bf16 %v3980, %v3979
      %v3999 = vpack.c.bf16 %v3987, %v3986
      %v4000 = vpack.c.bf16 %v3958, %v3956
      %v4001 = vpack.c.bf16 %v3974, %v3974
      %v4002 = vpack.c.bf16 %v3981, %v3981
      %v4003 = vpack.c.bf16 %v3988, %v3988
      %v4004 = vpack.c.bf16 %v3960, %v3960
      %v4006 = vsel %vm927, %v3992, 0
      %v4009 = vsel %vm927, %v3996, 0
      %v4012 = vsel %vm927, %v4000, 0
      %v4015 = vsel %vm927, %v4004, 0
      %4017 = vmatprep.subr.bf16.mxu0 0
      %4018 = vmatpush1.bf16.msra.mxu0 %v1090
      %4019 = vmatprep.subr.bf16.mxu0 0
      %4020 = vmatpush1.bf16.msra.mxu0 %v1089
      %4021 = vmatprep.subr.bf16.mxu0 0
      %4022 = vmatpush1.bf16.msra.mxu0 %v1088
      %4023 = vmatprep.subr.bf16.mxu0 0
      %4024 = vmatpush1.bf16.msra.mxu0 %v1087
      %4025 = vmatprep.subr.bf16.mxu0 0
      %4026 = vmatpush1.bf16.msra.mxu0 %v1086
      %4027 = vmatprep.subr.bf16.mxu0 0
      %4028 = vmatpush1.bf16.msra.mxu0 %v1085
      %4029 = vmatprep.subr.bf16.mxu0 0
      %4030 = vmatpush1.bf16.msra.mxu0 %v1084
      %4031 = vmatprep.subr.bf16.mxu0 0
      %4032 = vmatpush1.bf16.msra.mxu0 %v1083
      %4033 = vmatprep.subr.bf16.mxu0 0
      %4034 = vmatpush2.bf16.msra.mxu0 %v1098
      %4035 = vmatprep.subr.bf16.mxu0 0
      %4036 = vmatpush2.bf16.msra.mxu0 %v1097
      %4037 = vmatprep.subr.bf16.mxu0 0
      %4038 = vmatpush2.bf16.msra.mxu0 %v1096
      %4039 = vmatprep.subr.bf16.mxu0 0
      %4040 = vmatpush2.bf16.msra.mxu0 %v1095
      %4041 = vmatprep.subr.bf16.mxu0 0
      %4042 = vmatpush2.bf16.msra.mxu0 %v1094
      %4043 = vmatprep.subr.bf16.mxu0 0
      %4044 = vmatpush2.bf16.msra.mxu0 %v1093
      %4045 = vmatprep.subr.bf16.mxu0 0
      %4046 = vmatpush2.bf16.msra.mxu0 %v1092
      %4047 = vmatprep.subr.bf16.mxu0 0
      %4048 = vmatpush2.bf16.msra.mxu0 %v1091
      %4049 = vmatprep.mubr.bf16.mxu0 %v3990
      %4050 = vmatmul.mubr.bf16.gmra.mxu0 %v3989
      %v4051 = vpop.f32.mrf.mxu0
      %v4052 = vadd.f32 %v969, %v4051
      %v4053 = vpop.f32.mrf.mxu0
      %v4054 = vpop.f32.mrf.mxu0
      %v4055 = vadd.f32 %v969, %v4054
      %v4056 = vpop.f32.mrf.mxu0
      %4057 = vmatprep.mubr.bf16.mxu0 %v3994
      %4058 = vmatmul.mubr.bf16.gmra.mxu0 %v3993
      %v4059 = vpop.f32.mrf.mxu0
      %v4060 = vadd.f32 %v969, %v4059
      %v4061 = vpop.f32.mrf.mxu0
      %v4062 = vpop.f32.mrf.mxu0
      %v4063 = vadd.f32 %v969, %v4062
      %v4064 = vpop.f32.mrf.mxu0
      %4065 = vmatprep.mubr.bf16.mxu0 %v3998
      %4066 = vmatmul.mubr.bf16.gmra.mxu0 %v3997
      %v4067 = vpop.f32.mrf.mxu0
      %v4068 = vadd.f32 %v969, %v4067
      %v4069 = vpop.f32.mrf.mxu0
      %v4070 = vpop.f32.mrf.mxu0
      %v4071 = vadd.f32 %v969, %v4070
      %v4072 = vpop.f32.mrf.mxu0
      %4073 = vmatprep.mubr.bf16.mxu0 %v4002
      %4074 = vmatmul.mubr.bf16.gmra.mxu0 %v4001
      %v4075 = vpop.f32.mrf.mxu0
      %v4076 = vadd.f32 %v969, %v4075
      %v4077 = vpop.f32.mrf.mxu0
      %v4078 = vpop.f32.mrf.mxu0
      %v4079 = vpop.f32.mrf.mxu0
      %4080 = vdwg.mxu0
      %4081 = vmatprep.subr.bf16.mxu0 0
      %4082 = vmatpush1.bf16.msra.mxu0 %v1106
      %4083 = vmatprep.subr.bf16.mxu0 0
      %4084 = vmatpush1.bf16.msra.mxu0 %v1105
      %4085 = vmatprep.subr.bf16.mxu0 0
      %4086 = vmatpush1.bf16.msra.mxu0 %v1104
      %4087 = vmatprep.subr.bf16.mxu0 0
      %4088 = vmatpush1.bf16.msra.mxu0 %v1103
      %4089 = vmatprep.subr.bf16.mxu0 0
      %4090 = vmatpush1.bf16.msra.mxu0 %v1102
      %4091 = vmatprep.subr.bf16.mxu0 0
      %4092 = vmatpush1.bf16.msra.mxu0 %v1101
      %4093 = vmatprep.subr.bf16.mxu0 0
      %4094 = vmatpush1.bf16.msra.mxu0 %v1100
      %4095 = vmatprep.subr.bf16.mxu0 0
      %4096 = vmatpush1.bf16.msra.mxu0 %v1099
      %4097 = vmatprep.subr.bf16.mxu0 0
      %4098 = vmatpush2.bf16.msra.mxu0 0
      %4099 = vmatprep.subr.bf16.mxu0 0
      %4100 = vmatpush2.bf16.msra.mxu0 0
      %4101 = vmatprep.subr.bf16.mxu0 0
      %4102 = vmatpush2.bf16.msra.mxu0 0
      %4103 = vmatprep.subr.bf16.mxu0 0
      %4104 = vmatpush2.bf16.msra.mxu0 0
      %4105 = vmatprep.subr.bf16.mxu0 0
      %4106 = vmatpush2.bf16.msra.mxu0 %v1110
      %4107 = vmatprep.subr.bf16.mxu0 0
      %4108 = vmatpush2.bf16.msra.mxu0 %v1109
      %4109 = vmatprep.subr.bf16.mxu0 0
      %4110 = vmatpush2.bf16.msra.mxu0 %v1108
      %4111 = vmatprep.subr.bf16.mxu0 0
      %4112 = vmatpush2.bf16.msra.mxu0 %v1107
      %4113 = vmatprep.mubr.bf16.mxu0 %v4006
      %4114 = vmatmul.mubr.bf16.gmra.mxu0 %v3991
      %v4115 = vpop.f32.mrf.mxu0
      %v4116 = vadd.f32 %v4052, %v4115
      %v4117 = vpop.f32.mrf.mxu0
      %v4118 = vpop.f32.mrf.mxu0
      %v4119 = vadd.f32 %v4055, %v4118
      %v4120 = vpop.f32.mrf.mxu0
      %4121 = vmatprep.mubr.bf16.mxu0 %v4009
      %4122 = vmatmul.mubr.bf16.gmra.mxu0 %v3995
      %v4123 = vpop.f32.mrf.mxu0
      %v4124 = vadd.f32 %v4060, %v4123
      %v4125 = vpop.f32.mrf.mxu0
      %v4126 = vpop.f32.mrf.mxu0
      %v4127 = vadd.f32 %v4063, %v4126
      %v4128 = vpop.f32.mrf.mxu0
      %4129 = vmatprep.mubr.bf16.mxu0 %v4012
      %4130 = vmatmul.mubr.bf16.gmra.mxu0 %v3999
      %v4131 = vpop.f32.mrf.mxu0
      %v4132 = vadd.f32 %v4068, %v4131
      %v4133 = vpop.f32.mrf.mxu0
      %v4134 = vpop.f32.mrf.mxu0
      %v4135 = vadd.f32 %v4071, %v4134
      %v4136 = vpop.f32.mrf.mxu0
      %4137 = vmatprep.mubr.bf16.mxu0 %v4015
      %4138 = vmatmul.mubr.bf16.gmra.mxu0 %v4003
      %v4139 = vpop.f32.mrf.mxu0
      %v4140 = vadd.f32 %v4076, %v4139
      %v4141 = vpop.f32.mrf.mxu0
      %v4142 = vpop.f32.mrf.mxu0
      %v4143 = vpop.f32.mrf.mxu0
      %4144 = vdwg.mxu0
      %v4145 = vmax.f32 %v4116, 0.0
      %v4146 = vmax.f32 %v4119, 0.0
      %v4147 = vmax.f32 %v4124, 0.0
      %v4148 = vmax.f32 %v4127, 0.0
      %v4149 = vmax.f32 %v4132, 0.0
      %v4150 = vmax.f32 %v4135, 0.0
      %v4151 = vmax.f32 %v4140, 0.0
      %v4152 = vsel %vm927, %v4145, 0.0
      %v4153 = vsel %vm927, %v4146, 0.0
      %v4154 = vadd.f32 %v4152, %v4153
      %v4155 = vsel %vm927, %v4147, 0.0
      %v4156 = vadd.f32 %v4154, %v4155
      %v4157 = vsel %vm927, %v4148, 0.0
      %v4158 = vadd.f32 %v4156, %v4157
      %v4159 = vsel %vm927, %v4149, 0.0
      %v4160 = vadd.f32 %v4158, %v4159
      %v4161 = vsel %vm927, %v4150, 0.0
      %v4162 = vadd.f32 %v4160, %v4161
      %v4163 = vsel %vm1297, %v4151, 0.0
      %v4164 = vadd.f32 %v4162, %v4163
      %v4165 = vrot.slane %v4164, 4
      %v4166 = vadd.f32 %v4164, %v4165
      %v4167 = vrot.slane %v4166, 2
      %v4168 = vadd.f32 %v4166, %v4167
      %v4169 = vrot.slane %v4168, 1
      %v4170 = vadd.f32 %v4168, %v4169
      %v4171 = vmul.f32 %v4170, %v1306
      %4172 = vset.pattern.permute.xlu0 5
      %4173 = vperm.xlu0 %4172, %v292
      %v4174 = vpop.permute.xlu0 %4173
      %4176 = vset.pattern.permute.xlu0 5
      %4177 = vperm.xlu0 %4176, %v293
      %v4178 = vpop.permute.xlu0 %4177
      %4180 = vset.pattern.permute.xlu0 5
      %4181 = vperm.xlu0 %4180, %v294
      %v4182 = vpop.permute.xlu0 %4181
      %4184 = vset.pattern.permute.xlu0 5
      %4185 = vperm.xlu0 %4184, %v295
      %v4186 = vpop.permute.xlu0 %4185
      %4188 = vset.pattern.permute.xlu0 5
      %4189 = vperm.xlu0 %4188, %v296
      %v4190 = vpop.permute.xlu0 %4189
      %4192 = vset.pattern.permute.xlu0 5
      %4193 = vperm.xlu0 %4192, %v297
      %v4194 = vpop.permute.xlu0 %4193
      %4196 = vset.pattern.permute.xlu0 5
      %4197 = vperm.xlu0 %4196, %v298
      %v4198 = vpop.permute.xlu0 %4197
      %4200 = vset.pattern.permute.xlu0 5
      %4201 = vperm.xlu0 %4200, %v299
      %v4202 = vpop.permute.xlu0 %4201
      %v4204 = vmul.f32 %v4174, %v410
      %v4205 = vmul.f32 %v4178, %v410
      %v4206 = vmul.f32 %v4182, %v410
      %v4207 = vmul.f32 %v4186, %v410
      %v4208 = vmul.f32 %v4190, %v410
      %v4209 = vmul.f32 %v4194, %v410
      %v4210 = vmul.f32 %v4198, %v410
      %v4211 = vmul.f32 %v4202, %v410
      %v4212 = vmul.f32 %v4174, %v422
      %v4213 = vmul.f32 %v4178, %v422
      %v4214 = vmul.f32 %v4182, %v422
      %v4215 = vmul.f32 %v4186, %v422
      %v4216 = vmul.f32 %v4190, %v422
      %v4217 = vmul.f32 %v4194, %v422
      %v4218 = vmul.f32 %v4198, %v422
      %v4219 = vmul.f32 %v4202, %v422
      %v4228 = vrot.slane %v4212, 1
      %v4229 = vrot.slane %v4213, 1
      %v4230 = vsel %vm439, %v4228, %v4229
      %v4231 = vrot.slane %v4214, 1
      %v4232 = vsel %vm439, %v4229, %v4231
      %v4233 = vrot.slane %v4215, 1
      %v4234 = vsel %vm439, %v4231, %v4233
      %v4235 = vrot.slane %v4216, 1
      %v4236 = vsel %vm439, %v4233, %v4235
      %v4237 = vrot.slane %v4217, 1
      %v4238 = vsel %vm439, %v4235, %v4237
      %v4239 = vrot.slane %v4218, 1
      %v4240 = vsel %vm439, %v4237, %v4239
      %v4241 = vrot.slane %v4219, 1
      %v4242 = vsel %vm439, %v4239, %v4241
      %v4251 = vadd.f32 %v4204, %v4230
      %v4252 = vadd.f32 %v4205, %v4232
      %v4253 = vadd.f32 %v4206, %v4234
      %v4254 = vadd.f32 %v4207, %v4236
      %v4255 = vadd.f32 %v4208, %v4238
      %v4256 = vadd.f32 %v4209, %v4240
      %v4257 = vadd.f32 %v4210, %v4242
      %v4258 = vadd.f32 %v4211, %v4241
      %v4259 = vmul.f32 %v4174, %v474
      %v4260 = vmul.f32 %v4178, %v474
      %v4261 = vmul.f32 %v4182, %v474
      %v4262 = vmul.f32 %v4186, %v474
      %v4263 = vmul.f32 %v4190, %v474
      %v4264 = vmul.f32 %v4194, %v474
      %v4265 = vmul.f32 %v4198, %v474
      %v4266 = vmul.f32 %v4202, %v474
      %v4275 = vrot.slane %v4259, 2
      %v4276 = vrot.slane %v4260, 2
      %v4277 = vsel %vm491, %v4275, %v4276
      %v4278 = vrot.slane %v4261, 2
      %v4279 = vsel %vm491, %v4276, %v4278
      %v4280 = vrot.slane %v4262, 2
      %v4281 = vsel %vm491, %v4278, %v4280
      %v4282 = vrot.slane %v4263, 2
      %v4283 = vsel %vm491, %v4280, %v4282
      %v4284 = vrot.slane %v4264, 2
      %v4285 = vsel %vm491, %v4282, %v4284
      %v4286 = vrot.slane %v4265, 2
      %v4287 = vsel %vm491, %v4284, %v4286
      %v4288 = vrot.slane %v4266, 2
      %v4289 = vsel %vm491, %v4286, %v4288
      %v4298 = vadd.f32 %v4251, %v4277
      %v4299 = vadd.f32 %v4252, %v4279
      %v4300 = vadd.f32 %v4253, %v4281
      %v4301 = vadd.f32 %v4254, %v4283
      %v4302 = vadd.f32 %v4255, %v4285
      %v4303 = vadd.f32 %v4256, %v4287
      %v4304 = vadd.f32 %v4257, %v4289
      %v4305 = vadd.f32 %v4258, %v4288
      %v4306 = vmul.f32 %v4174, %v526
      %v4307 = vmul.f32 %v4178, %v526
      %v4308 = vmul.f32 %v4182, %v526
      %v4309 = vmul.f32 %v4186, %v526
      %v4310 = vmul.f32 %v4190, %v526
      %v4311 = vmul.f32 %v4194, %v526
      %v4312 = vmul.f32 %v4198, %v526
      %v4313 = vmul.f32 %v4202, %v526
      %v4322 = vrot.slane %v4306, 3
      %v4323 = vrot.slane %v4307, 3
      %v4324 = vsel %vm543, %v4322, %v4323
      %v4325 = vrot.slane %v4308, 3
      %v4326 = vsel %vm543, %v4323, %v4325
      %v4327 = vrot.slane %v4309, 3
      %v4328 = vsel %vm543, %v4325, %v4327
      %v4329 = vrot.slane %v4310, 3
      %v4330 = vsel %vm543, %v4327, %v4329
      %v4331 = vrot.slane %v4311, 3
      %v4332 = vsel %vm543, %v4329, %v4331
      %v4333 = vrot.slane %v4312, 3
      %v4334 = vsel %vm543, %v4331, %v4333
      %v4335 = vrot.slane %v4313, 3
      %v4336 = vsel %vm543, %v4333, %v4335
      %v4345 = vadd.f32 %v4298, %v4324
      %v4346 = vadd.f32 %v4299, %v4326
      %v4347 = vadd.f32 %v4300, %v4328
      %v4348 = vadd.f32 %v4301, %v4330
      %v4349 = vadd.f32 %v4302, %v4332
      %v4350 = vadd.f32 %v4303, %v4334
      %v4351 = vadd.f32 %v4304, %v4336
      %v4352 = vadd.f32 %v4305, %v4335
      %v4353 = vmul.f32 %v4174, %v578
      %v4354 = vmul.f32 %v4178, %v578
      %v4355 = vmul.f32 %v4182, %v578
      %v4356 = vmul.f32 %v4186, %v578
      %v4357 = vmul.f32 %v4190, %v578
      %v4358 = vmul.f32 %v4194, %v578
      %v4359 = vmul.f32 %v4198, %v578
      %v4360 = vmul.f32 %v4202, %v578
      %v4369 = vrot.slane %v4353, 4
      %v4370 = vrot.slane %v4354, 4
      %v4371 = vsel %vm595, %v4369, %v4370
      %v4372 = vrot.slane %v4355, 4
      %v4373 = vsel %vm595, %v4370, %v4372
      %v4374 = vrot.slane %v4356, 4
      %v4375 = vsel %vm595, %v4372, %v4374
      %v4376 = vrot.slane %v4357, 4
      %v4377 = vsel %vm595, %v4374, %v4376
      %v4378 = vrot.slane %v4358, 4
      %v4379 = vsel %vm595, %v4376, %v4378
      %v4380 = vrot.slane %v4359, 4
      %v4381 = vsel %vm595, %v4378, %v4380
      %v4382 = vrot.slane %v4360, 4
      %v4383 = vsel %vm595, %v4380, %v4382
      %v4392 = vadd.f32 %v4345, %v4371
      %v4393 = vadd.f32 %v4346, %v4373
      %v4394 = vadd.f32 %v4347, %v4375
      %v4395 = vadd.f32 %v4348, %v4377
      %v4396 = vadd.f32 %v4349, %v4379
      %v4397 = vadd.f32 %v4350, %v4381
      %v4398 = vadd.f32 %v4351, %v4383
      %v4399 = vadd.f32 %v4352, %v4382
      %v4400 = vmul.f32 %v4174, %v630
      %v4401 = vmul.f32 %v4178, %v630
      %v4402 = vmul.f32 %v4182, %v630
      %v4403 = vmul.f32 %v4186, %v630
      %v4404 = vmul.f32 %v4190, %v630
      %v4405 = vmul.f32 %v4194, %v630
      %v4406 = vmul.f32 %v4198, %v630
      %v4407 = vmul.f32 %v4202, %v630
      %v4416 = vrot.slane %v4400, 5
      %v4417 = vrot.slane %v4401, 5
      %v4418 = vsel %vm647, %v4416, %v4417
      %v4419 = vrot.slane %v4402, 5
      %v4420 = vsel %vm647, %v4417, %v4419
      %v4421 = vrot.slane %v4403, 5
      %v4422 = vsel %vm647, %v4419, %v4421
      %v4423 = vrot.slane %v4404, 5
      %v4424 = vsel %vm647, %v4421, %v4423
      %v4425 = vrot.slane %v4405, 5
      %v4426 = vsel %vm647, %v4423, %v4425
      %v4427 = vrot.slane %v4406, 5
      %v4428 = vsel %vm647, %v4425, %v4427
      %v4429 = vrot.slane %v4407, 5
      %v4430 = vsel %vm647, %v4427, %v4429
      %v4439 = vadd.f32 %v4392, %v4418
      %v4440 = vadd.f32 %v4393, %v4420
      %v4441 = vadd.f32 %v4394, %v4422
      %v4442 = vadd.f32 %v4395, %v4424
      %v4443 = vadd.f32 %v4396, %v4426
      %v4444 = vadd.f32 %v4397, %v4428
      %v4445 = vadd.f32 %v4398, %v4430
      %v4446 = vadd.f32 %v4399, %v4429
      %v4447 = vmul.f32 %v4174, %v682
      %v4448 = vmul.f32 %v4178, %v682
      %v4449 = vmul.f32 %v4182, %v682
      %v4450 = vmul.f32 %v4186, %v682
      %v4451 = vmul.f32 %v4190, %v682
      %v4452 = vmul.f32 %v4194, %v682
      %v4453 = vmul.f32 %v4198, %v682
      %v4454 = vmul.f32 %v4202, %v682
      %v4463 = vrot.slane %v4447, 6
      %v4464 = vrot.slane %v4448, 6
      %v4465 = vsel %vm699, %v4463, %v4464
      %v4466 = vrot.slane %v4449, 6
      %v4467 = vsel %vm699, %v4464, %v4466
      %v4468 = vrot.slane %v4450, 6
      %v4469 = vsel %vm699, %v4466, %v4468
      %v4470 = vrot.slane %v4451, 6
      %v4471 = vsel %vm699, %v4468, %v4470
      %v4472 = vrot.slane %v4452, 6
      %v4473 = vsel %vm699, %v4470, %v4472
      %v4474 = vrot.slane %v4453, 6
      %v4475 = vsel %vm699, %v4472, %v4474
      %v4476 = vrot.slane %v4454, 6
      %v4477 = vsel %vm699, %v4474, %v4476
      %v4486 = vadd.f32 %v4439, %v4465
      %v4487 = vadd.f32 %v4440, %v4467
      %v4488 = vadd.f32 %v4441, %v4469
      %v4489 = vadd.f32 %v4442, %v4471
      %v4490 = vadd.f32 %v4443, %v4473
      %v4491 = vadd.f32 %v4444, %v4475
      %v4492 = vadd.f32 %v4445, %v4477
      %v4493 = vadd.f32 %v4446, %v4476
      %v4494 = vadd.f32 %v4486, %v735
      %v4495 = vadd.f32 %v4487, %v735
      %v4496 = vadd.f32 %v4488, %v735
      %v4497 = vadd.f32 %v4489, %v735
      %v4498 = vadd.f32 %v4490, %v735
      %v4499 = vadd.f32 %v4491, %v735
      %v4500 = vadd.f32 %v4492, %v735
      %v4501 = vadd.f32 %v4493, %v735
      %v4502 = vmax.f32 %v4494, 0.0
      %v4503 = vmax.f32 %v4495, 0.0
      %v4504 = vmax.f32 %v4496, 0.0
      %v4505 = vmax.f32 %v4497, 0.0
      %v4506 = vmax.f32 %v4498, 0.0
      %v4507 = vmax.f32 %v4499, 0.0
      %v4508 = vmax.f32 %v4500, 0.0
      %v4509 = vmax.f32 %v4501, 0.0
      %v4517 = vrot.slane %v4502, 1
      %v4518 = vrot.slane %v4503, 1
      %v4519 = vsel %vm439, %v4517, %v4518
      %v4520 = vrot.slane %v4504, 1
      %v4521 = vsel %vm439, %v4518, %v4520
      %v4522 = vrot.slane %v4505, 1
      %v4523 = vsel %vm439, %v4520, %v4522
      %v4524 = vrot.slane %v4506, 1
      %v4525 = vsel %vm439, %v4522, %v4524
      %v4526 = vrot.slane %v4507, 1
      %v4527 = vsel %vm439, %v4524, %v4526
      %v4528 = vrot.slane %v4508, 1
      %v4529 = vsel %vm439, %v4526, %v4528
      %4530 = vrot.lane.b32.xlu0 %v4519, 64
      %v4531 = vpop.permute.xlu0 %4530
      %4532 = vrot.lane.b32.xlu0 %v4521, 64
      %v4533 = vpop.permute.xlu0 %4532
      %4534 = vrot.lane.b32.xlu0 %v4523, 64
      %v4535 = vpop.permute.xlu0 %4534
      %4536 = vrot.lane.b32.xlu0 %v4525, 64
      %v4537 = vpop.permute.xlu0 %4536
      %4538 = vrot.lane.b32.xlu0 %v4527, 64
      %v4539 = vpop.permute.xlu0 %4538
      %4540 = vrot.lane.b32.xlu0 %v4529, 64
      %v4541 = vpop.permute.xlu0 %4540
      %4542 = vrot.lane.b32.xlu0 %v4528, 64
      %v4543 = vpop.permute.xlu0 %4542
      %v4551 = vrot.slane %v4502, 2
      %v4552 = vrot.slane %v4503, 2
      %v4553 = vsel %vm491, %v4551, %v4552
      %v4554 = vrot.slane %v4504, 2
      %v4555 = vsel %vm491, %v4552, %v4554
      %v4556 = vrot.slane %v4505, 2
      %v4557 = vsel %vm491, %v4554, %v4556
      %v4558 = vrot.slane %v4506, 2
      %v4559 = vsel %vm491, %v4556, %v4558
      %v4560 = vrot.slane %v4507, 2
      %v4561 = vsel %vm491, %v4558, %v4560
      %v4562 = vrot.slane %v4508, 2
      %v4563 = vsel %vm491, %v4560, %v4562
      %v4571 = vrot.slane %v4502, 3
      %v4572 = vrot.slane %v4503, 3
      %v4573 = vsel %vm543, %v4571, %v4572
      %v4574 = vrot.slane %v4504, 3
      %v4575 = vsel %vm543, %v4572, %v4574
      %v4576 = vrot.slane %v4505, 3
      %v4577 = vsel %vm543, %v4574, %v4576
      %v4578 = vrot.slane %v4506, 3
      %v4579 = vsel %vm543, %v4576, %v4578
      %v4580 = vrot.slane %v4507, 3
      %v4581 = vsel %vm543, %v4578, %v4580
      %v4582 = vrot.slane %v4508, 3
      %v4583 = vsel %vm543, %v4580, %v4582
      %4584 = vrot.lane.b32.xlu0 %v4573, 64
      %v4585 = vpop.permute.xlu0 %4584
      %4586 = vrot.lane.b32.xlu0 %v4575, 64
      %v4587 = vpop.permute.xlu0 %4586
      %4588 = vrot.lane.b32.xlu0 %v4577, 64
      %v4589 = vpop.permute.xlu0 %4588
      %4590 = vrot.lane.b32.xlu0 %v4579, 64
      %v4591 = vpop.permute.xlu0 %4590
      %4592 = vrot.lane.b32.xlu0 %v4581, 64
      %v4593 = vpop.permute.xlu0 %4592
      %4594 = vrot.lane.b32.xlu0 %v4583, 64
      %v4595 = vpop.permute.xlu0 %4594
      %4596 = vrot.lane.b32.xlu0 %v4582, 64
      %v4597 = vpop.permute.xlu0 %4596
      %v4605 = vrot.slane %v4502, 4
      %v4606 = vrot.slane %v4503, 4
      %v4607 = vsel %vm595, %v4605, %v4606
      %v4608 = vrot.slane %v4504, 4
      %v4609 = vsel %vm595, %v4606, %v4608
      %v4610 = vrot.slane %v4505, 4
      %v4611 = vsel %vm595, %v4608, %v4610
      %v4612 = vrot.slane %v4506, 4
      %v4613 = vsel %vm595, %v4610, %v4612
      %v4614 = vrot.slane %v4507, 4
      %v4615 = vsel %vm595, %v4612, %v4614
      %v4616 = vrot.slane %v4508, 4
      %v4617 = vsel %vm595, %v4614, %v4616
      %v4626 = vrot.slane %v4502, 5
      %v4627 = vrot.slane %v4503, 5
      %v4628 = vsel %vm647, %v4626, %v4627
      %v4629 = vrot.slane %v4504, 5
      %v4630 = vsel %vm647, %v4627, %v4629
      %v4631 = vrot.slane %v4505, 5
      %v4632 = vsel %vm647, %v4629, %v4631
      %v4633 = vrot.slane %v4506, 5
      %v4634 = vsel %vm647, %v4631, %v4633
      %v4635 = vrot.slane %v4507, 5
      %v4636 = vsel %vm647, %v4633, %v4635
      %v4637 = vrot.slane %v4508, 5
      %v4638 = vsel %vm647, %v4635, %v4637
      %v4639 = vrot.slane %v4509, 5
      %v4640 = vsel %vm647, %v4637, %v4639
      %4641 = vrot.lane.b32.xlu0 %v4628, 64
      %v4642 = vpop.permute.xlu0 %4641
      %4643 = vrot.lane.b32.xlu0 %v4630, 64
      %v4644 = vpop.permute.xlu0 %4643
      %4645 = vrot.lane.b32.xlu0 %v4632, 64
      %v4646 = vpop.permute.xlu0 %4645
      %4647 = vrot.lane.b32.xlu0 %v4634, 64
      %v4648 = vpop.permute.xlu0 %4647
      %4649 = vrot.lane.b32.xlu0 %v4636, 64
      %v4650 = vpop.permute.xlu0 %4649
      %4651 = vrot.lane.b32.xlu0 %v4638, 64
      %v4652 = vpop.permute.xlu0 %4651
      %4653 = vrot.lane.b32.xlu0 %v4640, 64
      %v4654 = vpop.permute.xlu0 %4653
      %v4662 = vrot.slane %v4502, 6
      %v4663 = vrot.slane %v4503, 6
      %v4664 = vsel %vm699, %v4662, %v4663
      %v4665 = vrot.slane %v4504, 6
      %v4666 = vsel %vm699, %v4663, %v4665
      %v4667 = vrot.slane %v4505, 6
      %v4668 = vsel %vm699, %v4665, %v4667
      %v4669 = vrot.slane %v4506, 6
      %v4670 = vsel %vm699, %v4667, %v4669
      %v4671 = vrot.slane %v4507, 6
      %v4672 = vsel %vm699, %v4669, %v4671
      %v4673 = vrot.slane %v4508, 6
      %v4674 = vsel %vm699, %v4671, %v4673
      %v4675 = vrot.slane %v4509, 6
      %v4676 = vsel %vm699, %v4673, %v4675
      %v4684 = vsel %vm927, %v4502, %v4531
      %v4685 = vsel %vm927, %v4503, %v4533
      %v4686 = vsel %vm927, %v4504, %v4535
      %v4687 = vsel %vm927, %v4505, %v4537
      %v4688 = vsel %vm927, %v4506, %v4539
      %v4689 = vsel %vm927, %v4507, %v4541
      %v4690 = vsel %vm927, %v4508, %v4543
      %v4691 = vsel %vm927, %v4553, %v4585
      %v4692 = vsel %vm927, %v4555, %v4587
      %v4693 = vsel %vm927, %v4557, %v4589
      %v4694 = vsel %vm927, %v4559, %v4591
      %v4695 = vsel %vm927, %v4561, %v4593
      %v4696 = vsel %vm927, %v4563, %v4595
      %v4697 = vsel %vm927, %v4562, %v4597
      %v4698 = vsel %vm927, %v4607, %v4642
      %v4699 = vsel %vm927, %v4609, %v4644
      %v4700 = vsel %vm927, %v4611, %v4646
      %v4701 = vsel %vm927, %v4613, %v4648
      %v4702 = vsel %vm927, %v4615, %v4650
      %v4703 = vsel %vm927, %v4617, %v4652
      %v4704 = vsel %vm927, %v4616, %v4654
      %v4705 = vpack.c.bf16 %v4685, %v4684
      %v4706 = vpack.c.bf16 %v4692, %v4691
      %v4707 = vpack.c.bf16 %v4699, %v4698
      %v4708 = vpack.c.bf16 %v4666, %v4664
      %v4709 = vpack.c.bf16 %v4687, %v4686
      %v4710 = vpack.c.bf16 %v4694, %v4693
      %v4711 = vpack.c.bf16 %v4701, %v4700
      %v4712 = vpack.c.bf16 %v4670, %v4668
      %v4713 = vpack.c.bf16 %v4689, %v4688
      %v4714 = vpack.c.bf16 %v4696, %v4695
      %v4715 = vpack.c.bf16 %v4703, %v4702
      %v4716 = vpack.c.bf16 %v4674, %v4672
      %v4717 = vpack.c.bf16 %v4690, %v4690
      %v4718 = vpack.c.bf16 %v4697, %v4697
      %v4719 = vpack.c.bf16 %v4704, %v4704
      %v4720 = vpack.c.bf16 %v4676, %v4676
      %v4722 = vsel %vm927, %v4708, 0
      %v4725 = vsel %vm927, %v4712, 0
      %v4728 = vsel %vm927, %v4716, 0
      %v4731 = vsel %vm927, %v4720, 0
      %4733 = vmatprep.subr.bf16.mxu0 0
      %4734 = vmatpush1.bf16.msra.mxu0 %v1090
      %4735 = vmatprep.subr.bf16.mxu0 0
      %4736 = vmatpush1.bf16.msra.mxu0 %v1089
      %4737 = vmatprep.subr.bf16.mxu0 0
      %4738 = vmatpush1.bf16.msra.mxu0 %v1088
      %4739 = vmatprep.subr.bf16.mxu0 0
      %4740 = vmatpush1.bf16.msra.mxu0 %v1087
      %4741 = vmatprep.subr.bf16.mxu0 0
      %4742 = vmatpush1.bf16.msra.mxu0 %v1086
      %4743 = vmatprep.subr.bf16.mxu0 0
      %4744 = vmatpush1.bf16.msra.mxu0 %v1085
      %4745 = vmatprep.subr.bf16.mxu0 0
      %4746 = vmatpush1.bf16.msra.mxu0 %v1084
      %4747 = vmatprep.subr.bf16.mxu0 0
      %4748 = vmatpush1.bf16.msra.mxu0 %v1083
      %4749 = vmatprep.subr.bf16.mxu0 0
      %4750 = vmatpush2.bf16.msra.mxu0 %v1098
      %4751 = vmatprep.subr.bf16.mxu0 0
      %4752 = vmatpush2.bf16.msra.mxu0 %v1097
      %4753 = vmatprep.subr.bf16.mxu0 0
      %4754 = vmatpush2.bf16.msra.mxu0 %v1096
      %4755 = vmatprep.subr.bf16.mxu0 0
      %4756 = vmatpush2.bf16.msra.mxu0 %v1095
      %4757 = vmatprep.subr.bf16.mxu0 0
      %4758 = vmatpush2.bf16.msra.mxu0 %v1094
      %4759 = vmatprep.subr.bf16.mxu0 0
      %4760 = vmatpush2.bf16.msra.mxu0 %v1093
      %4761 = vmatprep.subr.bf16.mxu0 0
      %4762 = vmatpush2.bf16.msra.mxu0 %v1092
      %4763 = vmatprep.subr.bf16.mxu0 0
      %4764 = vmatpush2.bf16.msra.mxu0 %v1091
      %4765 = vmatprep.mubr.bf16.mxu0 %v4706
      %4766 = vmatmul.mubr.bf16.gmra.mxu0 %v4705
      %v4767 = vpop.f32.mrf.mxu0
      %v4768 = vadd.f32 %v969, %v4767
      %v4769 = vpop.f32.mrf.mxu0
      %v4770 = vpop.f32.mrf.mxu0
      %v4771 = vadd.f32 %v969, %v4770
      %v4772 = vpop.f32.mrf.mxu0
      %4773 = vmatprep.mubr.bf16.mxu0 %v4710
      %4774 = vmatmul.mubr.bf16.gmra.mxu0 %v4709
      %v4775 = vpop.f32.mrf.mxu0
      %v4776 = vadd.f32 %v969, %v4775
      %v4777 = vpop.f32.mrf.mxu0
      %v4778 = vpop.f32.mrf.mxu0
      %v4779 = vadd.f32 %v969, %v4778
      %v4780 = vpop.f32.mrf.mxu0
      %4781 = vmatprep.mubr.bf16.mxu0 %v4714
      %4782 = vmatmul.mubr.bf16.gmra.mxu0 %v4713
      %v4783 = vpop.f32.mrf.mxu0
      %v4784 = vadd.f32 %v969, %v4783
      %v4785 = vpop.f32.mrf.mxu0
      %v4786 = vpop.f32.mrf.mxu0
      %v4787 = vadd.f32 %v969, %v4786
      %v4788 = vpop.f32.mrf.mxu0
      %4789 = vmatprep.mubr.bf16.mxu0 %v4718
      %4790 = vmatmul.mubr.bf16.gmra.mxu0 %v4717
      %v4791 = vpop.f32.mrf.mxu0
      %v4792 = vadd.f32 %v969, %v4791
      %v4793 = vpop.f32.mrf.mxu0
      %v4794 = vpop.f32.mrf.mxu0
      %v4795 = vpop.f32.mrf.mxu0
      %4796 = vdwg.mxu0
      %4797 = vmatprep.subr.bf16.mxu0 0
      %4798 = vmatpush1.bf16.msra.mxu0 %v1106
      %4799 = vmatprep.subr.bf16.mxu0 0
      %4800 = vmatpush1.bf16.msra.mxu0 %v1105
      %4801 = vmatprep.subr.bf16.mxu0 0
      %4802 = vmatpush1.bf16.msra.mxu0 %v1104
      %4803 = vmatprep.subr.bf16.mxu0 0
      %4804 = vmatpush1.bf16.msra.mxu0 %v1103
      %4805 = vmatprep.subr.bf16.mxu0 0
      %4806 = vmatpush1.bf16.msra.mxu0 %v1102
      %4807 = vmatprep.subr.bf16.mxu0 0
      %4808 = vmatpush1.bf16.msra.mxu0 %v1101
      %4809 = vmatprep.subr.bf16.mxu0 0
      %4810 = vmatpush1.bf16.msra.mxu0 %v1100
      %4811 = vmatprep.subr.bf16.mxu0 0
      %4812 = vmatpush1.bf16.msra.mxu0 %v1099
      %4813 = vmatprep.subr.bf16.mxu0 0
      %4814 = vmatpush2.bf16.msra.mxu0 0
      %4815 = vmatprep.subr.bf16.mxu0 0
      %4816 = vmatpush2.bf16.msra.mxu0 0
      %4817 = vmatprep.subr.bf16.mxu0 0
      %4818 = vmatpush2.bf16.msra.mxu0 0
      %4819 = vmatprep.subr.bf16.mxu0 0
      %4820 = vmatpush2.bf16.msra.mxu0 0
      %4821 = vmatprep.subr.bf16.mxu0 0
      %4822 = vmatpush2.bf16.msra.mxu0 %v1110
      %4823 = vmatprep.subr.bf16.mxu0 0
      %4824 = vmatpush2.bf16.msra.mxu0 %v1109
      %4825 = vmatprep.subr.bf16.mxu0 0
      %4826 = vmatpush2.bf16.msra.mxu0 %v1108
      %4827 = vmatprep.subr.bf16.mxu0 0
      %4828 = vmatpush2.bf16.msra.mxu0 %v1107
      %4829 = vmatprep.mubr.bf16.mxu0 %v4722
      %4830 = vmatmul.mubr.bf16.gmra.mxu0 %v4707
      %v4831 = vpop.f32.mrf.mxu0
      %v4832 = vadd.f32 %v4768, %v4831
      %v4833 = vpop.f32.mrf.mxu0
      %v4834 = vpop.f32.mrf.mxu0
      %v4835 = vadd.f32 %v4771, %v4834
      %v4836 = vpop.f32.mrf.mxu0
      %4837 = vmatprep.mubr.bf16.mxu0 %v4725
      %4838 = vmatmul.mubr.bf16.gmra.mxu0 %v4711
      %v4839 = vpop.f32.mrf.mxu0
      %v4840 = vadd.f32 %v4776, %v4839
      %v4841 = vpop.f32.mrf.mxu0
      %v4842 = vpop.f32.mrf.mxu0
      %v4843 = vadd.f32 %v4779, %v4842
      %v4844 = vpop.f32.mrf.mxu0
      %4845 = vmatprep.mubr.bf16.mxu0 %v4728
      %4846 = vmatmul.mubr.bf16.gmra.mxu0 %v4715
      %v4847 = vpop.f32.mrf.mxu0
      %v4848 = vadd.f32 %v4784, %v4847
      %v4849 = vpop.f32.mrf.mxu0
      %v4850 = vpop.f32.mrf.mxu0
      %v4851 = vadd.f32 %v4787, %v4850
      %v4852 = vpop.f32.mrf.mxu0
      %4853 = vmatprep.mubr.bf16.mxu0 %v4731
      %4854 = vmatmul.mubr.bf16.gmra.mxu0 %v4719
      %v4855 = vpop.f32.mrf.mxu0
      %v4856 = vadd.f32 %v4792, %v4855
      %v4857 = vpop.f32.mrf.mxu0
      %v4858 = vpop.f32.mrf.mxu0
      %v4859 = vpop.f32.mrf.mxu0
      %4860 = vdwg.mxu0
      %v4861 = vmax.f32 %v4832, 0.0
      %v4862 = vmax.f32 %v4835, 0.0
      %v4863 = vmax.f32 %v4840, 0.0
      %v4864 = vmax.f32 %v4843, 0.0
      %v4865 = vmax.f32 %v4848, 0.0
      %v4866 = vmax.f32 %v4851, 0.0
      %v4867 = vmax.f32 %v4856, 0.0
      %v4868 = vsel %vm927, %v4861, 0.0
      %v4869 = vsel %vm927, %v4862, 0.0
      %v4870 = vadd.f32 %v4868, %v4869
      %v4871 = vsel %vm927, %v4863, 0.0
      %v4872 = vadd.f32 %v4870, %v4871
      %v4873 = vsel %vm927, %v4864, 0.0
      %v4874 = vadd.f32 %v4872, %v4873
      %v4875 = vsel %vm927, %v4865, 0.0
      %v4876 = vadd.f32 %v4874, %v4875
      %v4877 = vsel %vm927, %v4866, 0.0
      %v4878 = vadd.f32 %v4876, %v4877
      %v4879 = vsel %vm1297, %v4867, 0.0
      %v4880 = vadd.f32 %v4878, %v4879
      %v4881 = vrot.slane %v4880, 4
      %v4882 = vadd.f32 %v4880, %v4881
      %v4883 = vrot.slane %v4882, 2
      %v4884 = vadd.f32 %v4882, %v4883
      %v4885 = vrot.slane %v4884, 1
      %v4886 = vadd.f32 %v4884, %v4885
      %v4887 = vmul.f32 %v4886, %v1306
      %4888 = vset.pattern.permute.xlu0 6
      %4889 = vperm.xlu0 %4888, %v292
      %v4890 = vpop.permute.xlu0 %4889
      %4892 = vset.pattern.permute.xlu0 6
      %4893 = vperm.xlu0 %4892, %v293
      %v4894 = vpop.permute.xlu0 %4893
      %4896 = vset.pattern.permute.xlu0 6
      %4897 = vperm.xlu0 %4896, %v294
      %v4898 = vpop.permute.xlu0 %4897
      %4900 = vset.pattern.permute.xlu0 6
      %4901 = vperm.xlu0 %4900, %v295
      %v4902 = vpop.permute.xlu0 %4901
      %4904 = vset.pattern.permute.xlu0 6
      %4905 = vperm.xlu0 %4904, %v296
      %v4906 = vpop.permute.xlu0 %4905
      %4908 = vset.pattern.permute.xlu0 6
      %4909 = vperm.xlu0 %4908, %v297
      %v4910 = vpop.permute.xlu0 %4909
      %4912 = vset.pattern.permute.xlu0 6
      %4913 = vperm.xlu0 %4912, %v298
      %v4914 = vpop.permute.xlu0 %4913
      %4916 = vset.pattern.permute.xlu0 6
      %4917 = vperm.xlu0 %4916, %v299
      %v4918 = vpop.permute.xlu0 %4917
      %v4920 = vmul.f32 %v4890, %v410
      %v4921 = vmul.f32 %v4894, %v410
      %v4922 = vmul.f32 %v4898, %v410
      %v4923 = vmul.f32 %v4902, %v410
      %v4924 = vmul.f32 %v4906, %v410
      %v4925 = vmul.f32 %v4910, %v410
      %v4926 = vmul.f32 %v4914, %v410
      %v4927 = vmul.f32 %v4918, %v410
      %v4928 = vmul.f32 %v4890, %v422
      %v4929 = vmul.f32 %v4894, %v422
      %v4930 = vmul.f32 %v4898, %v422
      %v4931 = vmul.f32 %v4902, %v422
      %v4932 = vmul.f32 %v4906, %v422
      %v4933 = vmul.f32 %v4910, %v422
      %v4934 = vmul.f32 %v4914, %v422
      %v4935 = vmul.f32 %v4918, %v422
      %v4944 = vrot.slane %v4928, 1
      %v4945 = vrot.slane %v4929, 1
      %v4946 = vsel %vm439, %v4944, %v4945
      %v4947 = vrot.slane %v4930, 1
      %v4948 = vsel %vm439, %v4945, %v4947
      %v4949 = vrot.slane %v4931, 1
      %v4950 = vsel %vm439, %v4947, %v4949
      %v4951 = vrot.slane %v4932, 1
      %v4952 = vsel %vm439, %v4949, %v4951
      %v4953 = vrot.slane %v4933, 1
      %v4954 = vsel %vm439, %v4951, %v4953
      %v4955 = vrot.slane %v4934, 1
      %v4956 = vsel %vm439, %v4953, %v4955
      %v4957 = vrot.slane %v4935, 1
      %v4958 = vsel %vm439, %v4955, %v4957
      %v4967 = vadd.f32 %v4920, %v4946
      %v4968 = vadd.f32 %v4921, %v4948
      %v4969 = vadd.f32 %v4922, %v4950
      %v4970 = vadd.f32 %v4923, %v4952
      %v4971 = vadd.f32 %v4924, %v4954
      %v4972 = vadd.f32 %v4925, %v4956
      %v4973 = vadd.f32 %v4926, %v4958
      %v4974 = vadd.f32 %v4927, %v4957
      %v4975 = vmul.f32 %v4890, %v474
      %v4976 = vmul.f32 %v4894, %v474
      %v4977 = vmul.f32 %v4898, %v474
      %v4978 = vmul.f32 %v4902, %v474
      %v4979 = vmul.f32 %v4906, %v474
      %v4980 = vmul.f32 %v4910, %v474
      %v4981 = vmul.f32 %v4914, %v474
      %v4982 = vmul.f32 %v4918, %v474
      %v4991 = vrot.slane %v4975, 2
      %v4992 = vrot.slane %v4976, 2
      %v4993 = vsel %vm491, %v4991, %v4992
      %v4994 = vrot.slane %v4977, 2
      %v4995 = vsel %vm491, %v4992, %v4994
      %v4996 = vrot.slane %v4978, 2
      %v4997 = vsel %vm491, %v4994, %v4996
      %v4998 = vrot.slane %v4979, 2
      %v4999 = vsel %vm491, %v4996, %v4998
      %v5000 = vrot.slane %v4980, 2
      %v5001 = vsel %vm491, %v4998, %v5000
      %v5002 = vrot.slane %v4981, 2
      %v5003 = vsel %vm491, %v5000, %v5002
      %v5004 = vrot.slane %v4982, 2
      %v5005 = vsel %vm491, %v5002, %v5004
      %v5014 = vadd.f32 %v4967, %v4993
      %v5015 = vadd.f32 %v4968, %v4995
      %v5016 = vadd.f32 %v4969, %v4997
      %v5017 = vadd.f32 %v4970, %v4999
      %v5018 = vadd.f32 %v4971, %v5001
      %v5019 = vadd.f32 %v4972, %v5003
      %v5020 = vadd.f32 %v4973, %v5005
      %v5021 = vadd.f32 %v4974, %v5004
      %v5022 = vmul.f32 %v4890, %v526
      %v5023 = vmul.f32 %v4894, %v526
      %v5024 = vmul.f32 %v4898, %v526
      %v5025 = vmul.f32 %v4902, %v526
      %v5026 = vmul.f32 %v4906, %v526
      %v5027 = vmul.f32 %v4910, %v526
      %v5028 = vmul.f32 %v4914, %v526
      %v5029 = vmul.f32 %v4918, %v526
      %v5038 = vrot.slane %v5022, 3
      %v5039 = vrot.slane %v5023, 3
      %v5040 = vsel %vm543, %v5038, %v5039
      %v5041 = vrot.slane %v5024, 3
      %v5042 = vsel %vm543, %v5039, %v5041
      %v5043 = vrot.slane %v5025, 3
      %v5044 = vsel %vm543, %v5041, %v5043
      %v5045 = vrot.slane %v5026, 3
      %v5046 = vsel %vm543, %v5043, %v5045
      %v5047 = vrot.slane %v5027, 3
      %v5048 = vsel %vm543, %v5045, %v5047
      %v5049 = vrot.slane %v5028, 3
      %v5050 = vsel %vm543, %v5047, %v5049
      %v5051 = vrot.slane %v5029, 3
      %v5052 = vsel %vm543, %v5049, %v5051
      %v5061 = vadd.f32 %v5014, %v5040
      %v5062 = vadd.f32 %v5015, %v5042
      %v5063 = vadd.f32 %v5016, %v5044
      %v5064 = vadd.f32 %v5017, %v5046
      %v5065 = vadd.f32 %v5018, %v5048
      %v5066 = vadd.f32 %v5019, %v5050
      %v5067 = vadd.f32 %v5020, %v5052
      %v5068 = vadd.f32 %v5021, %v5051
      %v5069 = vmul.f32 %v4890, %v578
      %v5070 = vmul.f32 %v4894, %v578
      %v5071 = vmul.f32 %v4898, %v578
      %v5072 = vmul.f32 %v4902, %v578
      %v5073 = vmul.f32 %v4906, %v578
      %v5074 = vmul.f32 %v4910, %v578
      %v5075 = vmul.f32 %v4914, %v578
      %v5076 = vmul.f32 %v4918, %v578
      %v5085 = vrot.slane %v5069, 4
      %v5086 = vrot.slane %v5070, 4
      %v5087 = vsel %vm595, %v5085, %v5086
      %v5088 = vrot.slane %v5071, 4
      %v5089 = vsel %vm595, %v5086, %v5088
      %v5090 = vrot.slane %v5072, 4
      %v5091 = vsel %vm595, %v5088, %v5090
      %v5092 = vrot.slane %v5073, 4
      %v5093 = vsel %vm595, %v5090, %v5092
      %v5094 = vrot.slane %v5074, 4
      %v5095 = vsel %vm595, %v5092, %v5094
      %v5096 = vrot.slane %v5075, 4
      %v5097 = vsel %vm595, %v5094, %v5096
      %v5098 = vrot.slane %v5076, 4
      %v5099 = vsel %vm595, %v5096, %v5098
      %v5108 = vadd.f32 %v5061, %v5087
      %v5109 = vadd.f32 %v5062, %v5089
      %v5110 = vadd.f32 %v5063, %v5091
      %v5111 = vadd.f32 %v5064, %v5093
      %v5112 = vadd.f32 %v5065, %v5095
      %v5113 = vadd.f32 %v5066, %v5097
      %v5114 = vadd.f32 %v5067, %v5099
      %v5115 = vadd.f32 %v5068, %v5098
      %v5116 = vmul.f32 %v4890, %v630
      %v5117 = vmul.f32 %v4894, %v630
      %v5118 = vmul.f32 %v4898, %v630
      %v5119 = vmul.f32 %v4902, %v630
      %v5120 = vmul.f32 %v4906, %v630
      %v5121 = vmul.f32 %v4910, %v630
      %v5122 = vmul.f32 %v4914, %v630
      %v5123 = vmul.f32 %v4918, %v630
      %v5132 = vrot.slane %v5116, 5
      %v5133 = vrot.slane %v5117, 5
      %v5134 = vsel %vm647, %v5132, %v5133
      %v5135 = vrot.slane %v5118, 5
      %v5136 = vsel %vm647, %v5133, %v5135
      %v5137 = vrot.slane %v5119, 5
      %v5138 = vsel %vm647, %v5135, %v5137
      %v5139 = vrot.slane %v5120, 5
      %v5140 = vsel %vm647, %v5137, %v5139
      %v5141 = vrot.slane %v5121, 5
      %v5142 = vsel %vm647, %v5139, %v5141
      %v5143 = vrot.slane %v5122, 5
      %v5144 = vsel %vm647, %v5141, %v5143
      %v5145 = vrot.slane %v5123, 5
      %v5146 = vsel %vm647, %v5143, %v5145
      %v5155 = vadd.f32 %v5108, %v5134
      %v5156 = vadd.f32 %v5109, %v5136
      %v5157 = vadd.f32 %v5110, %v5138
      %v5158 = vadd.f32 %v5111, %v5140
      %v5159 = vadd.f32 %v5112, %v5142
      %v5160 = vadd.f32 %v5113, %v5144
      %v5161 = vadd.f32 %v5114, %v5146
      %v5162 = vadd.f32 %v5115, %v5145
      %v5163 = vmul.f32 %v4890, %v682
      %v5164 = vmul.f32 %v4894, %v682
      %v5165 = vmul.f32 %v4898, %v682
      %v5166 = vmul.f32 %v4902, %v682
      %v5167 = vmul.f32 %v4906, %v682
      %v5168 = vmul.f32 %v4910, %v682
      %v5169 = vmul.f32 %v4914, %v682
      %v5170 = vmul.f32 %v4918, %v682
      %v5179 = vrot.slane %v5163, 6
      %v5180 = vrot.slane %v5164, 6
      %v5181 = vsel %vm699, %v5179, %v5180
      %v5182 = vrot.slane %v5165, 6
      %v5183 = vsel %vm699, %v5180, %v5182
      %v5184 = vrot.slane %v5166, 6
      %v5185 = vsel %vm699, %v5182, %v5184
      %v5186 = vrot.slane %v5167, 6
      %v5187 = vsel %vm699, %v5184, %v5186
      %v5188 = vrot.slane %v5168, 6
      %v5189 = vsel %vm699, %v5186, %v5188
      %v5190 = vrot.slane %v5169, 6
      %v5191 = vsel %vm699, %v5188, %v5190
      %v5192 = vrot.slane %v5170, 6
      %v5193 = vsel %vm699, %v5190, %v5192
      %v5202 = vadd.f32 %v5155, %v5181
      %v5203 = vadd.f32 %v5156, %v5183
      %v5204 = vadd.f32 %v5157, %v5185
      %v5205 = vadd.f32 %v5158, %v5187
      %v5206 = vadd.f32 %v5159, %v5189
      %v5207 = vadd.f32 %v5160, %v5191
      %v5208 = vadd.f32 %v5161, %v5193
      %v5209 = vadd.f32 %v5162, %v5192
      %v5210 = vadd.f32 %v5202, %v735
      %v5211 = vadd.f32 %v5203, %v735
      %v5212 = vadd.f32 %v5204, %v735
      %v5213 = vadd.f32 %v5205, %v735
      %v5214 = vadd.f32 %v5206, %v735
      %v5215 = vadd.f32 %v5207, %v735
      %v5216 = vadd.f32 %v5208, %v735
      %v5217 = vadd.f32 %v5209, %v735
      %v5218 = vmax.f32 %v5210, 0.0
      %v5219 = vmax.f32 %v5211, 0.0
      %v5220 = vmax.f32 %v5212, 0.0
      %v5221 = vmax.f32 %v5213, 0.0
      %v5222 = vmax.f32 %v5214, 0.0
      %v5223 = vmax.f32 %v5215, 0.0
      %v5224 = vmax.f32 %v5216, 0.0
      %v5225 = vmax.f32 %v5217, 0.0
      %v5233 = vrot.slane %v5218, 1
      %v5234 = vrot.slane %v5219, 1
      %v5235 = vsel %vm439, %v5233, %v5234
      %v5236 = vrot.slane %v5220, 1
      %v5237 = vsel %vm439, %v5234, %v5236
      %v5238 = vrot.slane %v5221, 1
      %v5239 = vsel %vm439, %v5236, %v5238
      %v5240 = vrot.slane %v5222, 1
      %v5241 = vsel %vm439, %v5238, %v5240
      %v5242 = vrot.slane %v5223, 1
      %v5243 = vsel %vm439, %v5240, %v5242
      %v5244 = vrot.slane %v5224, 1
      %v5245 = vsel %vm439, %v5242, %v5244
      %5246 = vrot.lane.b32.xlu0 %v5235, 64
      %v5247 = vpop.permute.xlu0 %5246
      %5248 = vrot.lane.b32.xlu0 %v5237, 64
      %v5249 = vpop.permute.xlu0 %5248
      %5250 = vrot.lane.b32.xlu0 %v5239, 64
      %v5251 = vpop.permute.xlu0 %5250
      %5252 = vrot.lane.b32.xlu0 %v5241, 64
      %v5253 = vpop.permute.xlu0 %5252
      %5254 = vrot.lane.b32.xlu0 %v5243, 64
      %v5255 = vpop.permute.xlu0 %5254
      %5256 = vrot.lane.b32.xlu0 %v5245, 64
      %v5257 = vpop.permute.xlu0 %5256
      %5258 = vrot.lane.b32.xlu0 %v5244, 64
      %v5259 = vpop.permute.xlu0 %5258
      %v5267 = vrot.slane %v5218, 2
      %v5268 = vrot.slane %v5219, 2
      %v5269 = vsel %vm491, %v5267, %v5268
      %v5270 = vrot.slane %v5220, 2
      %v5271 = vsel %vm491, %v5268, %v5270
      %v5272 = vrot.slane %v5221, 2
      %v5273 = vsel %vm491, %v5270, %v5272
      %v5274 = vrot.slane %v5222, 2
      %v5275 = vsel %vm491, %v5272, %v5274
      %v5276 = vrot.slane %v5223, 2
      %v5277 = vsel %vm491, %v5274, %v5276
      %v5278 = vrot.slane %v5224, 2
      %v5279 = vsel %vm491, %v5276, %v5278
      %v5287 = vrot.slane %v5218, 3
      %v5288 = vrot.slane %v5219, 3
      %v5289 = vsel %vm543, %v5287, %v5288
      %v5290 = vrot.slane %v5220, 3
      %v5291 = vsel %vm543, %v5288, %v5290
      %v5292 = vrot.slane %v5221, 3
      %v5293 = vsel %vm543, %v5290, %v5292
      %v5294 = vrot.slane %v5222, 3
      %v5295 = vsel %vm543, %v5292, %v5294
      %v5296 = vrot.slane %v5223, 3
      %v5297 = vsel %vm543, %v5294, %v5296
      %v5298 = vrot.slane %v5224, 3
      %v5299 = vsel %vm543, %v5296, %v5298
      %5300 = vrot.lane.b32.xlu0 %v5289, 64
      %v5301 = vpop.permute.xlu0 %5300
      %5302 = vrot.lane.b32.xlu0 %v5291, 64
      %v5303 = vpop.permute.xlu0 %5302
      %5304 = vrot.lane.b32.xlu0 %v5293, 64
      %v5305 = vpop.permute.xlu0 %5304
      %5306 = vrot.lane.b32.xlu0 %v5295, 64
      %v5307 = vpop.permute.xlu0 %5306
      %5308 = vrot.lane.b32.xlu0 %v5297, 64
      %v5309 = vpop.permute.xlu0 %5308
      %5310 = vrot.lane.b32.xlu0 %v5299, 64
      %v5311 = vpop.permute.xlu0 %5310
      %5312 = vrot.lane.b32.xlu0 %v5298, 64
      %v5313 = vpop.permute.xlu0 %5312
      %v5321 = vrot.slane %v5218, 4
      %v5322 = vrot.slane %v5219, 4
      %v5323 = vsel %vm595, %v5321, %v5322
      %v5324 = vrot.slane %v5220, 4
      %v5325 = vsel %vm595, %v5322, %v5324
      %v5326 = vrot.slane %v5221, 4
      %v5327 = vsel %vm595, %v5324, %v5326
      %v5328 = vrot.slane %v5222, 4
      %v5329 = vsel %vm595, %v5326, %v5328
      %v5330 = vrot.slane %v5223, 4
      %v5331 = vsel %vm595, %v5328, %v5330
      %v5332 = vrot.slane %v5224, 4
      %v5333 = vsel %vm595, %v5330, %v5332
      %v5342 = vrot.slane %v5218, 5
      %v5343 = vrot.slane %v5219, 5
      %v5344 = vsel %vm647, %v5342, %v5343
      %v5345 = vrot.slane %v5220, 5
      %v5346 = vsel %vm647, %v5343, %v5345
      %v5347 = vrot.slane %v5221, 5
      %v5348 = vsel %vm647, %v5345, %v5347
      %v5349 = vrot.slane %v5222, 5
      %v5350 = vsel %vm647, %v5347, %v5349
      %v5351 = vrot.slane %v5223, 5
      %v5352 = vsel %vm647, %v5349, %v5351
      %v5353 = vrot.slane %v5224, 5
      %v5354 = vsel %vm647, %v5351, %v5353
      %v5355 = vrot.slane %v5225, 5
      %v5356 = vsel %vm647, %v5353, %v5355
      %5357 = vrot.lane.b32.xlu0 %v5344, 64
      %v5358 = vpop.permute.xlu0 %5357
      %5359 = vrot.lane.b32.xlu0 %v5346, 64
      %v5360 = vpop.permute.xlu0 %5359
      %5361 = vrot.lane.b32.xlu0 %v5348, 64
      %v5362 = vpop.permute.xlu0 %5361
      %5363 = vrot.lane.b32.xlu0 %v5350, 64
      %v5364 = vpop.permute.xlu0 %5363
      %5365 = vrot.lane.b32.xlu0 %v5352, 64
      %v5366 = vpop.permute.xlu0 %5365
      %5367 = vrot.lane.b32.xlu0 %v5354, 64
      %v5368 = vpop.permute.xlu0 %5367
      %5369 = vrot.lane.b32.xlu0 %v5356, 64
      %v5370 = vpop.permute.xlu0 %5369
      %v5378 = vrot.slane %v5218, 6
      %v5379 = vrot.slane %v5219, 6
      %v5380 = vsel %vm699, %v5378, %v5379
      %v5381 = vrot.slane %v5220, 6
      %v5382 = vsel %vm699, %v5379, %v5381
      %v5383 = vrot.slane %v5221, 6
      %v5384 = vsel %vm699, %v5381, %v5383
      %v5385 = vrot.slane %v5222, 6
      %v5386 = vsel %vm699, %v5383, %v5385
      %v5387 = vrot.slane %v5223, 6
      %v5388 = vsel %vm699, %v5385, %v5387
      %v5389 = vrot.slane %v5224, 6
      %v5390 = vsel %vm699, %v5387, %v5389
      %v5391 = vrot.slane %v5225, 6
      %v5392 = vsel %vm699, %v5389, %v5391
      %v5400 = vsel %vm927, %v5218, %v5247
      %v5401 = vsel %vm927, %v5219, %v5249
      %v5402 = vsel %vm927, %v5220, %v5251
      %v5403 = vsel %vm927, %v5221, %v5253
      %v5404 = vsel %vm927, %v5222, %v5255
      %v5405 = vsel %vm927, %v5223, %v5257
      %v5406 = vsel %vm927, %v5224, %v5259
      %v5407 = vsel %vm927, %v5269, %v5301
      %v5408 = vsel %vm927, %v5271, %v5303
      %v5409 = vsel %vm927, %v5273, %v5305
      %v5410 = vsel %vm927, %v5275, %v5307
      %v5411 = vsel %vm927, %v5277, %v5309
      %v5412 = vsel %vm927, %v5279, %v5311
      %v5413 = vsel %vm927, %v5278, %v5313
      %v5414 = vsel %vm927, %v5323, %v5358
      %v5415 = vsel %vm927, %v5325, %v5360
      %v5416 = vsel %vm927, %v5327, %v5362
      %v5417 = vsel %vm927, %v5329, %v5364
      %v5418 = vsel %vm927, %v5331, %v5366
      %v5419 = vsel %vm927, %v5333, %v5368
      %v5420 = vsel %vm927, %v5332, %v5370
      %v5421 = vpack.c.bf16 %v5401, %v5400
      %v5422 = vpack.c.bf16 %v5408, %v5407
      %v5423 = vpack.c.bf16 %v5415, %v5414
      %v5424 = vpack.c.bf16 %v5382, %v5380
      %v5425 = vpack.c.bf16 %v5403, %v5402
      %v5426 = vpack.c.bf16 %v5410, %v5409
      %v5427 = vpack.c.bf16 %v5417, %v5416
      %v5428 = vpack.c.bf16 %v5386, %v5384
      %v5429 = vpack.c.bf16 %v5405, %v5404
      %v5430 = vpack.c.bf16 %v5412, %v5411
      %v5431 = vpack.c.bf16 %v5419, %v5418
      %v5432 = vpack.c.bf16 %v5390, %v5388
      %v5433 = vpack.c.bf16 %v5406, %v5406
      %v5434 = vpack.c.bf16 %v5413, %v5413
      %v5435 = vpack.c.bf16 %v5420, %v5420
      %v5436 = vpack.c.bf16 %v5392, %v5392
      %v5438 = vsel %vm927, %v5424, 0
      %v5441 = vsel %vm927, %v5428, 0
      %v5444 = vsel %vm927, %v5432, 0
      %v5447 = vsel %vm927, %v5436, 0
      %5449 = vmatprep.subr.bf16.mxu0 0
      %5450 = vmatpush1.bf16.msra.mxu0 %v1090
      %5451 = vmatprep.subr.bf16.mxu0 0
      %5452 = vmatpush1.bf16.msra.mxu0 %v1089
      %5453 = vmatprep.subr.bf16.mxu0 0
      %5454 = vmatpush1.bf16.msra.mxu0 %v1088
      %5455 = vmatprep.subr.bf16.mxu0 0
      %5456 = vmatpush1.bf16.msra.mxu0 %v1087
      %5457 = vmatprep.subr.bf16.mxu0 0
      %5458 = vmatpush1.bf16.msra.mxu0 %v1086
      %5459 = vmatprep.subr.bf16.mxu0 0
      %5460 = vmatpush1.bf16.msra.mxu0 %v1085
      %5461 = vmatprep.subr.bf16.mxu0 0
      %5462 = vmatpush1.bf16.msra.mxu0 %v1084
      %5463 = vmatprep.subr.bf16.mxu0 0
      %5464 = vmatpush1.bf16.msra.mxu0 %v1083
      %5465 = vmatprep.subr.bf16.mxu0 0
      %5466 = vmatpush2.bf16.msra.mxu0 %v1098
      %5467 = vmatprep.subr.bf16.mxu0 0
      %5468 = vmatpush2.bf16.msra.mxu0 %v1097
      %5469 = vmatprep.subr.bf16.mxu0 0
      %5470 = vmatpush2.bf16.msra.mxu0 %v1096
      %5471 = vmatprep.subr.bf16.mxu0 0
      %5472 = vmatpush2.bf16.msra.mxu0 %v1095
      %5473 = vmatprep.subr.bf16.mxu0 0
      %5474 = vmatpush2.bf16.msra.mxu0 %v1094
      %5475 = vmatprep.subr.bf16.mxu0 0
      %5476 = vmatpush2.bf16.msra.mxu0 %v1093
      %5477 = vmatprep.subr.bf16.mxu0 0
      %5478 = vmatpush2.bf16.msra.mxu0 %v1092
      %5479 = vmatprep.subr.bf16.mxu0 0
      %5480 = vmatpush2.bf16.msra.mxu0 %v1091
      %5481 = vmatprep.mubr.bf16.mxu0 %v5422
      %5482 = vmatmul.mubr.bf16.gmra.mxu0 %v5421
      %v5483 = vpop.f32.mrf.mxu0
      %v5484 = vadd.f32 %v969, %v5483
      %v5485 = vpop.f32.mrf.mxu0
      %v5486 = vpop.f32.mrf.mxu0
      %v5487 = vadd.f32 %v969, %v5486
      %v5488 = vpop.f32.mrf.mxu0
      %5489 = vmatprep.mubr.bf16.mxu0 %v5426
      %5490 = vmatmul.mubr.bf16.gmra.mxu0 %v5425
      %v5491 = vpop.f32.mrf.mxu0
      %v5492 = vadd.f32 %v969, %v5491
      %v5493 = vpop.f32.mrf.mxu0
      %v5494 = vpop.f32.mrf.mxu0
      %v5495 = vadd.f32 %v969, %v5494
      %v5496 = vpop.f32.mrf.mxu0
      %5497 = vmatprep.mubr.bf16.mxu0 %v5430
      %5498 = vmatmul.mubr.bf16.gmra.mxu0 %v5429
      %v5499 = vpop.f32.mrf.mxu0
      %v5500 = vadd.f32 %v969, %v5499
      %v5501 = vpop.f32.mrf.mxu0
      %v5502 = vpop.f32.mrf.mxu0
      %v5503 = vadd.f32 %v969, %v5502
      %v5504 = vpop.f32.mrf.mxu0
      %5505 = vmatprep.mubr.bf16.mxu0 %v5434
      %5506 = vmatmul.mubr.bf16.gmra.mxu0 %v5433
      %v5507 = vpop.f32.mrf.mxu0
      %v5508 = vadd.f32 %v969, %v5507
      %v5509 = vpop.f32.mrf.mxu0
      %v5510 = vpop.f32.mrf.mxu0
      %v5511 = vpop.f32.mrf.mxu0
      %5512 = vdwg.mxu0
      %5513 = vmatprep.subr.bf16.mxu0 0
      %5514 = vmatpush1.bf16.msra.mxu0 %v1106
      %5515 = vmatprep.subr.bf16.mxu0 0
      %5516 = vmatpush1.bf16.msra.mxu0 %v1105
      %5517 = vmatprep.subr.bf16.mxu0 0
      %5518 = vmatpush1.bf16.msra.mxu0 %v1104
      %5519 = vmatprep.subr.bf16.mxu0 0
      %5520 = vmatpush1.bf16.msra.mxu0 %v1103
      %5521 = vmatprep.subr.bf16.mxu0 0
      %5522 = vmatpush1.bf16.msra.mxu0 %v1102
      %5523 = vmatprep.subr.bf16.mxu0 0
      %5524 = vmatpush1.bf16.msra.mxu0 %v1101
      %5525 = vmatprep.subr.bf16.mxu0 0
      %5526 = vmatpush1.bf16.msra.mxu0 %v1100
      %5527 = vmatprep.subr.bf16.mxu0 0
      %5528 = vmatpush1.bf16.msra.mxu0 %v1099
      %5529 = vmatprep.subr.bf16.mxu0 0
      %5530 = vmatpush2.bf16.msra.mxu0 0
      %5531 = vmatprep.subr.bf16.mxu0 0
      %5532 = vmatpush2.bf16.msra.mxu0 0
      %5533 = vmatprep.subr.bf16.mxu0 0
      %5534 = vmatpush2.bf16.msra.mxu0 0
      %5535 = vmatprep.subr.bf16.mxu0 0
      %5536 = vmatpush2.bf16.msra.mxu0 0
      %5537 = vmatprep.subr.bf16.mxu0 0
      %5538 = vmatpush2.bf16.msra.mxu0 %v1110
      %5539 = vmatprep.subr.bf16.mxu0 0
      %5540 = vmatpush2.bf16.msra.mxu0 %v1109
      %5541 = vmatprep.subr.bf16.mxu0 0
      %5542 = vmatpush2.bf16.msra.mxu0 %v1108
      %5543 = vmatprep.subr.bf16.mxu0 0
      %5544 = vmatpush2.bf16.msra.mxu0 %v1107
      %5545 = vmatprep.mubr.bf16.mxu0 %v5438
      %5546 = vmatmul.mubr.bf16.gmra.mxu0 %v5423
      %v5547 = vpop.f32.mrf.mxu0
      %v5548 = vadd.f32 %v5484, %v5547
      %v5549 = vpop.f32.mrf.mxu0
      %v5550 = vpop.f32.mrf.mxu0
      %v5551 = vadd.f32 %v5487, %v5550
      %v5552 = vpop.f32.mrf.mxu0
      %5553 = vmatprep.mubr.bf16.mxu0 %v5441
      %5554 = vmatmul.mubr.bf16.gmra.mxu0 %v5427
      %v5555 = vpop.f32.mrf.mxu0
      %v5556 = vadd.f32 %v5492, %v5555
      %v5557 = vpop.f32.mrf.mxu0
      %v5558 = vpop.f32.mrf.mxu0
      %v5559 = vadd.f32 %v5495, %v5558
      %v5560 = vpop.f32.mrf.mxu0
      %5561 = vmatprep.mubr.bf16.mxu0 %v5444
      %5562 = vmatmul.mubr.bf16.gmra.mxu0 %v5431
      %v5563 = vpop.f32.mrf.mxu0
      %v5564 = vadd.f32 %v5500, %v5563
      %v5565 = vpop.f32.mrf.mxu0
      %v5566 = vpop.f32.mrf.mxu0
      %v5567 = vadd.f32 %v5503, %v5566
      %v5568 = vpop.f32.mrf.mxu0
      %5569 = vmatprep.mubr.bf16.mxu0 %v5447
      %5570 = vmatmul.mubr.bf16.gmra.mxu0 %v5435
      %v5571 = vpop.f32.mrf.mxu0
      %v5572 = vadd.f32 %v5508, %v5571
      %v5573 = vpop.f32.mrf.mxu0
      %v5574 = vpop.f32.mrf.mxu0
      %v5575 = vpop.f32.mrf.mxu0
      %5576 = vdwg.mxu0
      %v5577 = vmax.f32 %v5548, 0.0
      %v5578 = vmax.f32 %v5551, 0.0
      %v5579 = vmax.f32 %v5556, 0.0
      %v5580 = vmax.f32 %v5559, 0.0
      %v5581 = vmax.f32 %v5564, 0.0
      %v5582 = vmax.f32 %v5567, 0.0
      %v5583 = vmax.f32 %v5572, 0.0
      %v5584 = vsel %vm927, %v5577, 0.0
      %v5585 = vsel %vm927, %v5578, 0.0
      %v5586 = vadd.f32 %v5584, %v5585
      %v5587 = vsel %vm927, %v5579, 0.0
      %v5588 = vadd.f32 %v5586, %v5587
      %v5589 = vsel %vm927, %v5580, 0.0
      %v5590 = vadd.f32 %v5588, %v5589
      %v5591 = vsel %vm927, %v5581, 0.0
      %v5592 = vadd.f32 %v5590, %v5591
      %v5593 = vsel %vm927, %v5582, 0.0
      %v5594 = vadd.f32 %v5592, %v5593
      %v5595 = vsel %vm1297, %v5583, 0.0
      %v5596 = vadd.f32 %v5594, %v5595
      %v5597 = vrot.slane %v5596, 4
      %v5598 = vadd.f32 %v5596, %v5597
      %v5599 = vrot.slane %v5598, 2
      %v5600 = vadd.f32 %v5598, %v5599
      %v5601 = vrot.slane %v5600, 1
      %v5602 = vadd.f32 %v5600, %v5601
      %v5603 = vmul.f32 %v5602, %v1306
      %5604 = vset.pattern.permute.xlu0 7
      %5605 = vperm.xlu0 %5604, %v292
      %v5606 = vpop.permute.xlu0 %5605
      %5608 = vset.pattern.permute.xlu0 7
      %5609 = vperm.xlu0 %5608, %v293
      %v5610 = vpop.permute.xlu0 %5609
      %5612 = vset.pattern.permute.xlu0 7
      %5613 = vperm.xlu0 %5612, %v294
      %v5614 = vpop.permute.xlu0 %5613
      %5616 = vset.pattern.permute.xlu0 7
      %5617 = vperm.xlu0 %5616, %v295
      %v5618 = vpop.permute.xlu0 %5617
      %5620 = vset.pattern.permute.xlu0 7
      %5621 = vperm.xlu0 %5620, %v296
      %v5622 = vpop.permute.xlu0 %5621
      %5624 = vset.pattern.permute.xlu0 7
      %5625 = vperm.xlu0 %5624, %v297
      %v5626 = vpop.permute.xlu0 %5625
      %5628 = vset.pattern.permute.xlu0 7
      %5629 = vperm.xlu0 %5628, %v298
      %v5630 = vpop.permute.xlu0 %5629
      %5632 = vset.pattern.permute.xlu0 7
      %5633 = vperm.xlu0 %5632, %v299
      %v5634 = vpop.permute.xlu0 %5633
      %v5636 = vmul.f32 %v5606, %v410
      %v5637 = vmul.f32 %v5610, %v410
      %v5638 = vmul.f32 %v5614, %v410
      %v5639 = vmul.f32 %v5618, %v410
      %v5640 = vmul.f32 %v5622, %v410
      %v5641 = vmul.f32 %v5626, %v410
      %v5642 = vmul.f32 %v5630, %v410
      %v5643 = vmul.f32 %v5634, %v410
      %v5644 = vmul.f32 %v5606, %v422
      %v5645 = vmul.f32 %v5610, %v422
      %v5646 = vmul.f32 %v5614, %v422
      %v5647 = vmul.f32 %v5618, %v422
      %v5648 = vmul.f32 %v5622, %v422
      %v5649 = vmul.f32 %v5626, %v422
      %v5650 = vmul.f32 %v5630, %v422
      %v5651 = vmul.f32 %v5634, %v422
      %v5660 = vrot.slane %v5644, 1
      %v5661 = vrot.slane %v5645, 1
      %v5662 = vsel %vm439, %v5660, %v5661
      %v5663 = vrot.slane %v5646, 1
      %v5664 = vsel %vm439, %v5661, %v5663
      %v5665 = vrot.slane %v5647, 1
      %v5666 = vsel %vm439, %v5663, %v5665
      %v5667 = vrot.slane %v5648, 1
      %v5668 = vsel %vm439, %v5665, %v5667
      %v5669 = vrot.slane %v5649, 1
      %v5670 = vsel %vm439, %v5667, %v5669
      %v5671 = vrot.slane %v5650, 1
      %v5672 = vsel %vm439, %v5669, %v5671
      %v5673 = vrot.slane %v5651, 1
      %v5674 = vsel %vm439, %v5671, %v5673
      %v5683 = vadd.f32 %v5636, %v5662
      %v5684 = vadd.f32 %v5637, %v5664
      %v5685 = vadd.f32 %v5638, %v5666
      %v5686 = vadd.f32 %v5639, %v5668
      %v5687 = vadd.f32 %v5640, %v5670
      %v5688 = vadd.f32 %v5641, %v5672
      %v5689 = vadd.f32 %v5642, %v5674
      %v5690 = vadd.f32 %v5643, %v5673
      %v5691 = vmul.f32 %v5606, %v474
      %v5692 = vmul.f32 %v5610, %v474
      %v5693 = vmul.f32 %v5614, %v474
      %v5694 = vmul.f32 %v5618, %v474
      %v5695 = vmul.f32 %v5622, %v474
      %v5696 = vmul.f32 %v5626, %v474
      %v5697 = vmul.f32 %v5630, %v474
      %v5698 = vmul.f32 %v5634, %v474
      %v5707 = vrot.slane %v5691, 2
      %v5708 = vrot.slane %v5692, 2
      %v5709 = vsel %vm491, %v5707, %v5708
      %v5710 = vrot.slane %v5693, 2
      %v5711 = vsel %vm491, %v5708, %v5710
      %v5712 = vrot.slane %v5694, 2
      %v5713 = vsel %vm491, %v5710, %v5712
      %v5714 = vrot.slane %v5695, 2
      %v5715 = vsel %vm491, %v5712, %v5714
      %v5716 = vrot.slane %v5696, 2
      %v5717 = vsel %vm491, %v5714, %v5716
      %v5718 = vrot.slane %v5697, 2
      %v5719 = vsel %vm491, %v5716, %v5718
      %v5720 = vrot.slane %v5698, 2
      %v5721 = vsel %vm491, %v5718, %v5720
      %v5730 = vadd.f32 %v5683, %v5709
      %v5731 = vadd.f32 %v5684, %v5711
      %v5732 = vadd.f32 %v5685, %v5713
      %v5733 = vadd.f32 %v5686, %v5715
      %v5734 = vadd.f32 %v5687, %v5717
      %v5735 = vadd.f32 %v5688, %v5719
      %v5736 = vadd.f32 %v5689, %v5721
      %v5737 = vadd.f32 %v5690, %v5720
      %v5738 = vmul.f32 %v5606, %v526
      %v5739 = vmul.f32 %v5610, %v526
      %v5740 = vmul.f32 %v5614, %v526
      %v5741 = vmul.f32 %v5618, %v526
      %v5742 = vmul.f32 %v5622, %v526
      %v5743 = vmul.f32 %v5626, %v526
      %v5744 = vmul.f32 %v5630, %v526
      %v5745 = vmul.f32 %v5634, %v526
      %v5754 = vrot.slane %v5738, 3
      %v5755 = vrot.slane %v5739, 3
      %v5756 = vsel %vm543, %v5754, %v5755
      %v5757 = vrot.slane %v5740, 3
      %v5758 = vsel %vm543, %v5755, %v5757
      %v5759 = vrot.slane %v5741, 3
      %v5760 = vsel %vm543, %v5757, %v5759
      %v5761 = vrot.slane %v5742, 3
      %v5762 = vsel %vm543, %v5759, %v5761
      %v5763 = vrot.slane %v5743, 3
      %v5764 = vsel %vm543, %v5761, %v5763
      %v5765 = vrot.slane %v5744, 3
      %v5766 = vsel %vm543, %v5763, %v5765
      %v5767 = vrot.slane %v5745, 3
      %v5768 = vsel %vm543, %v5765, %v5767
      %v5777 = vadd.f32 %v5730, %v5756
      %v5778 = vadd.f32 %v5731, %v5758
      %v5779 = vadd.f32 %v5732, %v5760
      %v5780 = vadd.f32 %v5733, %v5762
      %v5781 = vadd.f32 %v5734, %v5764
      %v5782 = vadd.f32 %v5735, %v5766
      %v5783 = vadd.f32 %v5736, %v5768
      %v5784 = vadd.f32 %v5737, %v5767
      %v5785 = vmul.f32 %v5606, %v578
      %v5786 = vmul.f32 %v5610, %v578
      %v5787 = vmul.f32 %v5614, %v578
      %v5788 = vmul.f32 %v5618, %v578
      %v5789 = vmul.f32 %v5622, %v578
      %v5790 = vmul.f32 %v5626, %v578
      %v5791 = vmul.f32 %v5630, %v578
      %v5792 = vmul.f32 %v5634, %v578
      %v5801 = vrot.slane %v5785, 4
      %v5802 = vrot.slane %v5786, 4
      %v5803 = vsel %vm595, %v5801, %v5802
      %v5804 = vrot.slane %v5787, 4
      %v5805 = vsel %vm595, %v5802, %v5804
      %v5806 = vrot.slane %v5788, 4
      %v5807 = vsel %vm595, %v5804, %v5806
      %v5808 = vrot.slane %v5789, 4
      %v5809 = vsel %vm595, %v5806, %v5808
      %v5810 = vrot.slane %v5790, 4
      %v5811 = vsel %vm595, %v5808, %v5810
      %v5812 = vrot.slane %v5791, 4
      %v5813 = vsel %vm595, %v5810, %v5812
      %v5814 = vrot.slane %v5792, 4
      %v5815 = vsel %vm595, %v5812, %v5814
      %v5824 = vadd.f32 %v5777, %v5803
      %v5825 = vadd.f32 %v5778, %v5805
      %v5826 = vadd.f32 %v5779, %v5807
      %v5827 = vadd.f32 %v5780, %v5809
      %v5828 = vadd.f32 %v5781, %v5811
      %v5829 = vadd.f32 %v5782, %v5813
      %v5830 = vadd.f32 %v5783, %v5815
      %v5831 = vadd.f32 %v5784, %v5814
      %v5832 = vmul.f32 %v5606, %v630
      %v5833 = vmul.f32 %v5610, %v630
      %v5834 = vmul.f32 %v5614, %v630
      %v5835 = vmul.f32 %v5618, %v630
      %v5836 = vmul.f32 %v5622, %v630
      %v5837 = vmul.f32 %v5626, %v630
      %v5838 = vmul.f32 %v5630, %v630
      %v5839 = vmul.f32 %v5634, %v630
      %v5848 = vrot.slane %v5832, 5
      %v5849 = vrot.slane %v5833, 5
      %v5850 = vsel %vm647, %v5848, %v5849
      %v5851 = vrot.slane %v5834, 5
      %v5852 = vsel %vm647, %v5849, %v5851
      %v5853 = vrot.slane %v5835, 5
      %v5854 = vsel %vm647, %v5851, %v5853
      %v5855 = vrot.slane %v5836, 5
      %v5856 = vsel %vm647, %v5853, %v5855
      %v5857 = vrot.slane %v5837, 5
      %v5858 = vsel %vm647, %v5855, %v5857
      %v5859 = vrot.slane %v5838, 5
      %v5860 = vsel %vm647, %v5857, %v5859
      %v5861 = vrot.slane %v5839, 5
      %v5862 = vsel %vm647, %v5859, %v5861
      %v5871 = vadd.f32 %v5824, %v5850
      %v5872 = vadd.f32 %v5825, %v5852
      %v5873 = vadd.f32 %v5826, %v5854
      %v5874 = vadd.f32 %v5827, %v5856
      %v5875 = vadd.f32 %v5828, %v5858
      %v5876 = vadd.f32 %v5829, %v5860
      %v5877 = vadd.f32 %v5830, %v5862
      %v5878 = vadd.f32 %v5831, %v5861
      %v5879 = vmul.f32 %v5606, %v682
      %v5880 = vmul.f32 %v5610, %v682
      %v5881 = vmul.f32 %v5614, %v682
      %v5882 = vmul.f32 %v5618, %v682
      %v5883 = vmul.f32 %v5622, %v682
      %v5884 = vmul.f32 %v5626, %v682
      %v5885 = vmul.f32 %v5630, %v682
      %v5886 = vmul.f32 %v5634, %v682
      %v5895 = vrot.slane %v5879, 6
      %v5896 = vrot.slane %v5880, 6
      %v5897 = vsel %vm699, %v5895, %v5896
      %v5898 = vrot.slane %v5881, 6
      %v5899 = vsel %vm699, %v5896, %v5898
      %v5900 = vrot.slane %v5882, 6
      %v5901 = vsel %vm699, %v5898, %v5900
      %v5902 = vrot.slane %v5883, 6
      %v5903 = vsel %vm699, %v5900, %v5902
      %v5904 = vrot.slane %v5884, 6
      %v5905 = vsel %vm699, %v5902, %v5904
      %v5906 = vrot.slane %v5885, 6
      %v5907 = vsel %vm699, %v5904, %v5906
      %v5908 = vrot.slane %v5886, 6
      %v5909 = vsel %vm699, %v5906, %v5908
      %v5918 = vadd.f32 %v5871, %v5897
      %v5919 = vadd.f32 %v5872, %v5899
      %v5920 = vadd.f32 %v5873, %v5901
      %v5921 = vadd.f32 %v5874, %v5903
      %v5922 = vadd.f32 %v5875, %v5905
      %v5923 = vadd.f32 %v5876, %v5907
      %v5924 = vadd.f32 %v5877, %v5909
      %v5925 = vadd.f32 %v5878, %v5908
      %v5926 = vadd.f32 %v5918, %v735
      %v5927 = vadd.f32 %v5919, %v735
      %v5928 = vadd.f32 %v5920, %v735
      %v5929 = vadd.f32 %v5921, %v735
      %v5930 = vadd.f32 %v5922, %v735
      %v5931 = vadd.f32 %v5923, %v735
      %v5932 = vadd.f32 %v5924, %v735
      %v5933 = vadd.f32 %v5925, %v735
      %v5934 = vmax.f32 %v5926, 0.0
      %v5935 = vmax.f32 %v5927, 0.0
      %v5936 = vmax.f32 %v5928, 0.0
      %v5937 = vmax.f32 %v5929, 0.0
      %v5938 = vmax.f32 %v5930, 0.0
      %v5939 = vmax.f32 %v5931, 0.0
      %v5940 = vmax.f32 %v5932, 0.0
      %v5941 = vmax.f32 %v5933, 0.0
      %v5949 = vrot.slane %v5934, 1
      %v5950 = vrot.slane %v5935, 1
      %v5951 = vsel %vm439, %v5949, %v5950
      %v5952 = vrot.slane %v5936, 1
      %v5953 = vsel %vm439, %v5950, %v5952
      %v5954 = vrot.slane %v5937, 1
      %v5955 = vsel %vm439, %v5952, %v5954
      %v5956 = vrot.slane %v5938, 1
      %v5957 = vsel %vm439, %v5954, %v5956
      %v5958 = vrot.slane %v5939, 1
      %v5959 = vsel %vm439, %v5956, %v5958
      %v5960 = vrot.slane %v5940, 1
      %v5961 = vsel %vm439, %v5958, %v5960
      %5962 = vrot.lane.b32.xlu0 %v5951, 64
      %v5963 = vpop.permute.xlu0 %5962
      %5964 = vrot.lane.b32.xlu0 %v5953, 64
      %v5965 = vpop.permute.xlu0 %5964
      %5966 = vrot.lane.b32.xlu0 %v5955, 64
      %v5967 = vpop.permute.xlu0 %5966
      %5968 = vrot.lane.b32.xlu0 %v5957, 64
      %v5969 = vpop.permute.xlu0 %5968
      %5970 = vrot.lane.b32.xlu0 %v5959, 64
      %v5971 = vpop.permute.xlu0 %5970
      %5972 = vrot.lane.b32.xlu0 %v5961, 64
      %v5973 = vpop.permute.xlu0 %5972
      %5974 = vrot.lane.b32.xlu0 %v5960, 64
      %v5975 = vpop.permute.xlu0 %5974
      %v5983 = vrot.slane %v5934, 2
      %v5984 = vrot.slane %v5935, 2
      %v5985 = vsel %vm491, %v5983, %v5984
      %v5986 = vrot.slane %v5936, 2
      %v5987 = vsel %vm491, %v5984, %v5986
      %v5988 = vrot.slane %v5937, 2
      %v5989 = vsel %vm491, %v5986, %v5988
      %v5990 = vrot.slane %v5938, 2
      %v5991 = vsel %vm491, %v5988, %v5990
      %v5992 = vrot.slane %v5939, 2
      %v5993 = vsel %vm491, %v5990, %v5992
      %v5994 = vrot.slane %v5940, 2
      %v5995 = vsel %vm491, %v5992, %v5994
      %v6003 = vrot.slane %v5934, 3
      %v6004 = vrot.slane %v5935, 3
      %v6005 = vsel %vm543, %v6003, %v6004
      %v6006 = vrot.slane %v5936, 3
      %v6007 = vsel %vm543, %v6004, %v6006
      %v6008 = vrot.slane %v5937, 3
      %v6009 = vsel %vm543, %v6006, %v6008
      %v6010 = vrot.slane %v5938, 3
      %v6011 = vsel %vm543, %v6008, %v6010
      %v6012 = vrot.slane %v5939, 3
      %v6013 = vsel %vm543, %v6010, %v6012
      %v6014 = vrot.slane %v5940, 3
      %v6015 = vsel %vm543, %v6012, %v6014
      %6016 = vrot.lane.b32.xlu0 %v6005, 64
      %v6017 = vpop.permute.xlu0 %6016
      %6018 = vrot.lane.b32.xlu0 %v6007, 64
      %v6019 = vpop.permute.xlu0 %6018
      %6020 = vrot.lane.b32.xlu0 %v6009, 64
      %v6021 = vpop.permute.xlu0 %6020
      %6022 = vrot.lane.b32.xlu0 %v6011, 64
      %v6023 = vpop.permute.xlu0 %6022
      %6024 = vrot.lane.b32.xlu0 %v6013, 64
      %v6025 = vpop.permute.xlu0 %6024
      %6026 = vrot.lane.b32.xlu0 %v6015, 64
      %v6027 = vpop.permute.xlu0 %6026
      %6028 = vrot.lane.b32.xlu0 %v6014, 64
      %v6029 = vpop.permute.xlu0 %6028
      %v6037 = vrot.slane %v5934, 4
      %v6038 = vrot.slane %v5935, 4
      %v6039 = vsel %vm595, %v6037, %v6038
      %v6040 = vrot.slane %v5936, 4
      %v6041 = vsel %vm595, %v6038, %v6040
      %v6042 = vrot.slane %v5937, 4
      %v6043 = vsel %vm595, %v6040, %v6042
      %v6044 = vrot.slane %v5938, 4
      %v6045 = vsel %vm595, %v6042, %v6044
      %v6046 = vrot.slane %v5939, 4
      %v6047 = vsel %vm595, %v6044, %v6046
      %v6048 = vrot.slane %v5940, 4
      %v6049 = vsel %vm595, %v6046, %v6048
      %v6058 = vrot.slane %v5934, 5
      %v6059 = vrot.slane %v5935, 5
      %v6060 = vsel %vm647, %v6058, %v6059
      %v6061 = vrot.slane %v5936, 5
      %v6062 = vsel %vm647, %v6059, %v6061
      %v6063 = vrot.slane %v5937, 5
      %v6064 = vsel %vm647, %v6061, %v6063
      %v6065 = vrot.slane %v5938, 5
      %v6066 = vsel %vm647, %v6063, %v6065
      %v6067 = vrot.slane %v5939, 5
      %v6068 = vsel %vm647, %v6065, %v6067
      %v6069 = vrot.slane %v5940, 5
      %v6070 = vsel %vm647, %v6067, %v6069
      %v6071 = vrot.slane %v5941, 5
      %v6072 = vsel %vm647, %v6069, %v6071
      %6073 = vrot.lane.b32.xlu0 %v6060, 64
      %v6074 = vpop.permute.xlu0 %6073
      %6075 = vrot.lane.b32.xlu0 %v6062, 64
      %v6076 = vpop.permute.xlu0 %6075
      %6077 = vrot.lane.b32.xlu0 %v6064, 64
      %v6078 = vpop.permute.xlu0 %6077
      %6079 = vrot.lane.b32.xlu0 %v6066, 64
      %v6080 = vpop.permute.xlu0 %6079
      %6081 = vrot.lane.b32.xlu0 %v6068, 64
      %v6082 = vpop.permute.xlu0 %6081
      %6083 = vrot.lane.b32.xlu0 %v6070, 64
      %v6084 = vpop.permute.xlu0 %6083
      %6085 = vrot.lane.b32.xlu0 %v6072, 64
      %v6086 = vpop.permute.xlu0 %6085
      %v6094 = vrot.slane %v5934, 6
      %v6095 = vrot.slane %v5935, 6
      %v6096 = vsel %vm699, %v6094, %v6095
      %v6097 = vrot.slane %v5936, 6
      %v6098 = vsel %vm699, %v6095, %v6097
      %v6099 = vrot.slane %v5937, 6
      %v6100 = vsel %vm699, %v6097, %v6099
      %v6101 = vrot.slane %v5938, 6
      %v6102 = vsel %vm699, %v6099, %v6101
      %v6103 = vrot.slane %v5939, 6
      %v6104 = vsel %vm699, %v6101, %v6103
      %v6105 = vrot.slane %v5940, 6
      %v6106 = vsel %vm699, %v6103, %v6105
      %v6107 = vrot.slane %v5941, 6
      %v6108 = vsel %vm699, %v6105, %v6107
      %v6116 = vsel %vm927, %v5934, %v5963
      %v6117 = vsel %vm927, %v5935, %v5965
      %v6118 = vsel %vm927, %v5936, %v5967
      %v6119 = vsel %vm927, %v5937, %v5969
      %v6120 = vsel %vm927, %v5938, %v5971
      %v6121 = vsel %vm927, %v5939, %v5973
      %v6122 = vsel %vm927, %v5940, %v5975
      %v6123 = vsel %vm927, %v5985, %v6017
      %v6124 = vsel %vm927, %v5987, %v6019
      %v6125 = vsel %vm927, %v5989, %v6021
      %v6126 = vsel %vm927, %v5991, %v6023
      %v6127 = vsel %vm927, %v5993, %v6025
      %v6128 = vsel %vm927, %v5995, %v6027
      %v6129 = vsel %vm927, %v5994, %v6029
      %v6130 = vsel %vm927, %v6039, %v6074
      %v6131 = vsel %vm927, %v6041, %v6076
      %v6132 = vsel %vm927, %v6043, %v6078
      %v6133 = vsel %vm927, %v6045, %v6080
      %v6134 = vsel %vm927, %v6047, %v6082
      %v6135 = vsel %vm927, %v6049, %v6084
      %v6136 = vsel %vm927, %v6048, %v6086
      %v6137 = vpack.c.bf16 %v6117, %v6116
      %v6138 = vpack.c.bf16 %v6124, %v6123
      %v6139 = vpack.c.bf16 %v6131, %v6130
      %v6140 = vpack.c.bf16 %v6098, %v6096
      %v6141 = vpack.c.bf16 %v6119, %v6118
      %v6142 = vpack.c.bf16 %v6126, %v6125
      %v6143 = vpack.c.bf16 %v6133, %v6132
      %v6144 = vpack.c.bf16 %v6102, %v6100
      %v6145 = vpack.c.bf16 %v6121, %v6120
      %v6146 = vpack.c.bf16 %v6128, %v6127
      %v6147 = vpack.c.bf16 %v6135, %v6134
      %v6148 = vpack.c.bf16 %v6106, %v6104
      %v6149 = vpack.c.bf16 %v6122, %v6122
      %v6150 = vpack.c.bf16 %v6129, %v6129
      %v6151 = vpack.c.bf16 %v6136, %v6136
      %v6152 = vpack.c.bf16 %v6108, %v6108
      %v6154 = vsel %vm927, %v6140, 0
      %v6157 = vsel %vm927, %v6144, 0
      %v6160 = vsel %vm927, %v6148, 0
      %v6163 = vsel %vm927, %v6152, 0
      %6165 = vmatprep.subr.bf16.mxu0 0
      %6166 = vmatpush1.bf16.msra.mxu0 %v1090
      %6167 = vmatprep.subr.bf16.mxu0 0
      %6168 = vmatpush1.bf16.msra.mxu0 %v1089
      %6169 = vmatprep.subr.bf16.mxu0 0
      %6170 = vmatpush1.bf16.msra.mxu0 %v1088
      %6171 = vmatprep.subr.bf16.mxu0 0
      %6172 = vmatpush1.bf16.msra.mxu0 %v1087
      %6173 = vmatprep.subr.bf16.mxu0 0
      %6174 = vmatpush1.bf16.msra.mxu0 %v1086
      %6175 = vmatprep.subr.bf16.mxu0 0
      %6176 = vmatpush1.bf16.msra.mxu0 %v1085
      %6177 = vmatprep.subr.bf16.mxu0 0
      %6178 = vmatpush1.bf16.msra.mxu0 %v1084
      %6179 = vmatprep.subr.bf16.mxu0 0
      %6180 = vmatpush1.bf16.msra.mxu0 %v1083
      %6181 = vmatprep.subr.bf16.mxu0 0
      %6182 = vmatpush2.bf16.msra.mxu0 %v1098
      %6183 = vmatprep.subr.bf16.mxu0 0
      %6184 = vmatpush2.bf16.msra.mxu0 %v1097
      %6185 = vmatprep.subr.bf16.mxu0 0
      %6186 = vmatpush2.bf16.msra.mxu0 %v1096
      %6187 = vmatprep.subr.bf16.mxu0 0
      %6188 = vmatpush2.bf16.msra.mxu0 %v1095
      %6189 = vmatprep.subr.bf16.mxu0 0
      %6190 = vmatpush2.bf16.msra.mxu0 %v1094
      %6191 = vmatprep.subr.bf16.mxu0 0
      %6192 = vmatpush2.bf16.msra.mxu0 %v1093
      %6193 = vmatprep.subr.bf16.mxu0 0
      %6194 = vmatpush2.bf16.msra.mxu0 %v1092
      %6195 = vmatprep.subr.bf16.mxu0 0
      %6196 = vmatpush2.bf16.msra.mxu0 %v1091
      %6197 = vmatprep.mubr.bf16.mxu0 %v6138
      %6198 = vmatmul.mubr.bf16.gmra.mxu0 %v6137
      %v6199 = vpop.f32.mrf.mxu0
      %v6200 = vadd.f32 %v969, %v6199
      %v6201 = vpop.f32.mrf.mxu0
      %v6202 = vpop.f32.mrf.mxu0
      %v6203 = vadd.f32 %v969, %v6202
      %v6204 = vpop.f32.mrf.mxu0
      %6205 = vmatprep.mubr.bf16.mxu0 %v6142
      %6206 = vmatmul.mubr.bf16.gmra.mxu0 %v6141
      %v6207 = vpop.f32.mrf.mxu0
      %v6208 = vadd.f32 %v969, %v6207
      %v6209 = vpop.f32.mrf.mxu0
      %v6210 = vpop.f32.mrf.mxu0
      %v6211 = vadd.f32 %v969, %v6210
      %v6212 = vpop.f32.mrf.mxu0
      %6213 = vmatprep.mubr.bf16.mxu0 %v6146
      %6214 = vmatmul.mubr.bf16.gmra.mxu0 %v6145
      %v6215 = vpop.f32.mrf.mxu0
      %v6216 = vadd.f32 %v969, %v6215
      %v6217 = vpop.f32.mrf.mxu0
      %v6218 = vpop.f32.mrf.mxu0
      %v6219 = vadd.f32 %v969, %v6218
      %v6220 = vpop.f32.mrf.mxu0
      %6221 = vmatprep.mubr.bf16.mxu0 %v6150
      %6222 = vmatmul.mubr.bf16.gmra.mxu0 %v6149
      %v6223 = vpop.f32.mrf.mxu0
      %v6224 = vadd.f32 %v969, %v6223
      %v6225 = vpop.f32.mrf.mxu0
      %v6226 = vpop.f32.mrf.mxu0
      %v6227 = vpop.f32.mrf.mxu0
      %6228 = vdwg.mxu0
      %6229 = vmatprep.subr.bf16.mxu0 0
      %6230 = vmatpush1.bf16.msra.mxu0 %v1106
      %6231 = vmatprep.subr.bf16.mxu0 0
      %6232 = vmatpush1.bf16.msra.mxu0 %v1105
      %6233 = vmatprep.subr.bf16.mxu0 0
      %6234 = vmatpush1.bf16.msra.mxu0 %v1104
      %6235 = vmatprep.subr.bf16.mxu0 0
      %6236 = vmatpush1.bf16.msra.mxu0 %v1103
      %6237 = vmatprep.subr.bf16.mxu0 0
      %6238 = vmatpush1.bf16.msra.mxu0 %v1102
      %6239 = vmatprep.subr.bf16.mxu0 0
      %6240 = vmatpush1.bf16.msra.mxu0 %v1101
      %6241 = vmatprep.subr.bf16.mxu0 0
      %6242 = vmatpush1.bf16.msra.mxu0 %v1100
      %6243 = vmatprep.subr.bf16.mxu0 0
      %6244 = vmatpush1.bf16.msra.mxu0 %v1099
      %6245 = vmatprep.subr.bf16.mxu0 0
      %6246 = vmatpush2.bf16.msra.mxu0 0
      %6247 = vmatprep.subr.bf16.mxu0 0
      %6248 = vmatpush2.bf16.msra.mxu0 0
      %6249 = vmatprep.subr.bf16.mxu0 0
      %6250 = vmatpush2.bf16.msra.mxu0 0
      %6251 = vmatprep.subr.bf16.mxu0 0
      %6252 = vmatpush2.bf16.msra.mxu0 0
      %6253 = vmatprep.subr.bf16.mxu0 0
      %6254 = vmatpush2.bf16.msra.mxu0 %v1110
      %6255 = vmatprep.subr.bf16.mxu0 0
      %6256 = vmatpush2.bf16.msra.mxu0 %v1109
      %6257 = vmatprep.subr.bf16.mxu0 0
      %6258 = vmatpush2.bf16.msra.mxu0 %v1108
      %6259 = vmatprep.subr.bf16.mxu0 0
      %6260 = vmatpush2.bf16.msra.mxu0 %v1107
      %6261 = vmatprep.mubr.bf16.mxu0 %v6154
      %6262 = vmatmul.mubr.bf16.gmra.mxu0 %v6139
      %v6263 = vpop.f32.mrf.mxu0
      %v6264 = vadd.f32 %v6200, %v6263
      %v6265 = vpop.f32.mrf.mxu0
      %v6266 = vpop.f32.mrf.mxu0
      %v6267 = vadd.f32 %v6203, %v6266
      %v6268 = vpop.f32.mrf.mxu0
      %6269 = vmatprep.mubr.bf16.mxu0 %v6157
      %6270 = vmatmul.mubr.bf16.gmra.mxu0 %v6143
      %v6271 = vpop.f32.mrf.mxu0
      %v6272 = vadd.f32 %v6208, %v6271
      %v6273 = vpop.f32.mrf.mxu0
      %v6274 = vpop.f32.mrf.mxu0
      %v6275 = vadd.f32 %v6211, %v6274
      %v6276 = vpop.f32.mrf.mxu0
      %6277 = vmatprep.mubr.bf16.mxu0 %v6160
      %6278 = vmatmul.mubr.bf16.gmra.mxu0 %v6147
      %v6279 = vpop.f32.mrf.mxu0
      %v6280 = vadd.f32 %v6216, %v6279
      %v6281 = vpop.f32.mrf.mxu0
      %v6282 = vpop.f32.mrf.mxu0
      %v6283 = vadd.f32 %v6219, %v6282
      %v6284 = vpop.f32.mrf.mxu0
      %6285 = vmatprep.mubr.bf16.mxu0 %v6163
      %6286 = vmatmul.mubr.bf16.gmra.mxu0 %v6151
      %v6287 = vpop.f32.mrf.mxu0
      %v6288 = vadd.f32 %v6224, %v6287
      %v6289 = vpop.f32.mrf.mxu0
      %v6290 = vpop.f32.mrf.mxu0
      %v6291 = vpop.f32.mrf.mxu0
      %6292 = vdwg.mxu0
      %v6293 = vmax.f32 %v6264, 0.0
      %v6294 = vmax.f32 %v6267, 0.0
      %v6295 = vmax.f32 %v6272, 0.0
      %v6296 = vmax.f32 %v6275, 0.0
      %v6297 = vmax.f32 %v6280, 0.0
      %v6298 = vmax.f32 %v6283, 0.0
      %v6299 = vmax.f32 %v6288, 0.0
      %v6300 = vsel %vm927, %v6293, 0.0
      %v6301 = vsel %vm927, %v6294, 0.0
      %v6302 = vadd.f32 %v6300, %v6301
      %v6303 = vsel %vm927, %v6295, 0.0
      %v6304 = vadd.f32 %v6302, %v6303
      %v6305 = vsel %vm927, %v6296, 0.0
      %v6306 = vadd.f32 %v6304, %v6305
      %v6307 = vsel %vm927, %v6297, 0.0
      %v6308 = vadd.f32 %v6306, %v6307
      %v6309 = vsel %vm927, %v6298, 0.0
      %v6310 = vadd.f32 %v6308, %v6309
      %v6311 = vsel %vm1297, %v6299, 0.0
      %v6312 = vadd.f32 %v6310, %v6311
      %v6313 = vrot.slane %v6312, 4
      %v6314 = vadd.f32 %v6312, %v6313
      %v6315 = vrot.slane %v6314, 2
      %v6316 = vadd.f32 %v6314, %v6315
      %v6317 = vrot.slane %v6316, 1
      %v6318 = vadd.f32 %v6316, %v6317
      %v6319 = vmul.f32 %v6318, %v1306
      %vm6320 = vcmask 1040384
      %v6321 = vsel %vm6320, %v1307, %v2023
      %v6322 = vsel %vm699, %v6321, %v2739
      %v6323 = vsel %vm647, %v6322, %v3455
      %v6324 = vsel %vm595, %v6323, %v4171
      %v6325 = vsel %vm543, %v6324, %v4887
      %v6326 = vsel %vm491, %v6325, %v5603
      %v6327 = vsel %vm439, %v6326, %v6319
      %v6328 = vld [vmem:[%s5] sm:$0xff]
      %v6329 = vld [vmem:[%s5 + $0x8] sm:$0xff]
      %v6330 = vld [vmem:[%s5 + $0x10] sm:$0xff]
      %v6331 = vld [vmem:[%s5 + $0x18] sm:$0xff]
      %v6332 = vld [vmem:[%s5 + $0x20] sm:$0xff]
      %v6333 = vld [vmem:[%s5 + $0x28] sm:$0xff]
      %v6334 = vld [vmem:[%s5 + $0x30] sm:$0xff]
      %v6335 = vld [vmem:[%s5 + $0x38] sm:$0xff]
      %v6336 = vld [vmem:[%s6] sm:$0x1]
      %v6338 = vlaneseq
      %v6339 = vshrl.u32 %v6338, 7
      %v6340 = vsub.s32 0, %v6339
      %v6341 = vrot.slane %v6336, %v6340
      %v6344 = vsel %vm927, %v6327, 0
      %6346 = vmatprep.subr.mxu0 0.0
      %6347 = vmatpush1.msra.mxu0 0.0
      %6348 = vmatprep.subr.mxu0 0.0
      %6349 = vmatpush1.msra.mxu0 0.0
      %6350 = vmatprep.subr.mxu0 0.0
      %6351 = vmatpush1.msra.mxu0 0.0
      %6352 = vmatprep.subr.mxu0 0.0
      %6353 = vmatpush1.msra.mxu0 0.0
      %6354 = vmatprep.subr.mxu0 0.0
      %6355 = vmatpush1.msra.mxu0 0.0
      %6356 = vmatprep.subr.mxu0 0.0
      %6357 = vmatpush1.msra.mxu0 0.0
      %6358 = vmatprep.subr.mxu0 0.0
      %6359 = vmatpush1.msra.mxu0 0.0
      %6360 = vmatprep.subr.mxu0 0.0
      %6361 = vmatpush1.msra.mxu0 0.0
      %6362 = vmatprep.subr.mxu0 0.0
      %6363 = vmatpush1.msra.mxu0 %v6335
      %6364 = vmatprep.subr.mxu0 0.0
      %6365 = vmatpush1.msra.mxu0 %v6334
      %6366 = vmatprep.subr.mxu0 0.0
      %6367 = vmatpush1.msra.mxu0 %v6333
      %6368 = vmatprep.subr.mxu0 0.0
      %6369 = vmatpush1.msra.mxu0 %v6332
      %6370 = vmatprep.subr.mxu0 0.0
      %6371 = vmatpush1.msra.mxu0 %v6331
      %6372 = vmatprep.subr.mxu0 0.0
      %6373 = vmatpush1.msra.mxu0 %v6330
      %6374 = vmatprep.subr.mxu0 0.0
      %6375 = vmatpush1.msra.mxu0 %v6329
      %6376 = vmatprep.subr.mxu0 0.0
      %6377 = vmatpush1.msra.mxu0 %v6328
      %6378 = vmatprep.subr.mxu0 0.0
      %6379 = vmatpush2.msra.mxu0 0.0
      %6380 = vmatprep.subr.mxu0 0.0
      %6381 = vmatpush2.msra.mxu0 0.0
      %6382 = vmatprep.subr.mxu0 0.0
      %6383 = vmatpush2.msra.mxu0 0.0
      %6384 = vmatprep.subr.mxu0 0.0
      %6385 = vmatpush2.msra.mxu0 0.0
      %6386 = vmatprep.subr.mxu0 0.0
      %6387 = vmatpush2.msra.mxu0 0.0
      %6388 = vmatprep.subr.mxu0 0.0
      %6389 = vmatpush2.msra.mxu0 0.0
      %6390 = vmatprep.subr.mxu0 0.0
      %6391 = vmatpush2.msra.mxu0 0.0
      %6392 = vmatprep.subr.mxu0 0.0
      %6393 = vmatpush2.msra.mxu0 0.0
      %6394 = vmatprep.subr.mxu0 0.0
      %6395 = vmatpush2.msra.mxu0 0.0
      %6396 = vmatprep.subr.mxu0 0.0
      %6397 = vmatpush2.msra.mxu0 0.0
      %6398 = vmatprep.subr.mxu0 0.0
      %6399 = vmatpush2.msra.mxu0 0.0
      %6400 = vmatprep.subr.mxu0 0.0
      %6401 = vmatpush2.msra.mxu0 0.0
      %6402 = vmatprep.subr.mxu0 0.0
      %6403 = vmatpush2.msra.mxu0 0.0
      %6404 = vmatprep.subr.mxu0 0.0
      %6405 = vmatpush2.msra.mxu0 0.0
      %6406 = vmatprep.subr.mxu0 0.0
      %6407 = vmatpush2.msra.mxu0 0.0
      %6408 = vmatprep.subr.mxu0 0.0
      %6409 = vmatpush2.msra.mxu0 0.0
      %6410 = vmatprep.mubr.f32.mxu0 0.0
      %6411 = vmatmul.mubr.f32.gmra.mxu0 %v6344
      %v6412 = vpop.f32.mrf.mxu0
      %v6413 = vadd.f32 %v6341, %v6412
      %v6414 = vpop.f32.mrf.mxu0
      %6415 = vdwg.mxu0
      %vm6416 = vcmask 23552
      %6417 = vst.msk [vmem:[%s273] sm:$0xff] %vm6416, %v6413
      %p6418 = scmp.lt.s32.totalorder %s18, 1
      %s6419 = scalar_select %p6418, %s18, 1
      %s6420 = smul.addr %s6419, 8
      %s6421 = scalar_lea.vmem %s7, %s6420
      // Predicated region
      $region49: #{tpu_custom_call.1} parent=47 // pred_check
        %p6422 = pneg %p188
      $region50: #{tpu_custom_call.1} parent=47 // pred_check_branch
        %6424 = sbr.rel (%p6422) target = $region52
      $region51: #{tpu_custom_call.1} parent=47 // pred_region
        _
      $region52: #{tpu_custom_call.1} parent=47 // pred_fallthru
        _
    $region48: #{tpu_custom_call.1} parent=5 // pred_fallthru
      _
    %p6425 = scmp.le.s32.totalorder 2, %s13
    // Predicated region
    $region53: #{tpu_custom_call.1} parent=5 // pred_check
      %p6426 = pneg %p6425
    $region54: #{tpu_custom_call.1} parent=5 // pred_check_branch
      %6428 = sbr.rel (%p6426) target = $region56
    $region55: #{tpu_custom_call.1} parent=5 // pred_region
      %s6429 = ssub.s32 %s13, 2
      // Predicated region
      $region57: #{tpu_custom_call.1} parent=55 // pred_check
        %p6430 = pneg %p194
      $region58: #{tpu_custom_call.1} parent=55 // pred_check_branch
        %6432 = sbr.rel (%p6430) target = $region60
      $region59: #{tpu_custom_call.1} parent=55 // pred_region
        %p6433 = scmp.lt.s32.totalorder %s19, 1
        %s6434 = scalar_select %p6433, %s19, 1
        %s6435 = smul.addr %s6434, 8
        %s6436 = scalar_lea.vmem %s7, %s6435
      $region60: #{tpu_custom_call.1} parent=55 // pred_fallthru
        _
    $region56: #{tpu_custom_call.1} parent=5 // pred_fallthru
      _
  $region6: #{tpu_custom_call.1} parent=0 // loop_footer
    %s17 = sadd.s32 1, %s13
  $region7: #{tpu_custom_call.1} parent=0 // loop_footer_branch
    %12 = sbr.rel target = $region3
  $region8: #{tpu_custom_call.1} parent=0 // loop_exit
    _

</llo_original>
